<compile_context>
chip_gen: v7x
topology: tpu7x:2x2x1
jax: 0.10.0
libtpu: 0.0.40
codegen_flags: <defaults>
</compile_context>

<pallas_src>
import functools

import jax
import jax.numpy as jnp
import numpy as np
from jax.experimental import pallas as pl
from jax.experimental.pallas import tpu as pltpu

# ---- module hyper-parameters (PyTorch defaults) -----------------------------
INPUT_SIZE  = 1
OUTPUT_SIZE = 1
READ_HEADS  = 1
NN_OUTPUT   = 64                                   # GRU hidden size H
MEM_SIZE    = 32
NN_INPUT    = MEM_SIZE * READ_HEADS + INPUT_SIZE   # 33
IFACE_SIZE  = MEM_SIZE * READ_HEADS + 3 * MEM_SIZE + 5 * READ_HEADS + 3  # 136

# interface-vector offsets (same arithmetic as parse_interface_vector)
R_KEYS_END      = MEM_SIZE * READ_HEADS            # 32
R_STRENGTHS_END = R_KEYS_END + READ_HEADS          # 33
W_KEY_END       = R_STRENGTHS_END + MEM_SIZE       # 65

# kernel-side layout constants
SUBLANE     = 8                                    # f32 sublane depth; batch padded to this
GATE_BLOCK  = 128                                  # r|z share one 128-lane block, n in the next
GATE_WIDTH  = 2 * GATE_BLOCK                       # 256 packed gate lanes
HEAD_WIDTH  = 128                                  # fused head output width (lane dense)
WKEY_COL    = 0                                    # [0, 32)   write_key
BETA_COL    = MEM_SIZE                             # 32        write_strength (raw)
PRE_COL     = MEM_SIZE + 1                         # 33        pre_output
TEACH_START = PRE_COL + OUTPUT_SIZE                # 34
TEACH_END   = TEACH_START + MEM_SIZE               # 66

assert 2 * NN_OUTPUT <= GATE_BLOCK                 # r|z must fit one 128-lane block


# ---- Pallas kernel -----------------------------------------------------------
def _controller_kernel(ci_ref, h0_ref, wih_ref, bi_ref, whh_ref, bhn_ref, wcomb_ref,
                       head_ref, hstate_ref, gi_scr, h_scr, *, tc, bp, unroll):
    """One time-chunk (tc GRU steps) per grid invocation.

    hstate_ref is the resident (bp, H) hidden-state carry across chunks.
    gi_scr / h_scr are VMEM scratch holding the chunk's input projections and
    per-step hidden states (both packed densely along 8-aligned sublane rows).
    """
    f32 = jnp.float32
    H = NN_OUTPUT

    # seed the resident hidden state on the first chunk
    @pl.when(pl.program_id(0) == 0)
    def _():
        hstate_ref[...] = h0_ref[...]

    # ---- (1) input projection, hoisted off the recurrence: ONE matmul per chunk ----
    gi_scr[...] = (jnp.dot(ci_ref[...], wih_ref[...], preferred_element_type=f32)
                   + bi_ref[...])                                   # (tc*bp, 256)

    # loop-invariant loads / broadcasts hoisted out of the recurrence
    whh = whh_ref[...]                                              # (H, 256)
    bhn = jnp.broadcast_to(bhn_ref[...], (bp, H))                   # (bp, H)

    # ---- (2) recurrence: only gh matmul + gate VPU math on the serial critical path ----
    def step(t, h):
        row = pl.multiple_of(t * bp, bp)                            # 8-aligned sublane offset
        gi = gi_scr[pl.ds(row, bp), :]                              # (bp, 256)
        # HIGHEST precision on the recurrent matmul only: its rounding error feeds back
        # into h and would compound over long sequences.
        gh = jnp.dot(h, whh, preferred_element_type=f32,
                     precision=jax.lax.Precision.HIGHEST)           # (bp, 256)
        rz = jax.nn.sigmoid(gi[:, :2 * H] + gh[:, :2 * H])          # one full-vreg sigmoid
        r = rz[:, 0:H]
        z = rz[:, H:2 * H]
        n = jnp.tanh(gi[:, GATE_BLOCK:GATE_BLOCK + H]
                     + r * (gh[:, GATE_BLOCK:GATE_BLOCK + H] + bhn))
        h_new = (1.0 - z) * n + z * h
        h_scr[pl.ds(row, bp), :] = h_new                            # stash for deferred head
        return h_new

    h_last = jax.lax.fori_loop(0, tc, step, hstate_ref[...], unroll=unroll)
    hstate_ref[...] = h_last                                        # carries to next chunk

    # ---- (3) deferred fused head: ONE (tc*bp,64)x(64,128) matmul + epilogue per chunk ----
    head = jnp.dot(h_scr[...], wcomb_ref[...], preferred_element_type=f32)   # (tc*bp, 128)
    col = jax.lax.broadcasted_iota(jnp.int32, head.shape, 1)
    packed = jnp.where(col == BETA_COL, 1.0 + jnp.maximum(head, 0.0), head)          # 1 + relu
    packed = jnp.where((col >= TEACH_START) & (col < TEACH_END), jnp.tanh(head), packed)
    head_ref[...] = packed                                          # lane-dense writeback


# ---- parameter init (deterministic, mirrors nn.Module __init__ shapes) -------
def init_params(key):
    keys = jax.random.split(key, 8)
    kgru = 1.0 / np.sqrt(NN_OUTPUT)

    def u(k, shape, a):
        return jax.random.uniform(k, shape, jnp.float32, -a, a)

    return dict(
        # nn.GRU weights, stored transposed relative to torch's (3H, in) layout
        w_ih_t=u(keys[0], (NN_INPUT, 3 * NN_OUTPUT), kgru),
        w_hh_t=u(keys[1], (NN_OUTPUT, 3 * NN_OUTPUT), kgru),
        b_ih=u(keys[2], (1, 3 * NN_OUTPUT), kgru),
        b_hh=u(keys[3], (1, 3 * NN_OUTPUT), kgru),
        # nn.Parameters, uniform(-0.1, 0.1)
        interface_weights=u(keys[4], (NN_OUTPUT, IFACE_SIZE), 0.1),
        nn_output_weights=u(keys[5], (NN_OUTPUT, OUTPUT_SIZE), 0.1),
        mem_output_weights=u(keys[6], (MEM_SIZE * READ_HEADS, OUTPUT_SIZE), 0.1),  # only final_output()
        teacher_weights=u(keys[7], (OUTPUT_SIZE, MEM_SIZE), 0.1),
    )


# ---- one-time weight re-layout for the kernel ---------------------------------
def pack_params(p):
    """Pack GRU gates into 256 lanes ([r|z] block + [n] block), fold biases, build fused head."""
    H = NN_OUTPUT

    def pack_gates(w):                      # (K, 3H) -> (K, 256)
        K = w.shape[0]
        out = jnp.zeros((K, GATE_WIDTH), jnp.float32)
        out = out.at[:, 0:H].set(w[:, 0:H])                                  # r
        out = out.at[:, H:2 * H].set(w[:, H:2 * H])                          # z
        out = out.at[:, GATE_BLOCK:GATE_BLOCK + H].set(w[:, 2 * H:3 * H])    # n
        return out

    w_ih = pack_gates(p['w_ih_t'])
    w_hh = pack_gates(p['w_hh_t'])
    # fold b_hr / b_hz into the hoisted input bias; only the n gate needs b_hn separately
    b_i = pack_gates(p['b_ih'])
    b_i = b_i.at[:, 0:2 * H].add(p['b_hh'][:, 0:2 * H])
    b_hn = p['b_hh'][:, 2 * H:3 * H]                                         # (1, H)

    # fused head: [write_key | write_strength | pre_output | teacher] in one (H,128) matrix
    w_comb = jnp.zeros((H, HEAD_WIDTH), jnp.float32)
    w_comb = w_comb.at[:, WKEY_COL:WKEY_COL + MEM_SIZE].set(
        p['interface_weights'][:, R_STRENGTHS_END:W_KEY_END])
    w_comb = w_comb.at[:, BETA_COL:BETA_COL + 1].set(
        p['interface_weights'][:, W_KEY_END:W_KEY_END + 1])
    w_comb = w_comb.at[:, PRE_COL:PRE_COL + OUTPUT_SIZE].set(p['nn_output_weights'])
    # teacher folded through pre_output:  tanh((h@Wout)@Wteach) == tanh(h@(Wout@Wteach))
    w_comb = w_comb.at[:, TEACH_START:TEACH_END].set(
        p['nn_output_weights'] @ p['teacher_weights'])

    return dict(w_ih=w_ih, w_hh=w_hh, b_i=b_i, b_hn=b_hn, w_comb=w_comb)


def _choose_chunk(T, max_chunk=64):
    """Largest time-chunk <= max_chunk that divides T (keeps per-chunk VMEM slabs small)."""
    if T <= max_chunk:
        return T
    for c in range(max_chunk, 0, -1):
        if T % c == 0:
            return c
    return 1


# ---- wrappers ------------------------------------------------------------------
@jax.jit
def base_controller_forward_seq(x_seq, read_seq, state, kp):
    """Run T controller steps with one pallas_call (grid over time-chunks).

    x_seq    : (T, B, input_size)
    read_seq : (T, B, mem_size, read_heads)   last_read_vectors for each step
    state    : (1, B, H) initial GRU hidden state
    Returns per-step (pre, write_key, write_beta, gen_teacher) stacked over T, plus final state.
    """
    T, B, _ = x_seq.shape
    H = NN_OUTPUT
    BP = ((B + SUBLANE - 1) // SUBLANE) * SUBLANE          # pad batch to sublane depth (8)
    TC = _choose_chunk(T)                                  # steps per grid invocation
    n_chunks = T // TC
    unroll = True if TC <= 32 else 8

    flat_read = read_seq.reshape(T, B, MEM_SIZE * READ_HEADS)
    ci = jnp.concatenate([x_seq, flat_read], axis=-1)                      # (T, B, NN_INPUT)
    # pad batch rows so every per-step slab is exactly one (8,128) tile; padded rows are
    # dead compute (sliced away below) but keep all dynamic sublane offsets 8-aligned.
    ci_p = jnp.zeros((T, BP, NN_INPUT), jnp.float32).at[:, :B, :].set(ci)
    ci_flat = ci_p.reshape(T * BP, NN_INPUT)
    h0 = jnp.zeros((BP, H), jnp.float32).at[:B, :].set(state[0])

    kernel = functools.partial(_controller_kernel, tc=TC, bp=BP, unroll=unroll)

    # TODO(synk): with several independent sequences, add a leading "parallel" grid axis so
    # v7x's second TensorCore is used; a single recurrent sequence stays "arbitrary" only.
    head_flat, h_final = pl.pallas_call(
        kernel,
        out_shape=(
            jax.ShapeDtypeStruct((T * BP, HEAD_WIDTH), jnp.float32),   # packed per-step head
            jax.ShapeDtypeStruct((BP, H), jnp.float32),                # final GRU hidden
        ),
        grid=(n_chunks,),
        in_specs=[
            pl.BlockSpec((TC * BP, NN_INPUT), lambda c: (c, 0)),       # chunk of fused inputs
            pl.BlockSpec((BP, H), lambda c: (0, 0)),                   # h0 (resident)
            pl.BlockSpec((NN_INPUT, GATE_WIDTH), lambda c: (0, 0)),    # W_ih (resident)
            pl.BlockSpec((1, GATE_WIDTH), lambda c: (0, 0)),           # fused input bias
            pl.BlockSpec((NN_OUTPUT, GATE_WIDTH), lambda c: (0, 0)),   # W_hh (resident)
            pl.BlockSpec((1, NN_OUTPUT), lambda c: (0, 0)),            # b_hn
            pl.BlockSpec((NN_OUTPUT, HEAD_WIDTH), lambda c: (0, 0)),   # fused head weights
        ],
        out_specs=(
            pl.BlockSpec((TC * BP, HEAD_WIDTH), lambda c: (c, 0)),     # lane-dense head slab
            pl.BlockSpec((BP, NN_OUTPUT), lambda c: (0, 0)),           # resident hidden carry
        ),
        scratch_shapes=[
            pltpu.VMEM((TC * BP, GATE_WIDTH), jnp.float32),            # gi for the chunk
            pltpu.VMEM((TC * BP, NN_OUTPUT), jnp.float32),             # h history for the chunk
        ],
        compiler_params=pltpu.CompilerParams(dimension_semantics=("arbitrary",)),
    )(ci_flat, h0, kp['w_ih'], kp['b_i'], kp['w_hh'], kp['b_hn'], kp['w_comb'])

    head = head_flat.reshape(T, BP, HEAD_WIDTH)[:, :B, :]
    pre   = head[:, :, PRE_COL:PRE_COL + OUTPUT_SIZE]                  # (T, B, output_size)
    wkey  = head[:, :, WKEY_COL:WKEY_COL + MEM_SIZE]                   # (T, B, mem_size)
    wbeta = head[:, :, BETA_COL]                                       # (T, B)
    teach = head[:, :, TEACH_START:TEACH_END]                          # (T, B, mem_size)
    return pre, wkey, wbeta, teach, h_final[None, :B, :]               # final state (1, B, H)


@jax.jit
def base_controller_forward(x, last_read_vectors, state, kp):
    """Single-step forward matching BaseController.forward exactly (T=1 degenerate case)."""
    pre, wkey, wbeta, teach, new_state = base_controller_forward_seq(
        x[None], last_read_vectors[None], state, kp)
    return pre[0], wkey[0], wbeta[0], teach[0], new_state


# ---- pure-JAX reference (original unfused math, for a sanity check) ------------
def reference_step(x, last_read_vectors, h, p):
    B = x.shape[0]
    ci = jnp.concatenate([x, last_read_vectors.reshape(B, -1)], axis=1)
    H = NN_OUTPUT
    gi = ci @ p['w_ih_t'] + p['b_ih']
    gh = h @ p['w_hh_t'] + p['b_hh']
    r = jax.nn.sigmoid(gi[:, :H] + gh[:, :H])
    z = jax.nn.sigmoid(gi[:, H:2 * H] + gh[:, H:2 * H])
    n = jnp.tanh(gi[:, 2 * H:] + r * gh[:, 2 * H:])
    h_new = (1.0 - z) * n + z * h
    pre = h_new @ p['nn_output_weights']
    iface = h_new @ p['interface_weights']
    wkey = iface[:, R_STRENGTHS_END:W_KEY_END]
    wbeta = 1.0 + jax.nn.relu(iface[:, W_KEY_END])
    teach = jnp.tanh(pre @ p['teacher_weights'])
    return pre, wkey, wbeta, teach, h_new


def reference_seq(x_seq, read_seq, state, p):
    T = x_seq.shape[0]
    h = state[0]
    pres, wkeys, wbetas, teaches = [], [], [], []
    for t in range(T):
        pre, wkey, wbeta, teach, h = reference_step(x_seq[t], read_seq[t], h, p)
        pres.append(pre); wkeys.append(wkey); wbetas.append(wbeta); teaches.append(teach)
    return (jnp.stack(pres), jnp.stack(wkeys), jnp.stack(wbetas), jnp.stack(teaches), h[None])


if __name__ == "__main__":
    B, T = 2, 8
    key = jax.random.PRNGKey(0)
    kx, kr, kp_ = jax.random.split(key, 3)

    params = init_params(kp_)
    kparams = pack_params(params)                     # one-time kernel-ready weight layout

    x_seq = jax.random.normal(kx, (T, B, INPUT_SIZE), jnp.float32)
    read_seq = jax.random.normal(kr, (T, B, MEM_SIZE, READ_HEADS), jnp.float32)
    state = jnp.zeros((1, B, NN_OUTPUT), jnp.float32)  # get_state()

    # ---- multi-step (T timesteps, whole recurrence inside one pallas_call chunk) ----
    outs = base_controller_forward_seq(x_seq, read_seq, state, kparams)
    outs = jax.block_until_ready(outs)
    pre, wkey, wbeta, teach, new_state = outs
    assert pre.shape == (T, B, OUTPUT_SIZE)
    assert wkey.shape == (T, B, MEM_SIZE)
    assert wbeta.shape == (T, B)
    assert teach.shape == (T, B, MEM_SIZE)
    assert new_state.shape == (1, B, NN_OUTPUT)

    ref = reference_seq(x_seq, read_seq, state, params)
    for got, want in zip(outs, ref):
        np.testing.assert_allclose(np.asarray(got), np.asarray(want), rtol=5e-2, atol=5e-2)

    # ---- single-step forward (module semantics) ----
    outs1 = base_controller_forward(x_seq[0], read_seq[0], state, kparams)
    outs1 = jax.block_until_ready(outs1)
    pre1, wkey1, wbeta1, teach1, new_state1 = outs1
    assert pre1.shape == (B, OUTPUT_SIZE)
    assert wkey1.shape == (B, MEM_SIZE)
    assert wbeta1.shape == (B,)
    assert teach1.shape == (B, MEM_SIZE)
    assert new_state1.shape == (1, B, NN_OUTPUT)

    ref1 = reference_step(x_seq[0], read_seq[0], state[0], params)
    ref1 = (ref1[0], ref1[1], ref1[2], ref1[3], ref1[4][None])
    for got, want in zip(outs1, ref1):
        np.testing.assert_allclose(np.asarray(got), np.asarray(want), rtol=5e-2, atol=5e-2)

    print("KERNEL_OK")
</pallas_src>

<mosaic_0001>
module attributes {stable_mosaic.version = 11 : i64} {
  func.func @_controller_kernel(%arg0: i32, %arg1: memref<64x33xf32, #tpu.memory_space<vmem>>, %arg2: memref<8x64xf32, #tpu.memory_space<vmem>>, %arg3: memref<33x256xf32, #tpu.memory_space<vmem>>, %arg4: memref<1x256xf32, #tpu.memory_space<vmem>>, %arg5: memref<64x256xf32, #tpu.memory_space<vmem>>, %arg6: memref<1x64xf32, #tpu.memory_space<vmem>>, %arg7: memref<64x128xf32, #tpu.memory_space<vmem>>, %arg8: memref<64x128xf32, #tpu.memory_space<vmem>>, %arg9: memref<8x64xf32, #tpu.memory_space<vmem>>, %arg10: memref<64x256xf32, #tpu.memory_space<vmem>>, %arg11: memref<64x64xf32, #tpu.memory_space<vmem>>) attributes {dimension_semantics = [#tpu.dimension_semantics<arbitrary>], iteration_bounds = array<i64: 1>, scalar_prefetch = 0 : i64, scratch_operands = 2 : i64, tpu.core_type = #tpu.core_type<tc>, window_params = [{transform_indices = @transform_0, window_bounds = array<i64: 64, 33>}, {pipeline_mode = #tpu.pipeline_mode<synchronous>, transform_indices = @transform_1, window_bounds = array<i64: 8, 64>}, {pipeline_mode = #tpu.pipeline_mode<synchronous>, transform_indices = @transform_2, window_bounds = array<i64: 33, 256>}, {pipeline_mode = #tpu.pipeline_mode<synchronous>, transform_indices = @transform_3, window_bounds = array<i64: 1, 256>}, {pipeline_mode = #tpu.pipeline_mode<synchronous>, transform_indices = @transform_4, window_bounds = array<i64: 64, 256>}, {pipeline_mode = #tpu.pipeline_mode<synchronous>, transform_indices = @transform_5, window_bounds = array<i64: 1, 64>}, {pipeline_mode = #tpu.pipeline_mode<synchronous>, transform_indices = @transform_6, window_bounds = array<i64: 64, 128>}, {transform_indices = @transform_7, window_bounds = array<i64: 64, 128>}, {pipeline_mode = #tpu.pipeline_mode<synchronous>, transform_indices = @transform_8, window_bounds = array<i64: 8, 64>}]} {
    %c0_i32 = arith.constant 0 : i32
    %0 = arith.cmpi eq, %arg0, %c0_i32 : i32
    %1 = arith.extui %0 : i1 to i32
    %c0_i32_0 = arith.constant 0 : i32
    %2 = arith.cmpi ne, %1, %c0_i32_0 : i32
    scf.if %2 {
      %c0_74 = arith.constant 0 : index
      %c0_75 = arith.constant 0 : index
      %259 = vector.load %arg2[%c0_74, %c0_75] : memref<8x64xf32, #tpu.memory_space<vmem>>, vector<8x64xf32>
      %c0_76 = arith.constant 0 : index
      %c0_77 = arith.constant 0 : index
      %260 = vector.load %arg9[%c0_76, %c0_77] : memref<8x64xf32, #tpu.memory_space<vmem>>, vector<8x64xf32>
      tpu.vector_store %arg9[%c0_76, %c0_77], %259 {strides = array<i32>} : memref<8x64xf32, #tpu.memory_space<vmem>>, vector<8x64xf32>,
    } else {
    }
    %c0 = arith.constant 0 : index
    %c0_1 = arith.constant 0 : index
    %3 = vector.load %arg1[%c0, %c0_1] : memref<64x33xf32, #tpu.memory_space<vmem>>, vector<64x33xf32>
    %c0_2 = arith.constant 0 : index
    %c0_3 = arith.constant 0 : index
    %4 = vector.load %arg3[%c0_2, %c0_3] : memref<33x256xf32, #tpu.memory_space<vmem>>, vector<33x256xf32>
    %cst = arith.constant dense<0.000000e+00> : vector<64x256xf32>
    %5 = tpu.matmul %3, %4, %cst {dimension_numbers = #tpu.dot_dimension_numbers<[1], [0], [0], [1], [0, 0, 1, 1], [], []>} : vector<64x33xf32>, vector<33x256xf32>, vector<64x256xf32> -> vector<64x256xf32>
    %c0_4 = arith.constant 0 : index
    %c0_5 = arith.constant 0 : index
    %6 = vector.load %arg4[%c0_4, %c0_5] : memref<1x256xf32, #tpu.memory_space<vmem>>, vector<1x256xf32>
    %7 = vector.broadcast %6 : vector<1x256xf32> to vector<64x256xf32>
    %8 = arith.addf %5, %7 : vector<64x256xf32>
    %c0_6 = arith.constant 0 : index
    %c0_7 = arith.constant 0 : index
    %9 = vector.load %arg10[%c0_6, %c0_7] : memref<64x256xf32, #tpu.memory_space<vmem>>, vector<64x256xf32>
    tpu.vector_store %arg10[%c0_6, %c0_7], %8 {strides = array<i32>} : memref<64x256xf32, #tpu.memory_space<vmem>>, vector<64x256xf32>,
    %c0_8 = arith.constant 0 : index
    %c0_9 = arith.constant 0 : index
    %10 = vector.load %arg5[%c0_8, %c0_9] : memref<64x256xf32, #tpu.memory_space<vmem>>, vector<64x256xf32>
    %c0_10 = arith.constant 0 : index
    %c0_11 = arith.constant 0 : index
    %11 = vector.load %arg6[%c0_10, %c0_11] : memref<1x64xf32, #tpu.memory_space<vmem>>, vector<1x64xf32>
    %12 = vector.shape_cast %11 : vector<1x64xf32> to vector<1x64xf32>
    %13 = vector.broadcast %12 : vector<1x64xf32> to vector<8x64xf32>
    %c0_12 = arith.constant 0 : index
    %c0_13 = arith.constant 0 : index
    %14 = vector.load %arg9[%c0_12, %c0_13] : memref<8x64xf32, #tpu.memory_space<vmem>>, vector<8x64xf32>
    %c0_i32_14 = arith.constant 0 : i32
    %c8_i32 = arith.constant 8 : i32
    %15 = arith.muli %c0_i32_14, %c8_i32 : i32
    %16 = tpu.assume_multiple %15, 8 : i32
    %17 = arith.index_cast %16 : i32 to index
    %c0_15 = arith.constant 0 : index
    %18 = vector.load %arg10[%17, %c0_15] : memref<64x256xf32, #tpu.memory_space<vmem>>, vector<8x256xf32>
    %cst_16 = arith.constant dense<0.000000e+00> : vector<8x256xf32>
    %19 = tpu.matmul %14, %10, %cst_16 {dimension_numbers = #tpu.dot_dimension_numbers<[1], [0], [0], [1], [0, 0, 1, 1], [], []>, precision = #tpu.contract_precision<fp32>} : vector<8x64xf32>, vector<64x256xf32>, vector<8x256xf32> -> vector<8x256xf32>
    %20 = vector.extract_strided_slice %18 {offsets = [0, 0], sizes = [8, 128], strides = [1, 1]} : vector<8x256xf32> to vector<8x128xf32>
    %21 = vector.extract_strided_slice %19 {offsets = [0, 0], sizes = [8, 128], strides = [1, 1]} : vector<8x256xf32> to vector<8x128xf32>
    %22 = arith.addf %20, %21 : vector<8x128xf32>
    %23 = arith.negf %22 : vector<8x128xf32>
    %24 = math.exp %23 : vector<8x128xf32>
    %cst_17 = arith.constant 1.000000e+00 : f32
    %25 = vector.broadcast %cst_17 : f32 to vector<8x128xf32>
    %26 = arith.addf %25, %24 : vector<8x128xf32>
    %27 = arith.divf %25, %26 : vector<8x128xf32>
    %28 = vector.extract_strided_slice %27 {offsets = [0, 0], sizes = [8, 64], strides = [1, 1]} : vector<8x128xf32> to vector<8x64xf32>
    %29 = vector.extract_strided_slice %27 {offsets = [0, 64], sizes = [8, 64], strides = [1, 1]} : vector<8x128xf32> to vector<8x64xf32>
    %30 = vector.extract_strided_slice %18 {offsets = [0, 128], sizes = [8, 64], strides = [1, 1]} : vector<8x256xf32> to vector<8x64xf32>
    %31 = vector.extract_strided_slice %19 {offsets = [0, 128], sizes = [8, 64], strides = [1, 1]} : vector<8x256xf32> to vector<8x64xf32>
    %32 = arith.addf %31, %13 : vector<8x64xf32>
    %33 = arith.mulf %28, %32 : vector<8x64xf32>
    %34 = arith.addf %30, %33 : vector<8x64xf32>
    %35 = math.tanh %34 : vector<8x64xf32>
    %cst_18 = arith.constant 1.000000e+00 : f32
    %36 = vector.broadcast %cst_18 : f32 to vector<8x64xf32>
    %37 = arith.subf %36, %29 : vector<8x64xf32>
    %38 = arith.mulf %37, %35 : vector<8x64xf32>
    %39 = arith.mulf %29, %14 : vector<8x64xf32>
    %40 = arith.addf %38, %39 : vector<8x64xf32>
    %41 = arith.index_cast %16 : i32 to index
    %c0_19 = arith.constant 0 : index
    %42 = vector.load %arg11[%41, %c0_19] : memref<64x64xf32, #tpu.memory_space<vmem>>, vector<8x64xf32>
    tpu.vector_store %arg11[%41, %c0_19], %40 {strides = array<i32>} : memref<64x64xf32, #tpu.memory_space<vmem>>, vector<8x64xf32>,
    %c1_i32 = arith.constant 1 : i32
    %c8_i32_20 = arith.constant 8 : i32
    %43 = arith.muli %c1_i32, %c8_i32_20 : i32
    %44 = tpu.assume_multiple %43, 8 : i32
    %45 = arith.index_cast %44 : i32 to index
    %c0_21 = arith.constant 0 : index
    %46 = vector.load %arg10[%45, %c0_21] : memref<64x256xf32, #tpu.memory_space<vmem>>, vector<8x256xf32>
    %cst_22 = arith.constant dense<0.000000e+00> : vector<8x256xf32>
    %47 = tpu.matmul %40, %10, %cst_22 {dimension_numbers = #tpu.dot_dimension_numbers<[1], [0], [0], [1], [0, 0, 1, 1], [], []>, precision = #tpu.contract_precision<fp32>} : vector<8x64xf32>, vector<64x256xf32>, vector<8x256xf32> -> vector<8x256xf32>
    %48 = vector.extract_strided_slice %46 {offsets = [0, 0], sizes = [8, 128], strides = [1, 1]} : vector<8x256xf32> to vector<8x128xf32>
    %49 = vector.extract_strided_slice %47 {offsets = [0, 0], sizes = [8, 128], strides = [1, 1]} : vector<8x256xf32> to vector<8x128xf32>
    %50 = arith.addf %48, %49 : vector<8x128xf32>
    %51 = arith.negf %50 : vector<8x128xf32>
    %52 = math.exp %51 : vector<8x128xf32>
    %cst_23 = arith.constant 1.000000e+00 : f32
    %53 = vector.broadcast %cst_23 : f32 to vector<8x128xf32>
    %54 = arith.addf %53, %52 : vector<8x128xf32>
    %55 = arith.divf %53, %54 : vector<8x128xf32>
    %56 = vector.extract_strided_slice %55 {offsets = [0, 0], sizes = [8, 64], strides = [1, 1]} : vector<8x128xf32> to vector<8x64xf32>
    %57 = vector.extract_strided_slice %55 {offsets = [0, 64], sizes = [8, 64], strides = [1, 1]} : vector<8x128xf32> to vector<8x64xf32>
    %58 = vector.extract_strided_slice %46 {offsets = [0, 128], sizes = [8, 64], strides = [1, 1]} : vector<8x256xf32> to vector<8x64xf32>
    %59 = vector.extract_strided_slice %47 {offsets = [0, 128], sizes = [8, 64], strides = [1, 1]} : vector<8x256xf32> to vector<8x64xf32>
    %60 = arith.addf %59, %13 : vector<8x64xf32>
    %61 = arith.mulf %56, %60 : vector<8x64xf32>
    %62 = arith.addf %58, %61 : vector<8x64xf32>
    %63 = math.tanh %62 : vector<8x64xf32>
    %cst_24 = arith.constant 1.000000e+00 : f32
    %64 = vector.broadcast %cst_24 : f32 to vector<8x64xf32>
    %65 = arith.subf %64, %57 : vector<8x64xf32>
    %66 = arith.mulf %65, %63 : vector<8x64xf32>
    %67 = arith.mulf %57, %40 : vector<8x64xf32>
    %68 = arith.addf %66, %67 : vector<8x64xf32>
    %69 = arith.index_cast %44 : i32 to index
    %c0_25 = arith.constant 0 : index
    %70 = vector.load %arg11[%69, %c0_25] : memref<64x64xf32, #tpu.memory_space<vmem>>, vector<8x64xf32>
    tpu.vector_store %arg11[%69, %c0_25], %68 {strides = array<i32>} : memref<64x64xf32, #tpu.memory_space<vmem>>, vector<8x64xf32>,
    %c2_i32 = arith.constant 2 : i32
    %c8_i32_26 = arith.constant 8 : i32
    %71 = arith.muli %c2_i32, %c8_i32_26 : i32
    %72 = tpu.assume_multiple %71, 8 : i32
    %73 = arith.index_cast %72 : i32 to index
    %c0_27 = arith.constant 0 : index
    %74 = vector.load %arg10[%73, %c0_27] : memref<64x256xf32, #tpu.memory_space<vmem>>, vector<8x256xf32>
    %cst_28 = arith.constant dense<0.000000e+00> : vector<8x256xf32>
    %75 = tpu.matmul %68, %10, %cst_28 {dimension_numbers = #tpu.dot_dimension_numbers<[1], [0], [0], [1], [0, 0, 1, 1], [], []>, precision = #tpu.contract_precision<fp32>} : vector<8x64xf32>, vector<64x256xf32>, vector<8x256xf32> -> vector<8x256xf32>
    %76 = vector.extract_strided_slice %74 {offsets = [0, 0], sizes = [8, 128], strides = [1, 1]} : vector<8x256xf32> to vector<8x128xf32>
    %77 = vector.extract_strided_slice %75 {offsets = [0, 0], sizes = [8, 128], strides = [1, 1]} : vector<8x256xf32> to vector<8x128xf32>
    %78 = arith.addf %76, %77 : vector<8x128xf32>
    %79 = arith.negf %78 : vector<8x128xf32>
    %80 = math.exp %79 : vector<8x128xf32>
    %cst_29 = arith.constant 1.000000e+00 : f32
    %81 = vector.broadcast %cst_29 : f32 to vector<8x128xf32>
    %82 = arith.addf %81, %80 : vector<8x128xf32>
    %83 = arith.divf %81, %82 : vector<8x128xf32>
    %84 = vector.extract_strided_slice %83 {offsets = [0, 0], sizes = [8, 64], strides = [1, 1]} : vector<8x128xf32> to vector<8x64xf32>
    %85 = vector.extract_strided_slice %83 {offsets = [0, 64], sizes = [8, 64], strides = [1, 1]} : vector<8x128xf32> to vector<8x64xf32>
    %86 = vector.extract_strided_slice %74 {offsets = [0, 128], sizes = [8, 64], strides = [1, 1]} : vector<8x256xf32> to vector<8x64xf32>
    %87 = vector.extract_strided_slice %75 {offsets = [0, 128], sizes = [8, 64], strides = [1, 1]} : vector<8x256xf32> to vector<8x64xf32>
    %88 = arith.addf %87, %13 : vector<8x64xf32>
    %89 = arith.mulf %84, %88 : vector<8x64xf32>
    %90 = arith.addf %86, %89 : vector<8x64xf32>
    %91 = math.tanh %90 : vector<8x64xf32>
    %cst_30 = arith.constant 1.000000e+00 : f32
    %92 = vector.broadcast %cst_30 : f32 to vector<8x64xf32>
    %93 = arith.subf %92, %85 : vector<8x64xf32>
    %94 = arith.mulf %93, %91 : vector<8x64xf32>
    %95 = arith.mulf %85, %68 : vector<8x64xf32>
    %96 = arith.addf %94, %95 : vector<8x64xf32>
    %97 = arith.index_cast %72 : i32 to index
    %c0_31 = arith.constant 0 : index
    %98 = vector.load %arg11[%97, %c0_31] : memref<64x64xf32, #tpu.memory_space<vmem>>, vector<8x64xf32>
    tpu.vector_store %arg11[%97, %c0_31], %96 {strides = array<i32>} : memref<64x64xf32, #tpu.memory_space<vmem>>, vector<8x64xf32>,
    %c3_i32 = arith.constant 3 : i32
    %c8_i32_32 = arith.constant 8 : i32
    %99 = arith.muli %c3_i32, %c8_i32_32 : i32
    %100 = tpu.assume_multiple %99, 8 : i32
    %101 = arith.index_cast %100 : i32 to index
    %c0_33 = arith.constant 0 : index
    %102 = vector.load %arg10[%101, %c0_33] : memref<64x256xf32, #tpu.memory_space<vmem>>, vector<8x256xf32>
    %cst_34 = arith.constant dense<0.000000e+00> : vector<8x256xf32>
    %103 = tpu.matmul %96, %10, %cst_34 {dimension_numbers = #tpu.dot_dimension_numbers<[1], [0], [0], [1], [0, 0, 1, 1], [], []>, precision = #tpu.contract_precision<fp32>} : vector<8x64xf32>, vector<64x256xf32>, vector<8x256xf32> -> vector<8x256xf32>
    %104 = vector.extract_strided_slice %102 {offsets = [0, 0], sizes = [8, 128], strides = [1, 1]} : vector<8x256xf32> to vector<8x128xf32>
    %105 = vector.extract_strided_slice %103 {offsets = [0, 0], sizes = [8, 128], strides = [1, 1]} : vector<8x256xf32> to vector<8x128xf32>
    %106 = arith.addf %104, %105 : vector<8x128xf32>
    %107 = arith.negf %106 : vector<8x128xf32>
    %108 = math.exp %107 : vector<8x128xf32>
    %cst_35 = arith.constant 1.000000e+00 : f32
    %109 = vector.broadcast %cst_35 : f32 to vector<8x128xf32>
    %110 = arith.addf %109, %108 : vector<8x128xf32>
    %111 = arith.divf %109, %110 : vector<8x128xf32>
    %112 = vector.extract_strided_slice %111 {offsets = [0, 0], sizes = [8, 64], strides = [1, 1]} : vector<8x128xf32> to vector<8x64xf32>
    %113 = vector.extract_strided_slice %111 {offsets = [0, 64], sizes = [8, 64], strides = [1, 1]} : vector<8x128xf32> to vector<8x64xf32>
    %114 = vector.extract_strided_slice %102 {offsets = [0, 128], sizes = [8, 64], strides = [1, 1]} : vector<8x256xf32> to vector<8x64xf32>
    %115 = vector.extract_strided_slice %103 {offsets = [0, 128], sizes = [8, 64], strides = [1, 1]} : vector<8x256xf32> to vector<8x64xf32>
    %116 = arith.addf %115, %13 : vector<8x64xf32>
    %117 = arith.mulf %112, %116 : vector<8x64xf32>
    %118 = arith.addf %114, %117 : vector<8x64xf32>
    %119 = math.tanh %118 : vector<8x64xf32>
    %cst_36 = arith.constant 1.000000e+00 : f32
    %120 = vector.broadcast %cst_36 : f32 to vector<8x64xf32>
    %121 = arith.subf %120, %113 : vector<8x64xf32>
    %122 = arith.mulf %121, %119 : vector<8x64xf32>
    %123 = arith.mulf %113, %96 : vector<8x64xf32>
    %124 = arith.addf %122, %123 : vector<8x64xf32>
    %125 = arith.index_cast %100 : i32 to index
    %c0_37 = arith.constant 0 : index
    %126 = vector.load %arg11[%125, %c0_37] : memref<64x64xf32, #tpu.memory_space<vmem>>, vector<8x64xf32>
    tpu.vector_store %arg11[%125, %c0_37], %124 {strides = array<i32>} : memref<64x64xf32, #tpu.memory_space<vmem>>, vector<8x64xf32>,
    %c4_i32 = arith.constant 4 : i32
    %c8_i32_38 = arith.constant 8 : i32
    %127 = arith.muli %c4_i32, %c8_i32_38 : i32
    %128 = tpu.assume_multiple %127, 8 : i32
    %129 = arith.index_cast %128 : i32 to index
    %c0_39 = arith.constant 0 : index
    %130 = vector.load %arg10[%129, %c0_39] : memref<64x256xf32, #tpu.memory_space<vmem>>, vector<8x256xf32>
    %cst_40 = arith.constant dense<0.000000e+00> : vector<8x256xf32>
    %131 = tpu.matmul %124, %10, %cst_40 {dimension_numbers = #tpu.dot_dimension_numbers<[1], [0], [0], [1], [0, 0, 1, 1], [], []>, precision = #tpu.contract_precision<fp32>} : vector<8x64xf32>, vector<64x256xf32>, vector<8x256xf32> -> vector<8x256xf32>
    %132 = vector.extract_strided_slice %130 {offsets = [0, 0], sizes = [8, 128], strides = [1, 1]} : vector<8x256xf32> to vector<8x128xf32>
    %133 = vector.extract_strided_slice %131 {offsets = [0, 0], sizes = [8, 128], strides = [1, 1]} : vector<8x256xf32> to vector<8x128xf32>
    %134 = arith.addf %132, %133 : vector<8x128xf32>
    %135 = arith.negf %134 : vector<8x128xf32>
    %136 = math.exp %135 : vector<8x128xf32>
    %cst_41 = arith.constant 1.000000e+00 : f32
    %137 = vector.broadcast %cst_41 : f32 to vector<8x128xf32>
    %138 = arith.addf %137, %136 : vector<8x128xf32>
    %139 = arith.divf %137, %138 : vector<8x128xf32>
    %140 = vector.extract_strided_slice %139 {offsets = [0, 0], sizes = [8, 64], strides = [1, 1]} : vector<8x128xf32> to vector<8x64xf32>
    %141 = vector.extract_strided_slice %139 {offsets = [0, 64], sizes = [8, 64], strides = [1, 1]} : vector<8x128xf32> to vector<8x64xf32>
    %142 = vector.extract_strided_slice %130 {offsets = [0, 128], sizes = [8, 64], strides = [1, 1]} : vector<8x256xf32> to vector<8x64xf32>
    %143 = vector.extract_strided_slice %131 {offsets = [0, 128], sizes = [8, 64], strides = [1, 1]} : vector<8x256xf32> to vector<8x64xf32>
    %144 = arith.addf %143, %13 : vector<8x64xf32>
    %145 = arith.mulf %140, %144 : vector<8x64xf32>
    %146 = arith.addf %142, %145 : vector<8x64xf32>
    %147 = math.tanh %146 : vector<8x64xf32>
    %cst_42 = arith.constant 1.000000e+00 : f32
    %148 = vector.broadcast %cst_42 : f32 to vector<8x64xf32>
    %149 = arith.subf %148, %141 : vector<8x64xf32>
    %150 = arith.mulf %149, %147 : vector<8x64xf32>
    %151 = arith.mulf %141, %124 : vector<8x64xf32>
    %152 = arith.addf %150, %151 : vector<8x64xf32>
    %153 = arith.index_cast %128 : i32 to index
    %c0_43 = arith.constant 0 : index
    %154 = vector.load %arg11[%153, %c0_43] : memref<64x64xf32, #tpu.memory_space<vmem>>, vector<8x64xf32>
    tpu.vector_store %arg11[%153, %c0_43], %152 {strides = array<i32>} : memref<64x64xf32, #tpu.memory_space<vmem>>, vector<8x64xf32>,
    %c5_i32 = arith.constant 5 : i32
    %c8_i32_44 = arith.constant 8 : i32
    %155 = arith.muli %c5_i32, %c8_i32_44 : i32
    %156 = tpu.assume_multiple %155, 8 : i32
    %157 = arith.index_cast %156 : i32 to index
    %c0_45 = arith.constant 0 : index
    %158 = vector.load %arg10[%157, %c0_45] : memref<64x256xf32, #tpu.memory_space<vmem>>, vector<8x256xf32>
    %cst_46 = arith.constant dense<0.000000e+00> : vector<8x256xf32>
    %159 = tpu.matmul %152, %10, %cst_46 {dimension_numbers = #tpu.dot_dimension_numbers<[1], [0], [0], [1], [0, 0, 1, 1], [], []>, precision = #tpu.contract_precision<fp32>} : vector<8x64xf32>, vector<64x256xf32>, vector<8x256xf32> -> vector<8x256xf32>
    %160 = vector.extract_strided_slice %158 {offsets = [0, 0], sizes = [8, 128], strides = [1, 1]} : vector<8x256xf32> to vector<8x128xf32>
    %161 = vector.extract_strided_slice %159 {offsets = [0, 0], sizes = [8, 128], strides = [1, 1]} : vector<8x256xf32> to vector<8x128xf32>
    %162 = arith.addf %160, %161 : vector<8x128xf32>
    %163 = arith.negf %162 : vector<8x128xf32>
    %164 = math.exp %163 : vector<8x128xf32>
    %cst_47 = arith.constant 1.000000e+00 : f32
    %165 = vector.broadcast %cst_47 : f32 to vector<8x128xf32>
    %166 = arith.addf %165, %164 : vector<8x128xf32>
    %167 = arith.divf %165, %166 : vector<8x128xf32>
    %168 = vector.extract_strided_slice %167 {offsets = [0, 0], sizes = [8, 64], strides = [1, 1]} : vector<8x128xf32> to vector<8x64xf32>
    %169 = vector.extract_strided_slice %167 {offsets = [0, 64], sizes = [8, 64], strides = [1, 1]} : vector<8x128xf32> to vector<8x64xf32>
    %170 = vector.extract_strided_slice %158 {offsets = [0, 128], sizes = [8, 64], strides = [1, 1]} : vector<8x256xf32> to vector<8x64xf32>
    %171 = vector.extract_strided_slice %159 {offsets = [0, 128], sizes = [8, 64], strides = [1, 1]} : vector<8x256xf32> to vector<8x64xf32>
    %172 = arith.addf %171, %13 : vector<8x64xf32>
    %173 = arith.mulf %168, %172 : vector<8x64xf32>
    %174 = arith.addf %170, %173 : vector<8x64xf32>
    %175 = math.tanh %174 : vector<8x64xf32>
    %cst_48 = arith.constant 1.000000e+00 : f32
    %176 = vector.broadcast %cst_48 : f32 to vector<8x64xf32>
    %177 = arith.subf %176, %169 : vector<8x64xf32>
    %178 = arith.mulf %177, %175 : vector<8x64xf32>
    %179 = arith.mulf %169, %152 : vector<8x64xf32>
    %180 = arith.addf %178, %179 : vector<8x64xf32>
    %181 = arith.index_cast %156 : i32 to index
    %c0_49 = arith.constant 0 : index
    %182 = vector.load %arg11[%181, %c0_49] : memref<64x64xf32, #tpu.memory_space<vmem>>, vector<8x64xf32>
    tpu.vector_store %arg11[%181, %c0_49], %180 {strides = array<i32>} : memref<64x64xf32, #tpu.memory_space<vmem>>, vector<8x64xf32>,
    %c6_i32 = arith.constant 6 : i32
    %c8_i32_50 = arith.constant 8 : i32
    %183 = arith.muli %c6_i32, %c8_i32_50 : i32
    %184 = tpu.assume_multiple %183, 8 : i32
    %185 = arith.index_cast %184 : i32 to index
    %c0_51 = arith.constant 0 : index
    %186 = vector.load %arg10[%185, %c0_51] : memref<64x256xf32, #tpu.memory_space<vmem>>, vector<8x256xf32>
    %cst_52 = arith.constant dense<0.000000e+00> : vector<8x256xf32>
    %187 = tpu.matmul %180, %10, %cst_52 {dimension_numbers = #tpu.dot_dimension_numbers<[1], [0], [0], [1], [0, 0, 1, 1], [], []>, precision = #tpu.contract_precision<fp32>} : vector<8x64xf32>, vector<64x256xf32>, vector<8x256xf32> -> vector<8x256xf32>
    %188 = vector.extract_strided_slice %186 {offsets = [0, 0], sizes = [8, 128], strides = [1, 1]} : vector<8x256xf32> to vector<8x128xf32>
    %189 = vector.extract_strided_slice %187 {offsets = [0, 0], sizes = [8, 128], strides = [1, 1]} : vector<8x256xf32> to vector<8x128xf32>
    %190 = arith.addf %188, %189 : vector<8x128xf32>
    %191 = arith.negf %190 : vector<8x128xf32>
    %192 = math.exp %191 : vector<8x128xf32>
    %cst_53 = arith.constant 1.000000e+00 : f32
    %193 = vector.broadcast %cst_53 : f32 to vector<8x128xf32>
    %194 = arith.addf %193, %192 : vector<8x128xf32>
    %195 = arith.divf %193, %194 : vector<8x128xf32>
    %196 = vector.extract_strided_slice %195 {offsets = [0, 0], sizes = [8, 64], strides = [1, 1]} : vector<8x128xf32> to vector<8x64xf32>
    %197 = vector.extract_strided_slice %195 {offsets = [0, 64], sizes = [8, 64], strides = [1, 1]} : vector<8x128xf32> to vector<8x64xf32>
    %198 = vector.extract_strided_slice %186 {offsets = [0, 128], sizes = [8, 64], strides = [1, 1]} : vector<8x256xf32> to vector<8x64xf32>
    %199 = vector.extract_strided_slice %187 {offsets = [0, 128], sizes = [8, 64], strides = [1, 1]} : vector<8x256xf32> to vector<8x64xf32>
    %200 = arith.addf %199, %13 : vector<8x64xf32>
    %201 = arith.mulf %196, %200 : vector<8x64xf32>
    %202 = arith.addf %198, %201 : vector<8x64xf32>
    %203 = math.tanh %202 : vector<8x64xf32>
    %cst_54 = arith.constant 1.000000e+00 : f32
    %204 = vector.broadcast %cst_54 : f32 to vector<8x64xf32>
    %205 = arith.subf %204, %197 : vector<8x64xf32>
    %206 = arith.mulf %205, %203 : vector<8x64xf32>
    %207 = arith.mulf %197, %180 : vector<8x64xf32>
    %208 = arith.addf %206, %207 : vector<8x64xf32>
    %209 = arith.index_cast %184 : i32 to index
    %c0_55 = arith.constant 0 : index
    %210 = vector.load %arg11[%209, %c0_55] : memref<64x64xf32, #tpu.memory_space<vmem>>, vector<8x64xf32>
    tpu.vector_store %arg11[%209, %c0_55], %208 {strides = array<i32>} : memref<64x64xf32, #tpu.memory_space<vmem>>, vector<8x64xf32>,
    %c7_i32 = arith.constant 7 : i32
    %c8_i32_56 = arith.constant 8 : i32
    %211 = arith.muli %c7_i32, %c8_i32_56 : i32
    %212 = tpu.assume_multiple %211, 8 : i32
    %213 = arith.index_cast %212 : i32 to index
    %c0_57 = arith.constant 0 : index
    %214 = vector.load %arg10[%213, %c0_57] : memref<64x256xf32, #tpu.memory_space<vmem>>, vector<8x256xf32>
    %cst_58 = arith.constant dense<0.000000e+00> : vector<8x256xf32>
    %215 = tpu.matmul %208, %10, %cst_58 {dimension_numbers = #tpu.dot_dimension_numbers<[1], [0], [0], [1], [0, 0, 1, 1], [], []>, precision = #tpu.contract_precision<fp32>} : vector<8x64xf32>, vector<64x256xf32>, vector<8x256xf32> -> vector<8x256xf32>
    %216 = vector.extract_strided_slice %214 {offsets = [0, 0], sizes = [8, 128], strides = [1, 1]} : vector<8x256xf32> to vector<8x128xf32>
    %217 = vector.extract_strided_slice %215 {offsets = [0, 0], sizes = [8, 128], strides = [1, 1]} : vector<8x256xf32> to vector<8x128xf32>
    %218 = arith.addf %216, %217 : vector<8x128xf32>
    %219 = arith.negf %218 : vector<8x128xf32>
    %220 = math.exp %219 : vector<8x128xf32>
    %cst_59 = arith.constant 1.000000e+00 : f32
    %221 = vector.broadcast %cst_59 : f32 to vector<8x128xf32>
    %222 = arith.addf %221, %220 : vector<8x128xf32>
    %223 = arith.divf %221, %222 : vector<8x128xf32>
    %224 = vector.extract_strided_slice %223 {offsets = [0, 0], sizes = [8, 64], strides = [1, 1]} : vector<8x128xf32> to vector<8x64xf32>
    %225 = vector.extract_strided_slice %223 {offsets = [0, 64], sizes = [8, 64], strides = [1, 1]} : vector<8x128xf32> to vector<8x64xf32>
    %226 = vector.extract_strided_slice %214 {offsets = [0, 128], sizes = [8, 64], strides = [1, 1]} : vector<8x256xf32> to vector<8x64xf32>
    %227 = vector.extract_strided_slice %215 {offsets = [0, 128], sizes = [8, 64], strides = [1, 1]} : vector<8x256xf32> to vector<8x64xf32>
    %228 = arith.addf %227, %13 : vector<8x64xf32>
    %229 = arith.mulf %224, %228 : vector<8x64xf32>
    %230 = arith.addf %226, %229 : vector<8x64xf32>
    %231 = math.tanh %230 : vector<8x64xf32>
    %cst_60 = arith.constant 1.000000e+00 : f32
    %232 = vector.broadcast %cst_60 : f32 to vector<8x64xf32>
    %233 = arith.subf %232, %225 : vector<8x64xf32>
    %234 = arith.mulf %233, %231 : vector<8x64xf32>
    %235 = arith.mulf %225, %208 : vector<8x64xf32>
    %236 = arith.addf %234, %235 : vector<8x64xf32>
    %237 = arith.index_cast %212 : i32 to index
    %c0_61 = arith.constant 0 : index
    %238 = vector.load %arg11[%237, %c0_61] : memref<64x64xf32, #tpu.memory_space<vmem>>, vector<8x64xf32>
    tpu.vector_store %arg11[%237, %c0_61], %236 {strides = array<i32>} : memref<64x64xf32, #tpu.memory_space<vmem>>, vector<8x64xf32>,
    %c8_i32_62 = arith.constant 8 : i32
    %c0_63 = arith.constant 0 : index
    %c0_64 = arith.constant 0 : index
    %239 = vector.load %arg9[%c0_63, %c0_64] : memref<8x64xf32, #tpu.memory_space<vmem>>, vector<8x64xf32>
    tpu.vector_store %arg9[%c0_63, %c0_64], %236 {strides = array<i32>} : memref<8x64xf32, #tpu.memory_space<vmem>>, vector<8x64xf32>,
    %c0_65 = arith.constant 0 : index
    %c0_66 = arith.constant 0 : index
    %240 = vector.load %arg11[%c0_65, %c0_66] : memref<64x64xf32, #tpu.memory_space<vmem>>, vector<64x64xf32>
    %c0_67 = arith.constant 0 : index
    %c0_68 = arith.constant 0 : index
    %241 = vector.load %arg7[%c0_67, %c0_68] : memref<64x128xf32, #tpu.memory_space<vmem>>, vector<64x128xf32>
    %cst_69 = arith.constant dense<0.000000e+00> : vector<64x128xf32>
    %242 = tpu.matmul %240, %241, %cst_69 {dimension_numbers = #tpu.dot_dimension_numbers<[1], [0], [0], [1], [0, 0, 1, 1], [], []>} : vector<64x64xf32>, vector<64x128xf32>, vector<64x128xf32> -> vector<64x128xf32>
    %243 = tpu.iota {dimensions = array<i32: 1>} : vector<64x128xi32>
    %c32_i32 = arith.constant 32 : i32
    %244 = vector.broadcast %c32_i32 : i32 to vector<64x128xi32>
    %245 = arith.cmpi eq, %243, %244 : vector<64x128xi32>
    %cst_70 = arith.constant 0.000000e+00 : f32
    %246 = vector.broadcast %cst_70 : f32 to vector<64x128xf32>
    %247 = arith.maximumf %242, %246 : vector<64x128xf32>
    %cst_71 = arith.constant 1.000000e+00 : f32
    %248 = vector.broadcast %cst_71 : f32 to vector<64x128xf32>
    %249 = arith.addf %248, %247 : vector<64x128xf32>
    %250 = arith.select %245, %249, %242 : vector<64x128xi1>, vector<64x128xf32>
    %c34_i32 = arith.constant 34 : i32
    %251 = vector.broadcast %c34_i32 : i32 to vector<64x128xi32>
    %252 = arith.cmpi sge, %243, %251 : vector<64x128xi32>
    %c66_i32 = arith.constant 66 : i32
    %253 = vector.broadcast %c66_i32 : i32 to vector<64x128xi32>
    %254 = arith.cmpi slt, %243, %253 : vector<64x128xi32>
    %255 = arith.andi %252, %254 : vector<64x128xi1>
    %256 = math.tanh %242 : vector<64x128xf32>
    %257 = arith.select %255, %256, %250 : vector<64x128xi1>, vector<64x128xf32>
    %c0_72 = arith.constant 0 : index
    %c0_73 = arith.constant 0 : index
    %258 = vector.load %arg8[%c0_72, %c0_73] : memref<64x128xf32, #tpu.memory_space<vmem>>, vector<64x128xf32>
    tpu.vector_store %arg8[%c0_72, %c0_73], %257 {strides = array<i32>} : memref<64x128xf32, #tpu.memory_space<vmem>>, vector<64x128xf32>,
    return
  }
  func.func @transform_0(%arg0: i32) -> (i32, i32) {
    %c0_i32 = arith.constant 0 : i32
    %c0_i32_0 = arith.constant 0 : i32
    return %arg0, %c0_i32 : i32, i32
  }
  func.func @transform_1(%arg0: i32) -> (i32, i32) {
    %c0_i32 = arith.constant 0 : i32
    %c0_i32_0 = arith.constant 0 : i32
    %c0_i32_1 = arith.constant 0 : i32
    return %c0_i32, %c0_i32_0 : i32, i32
  }
  func.func @transform_2(%arg0: i32) -> (i32, i32) {
    %c0_i32 = arith.constant 0 : i32
    %c0_i32_0 = arith.constant 0 : i32
    %c0_i32_1 = arith.constant 0 : i32
    return %c0_i32, %c0_i32_0 : i32, i32
  }
  func.func @transform_3(%arg0: i32) -> (i32, i32) {
    %c0_i32 = arith.constant 0 : i32
    %c0_i32_0 = arith.constant 0 : i32
    %c0_i32_1 = arith.constant 0 : i32
    return %c0_i32, %c0_i32_0 : i32, i32
  }
  func.func @transform_4(%arg0: i32) -> (i32, i32) {
    %c0_i32 = arith.constant 0 : i32
    %c0_i32_0 = arith.constant 0 : i32
    %c0_i32_1 = arith.constant 0 : i32
    return %c0_i32, %c0_i32_0 : i32, i32
  }
  func.func @transform_5(%arg0: i32) -> (i32, i32) {
    %c0_i32 = arith.constant 0 : i32
    %c0_i32_0 = arith.constant 0 : i32
    %c0_i32_1 = arith.constant 0 : i32
    return %c0_i32, %c0_i32_0 : i32, i32
  }
  func.func @transform_6(%arg0: i32) -> (i32, i32) {
    %c0_i32 = arith.constant 0 : i32
    %c0_i32_0 = arith.constant 0 : i32
    %c0_i32_1 = arith.constant 0 : i32
    return %c0_i32, %c0_i32_0 : i32, i32
  }
  func.func @transform_7(%arg0: i32) -> (i32, i32) {
    %c0_i32 = arith.constant 0 : i32
    %c0_i32_0 = arith.constant 0 : i32
    return %arg0, %c0_i32 : i32, i32
  }
  func.func @transform_8(%arg0: i32) -> (i32, i32) {
    %c0_i32 = arith.constant 0 : i32
    %c0_i32_0 = arith.constant 0 : i32
    %c0_i32_1 = arith.constant 0 : i32
    return %c0_i32, %c0_i32_0 : i32, i32
  }
}

</mosaic_0001>

<llo_original>
// kernel: base_controller_forward_seq.1
$region0: #{base_controller_forward_seq.1}
  #allocation0 [shape = 'u32[]', space=smem, size = 0x4, offset = 0x4, fixed_abs, tag = 'smem constant byte address 0x4 - core index']
  #allocation1 [shape = 'u32[144,128]{1,0:T(1,128)}', space=vmem, size = 0x12000, scoped, tag = 'internal scratch']
  #allocation2 [shape = 'f32[64,256]{1,0:T(8,128)}', space=vmem, size = 0x10000, scoped, tag = 'scratch operand']
  #allocation3 [shape = 'f32[64,64]{1,0:T(8,128)}', space=vmem, size = 0x8000, scoped, tag = 'scratch operand']
  %s0 = inlined_call_operand.vmem [shape: f32[64,33], index: 0, kind: input, shape index: {}]
  %s1 = inlined_call_operand.vmem [shape: f32[8,64], index: 1, kind: input, shape index: {}]
  %s2 = inlined_call_operand.hbm [shape: f32[33,256], index: 2, kind: input, shape index: {}]
  %s3 = inlined_call_operand.vmem [shape: f32[1,256], index: 3, kind: input, shape index: {}]
  %s4 = inlined_call_operand.vmem [shape: f32[64,256], index: 4, kind: input, shape index: {}]
  %s5 = inlined_call_operand.vmem [shape: f32[1,64], index: 5, kind: input, shape index: {}]
  %s6 = inlined_call_operand.hbm [shape: f32[64,128], index: 6, kind: input, shape index: {}]
  %s7 = inlined_call_operand.vmem [shape: f32[64,128], index: 7, kind: output, shape index: {0}]
  %s8 = inlined_call_operand.vmem [shape: f32[8,64], index: 8, kind: output, shape index: {1}]
  %9 = xla_tuple %s7, %s8
  %s10 = sld [smem:[#allocation0]]
  $region58: #{base_controller_forward_seq.1} parent=0
    _
  %s12 = ssub.s32 1, %s10
  %s13 = scalar_select 0, %s12, %s10
  $region1: #{base_controller_forward_seq.1} parent=0
    #allocation4 [shape = 'u8[40960]{0}', space=vmem, size = 0xa000, scoped, tag = 'input window, operand 2, single buffered']
    #allocation5 [shape = 's32[1]{0}', space=sflag, size = 0x4, scoped, tag = 'scoped memory for base_controller_forward_seq.1']
    #allocation6 [shape = 'u8[32768]{0}', space=vmem, size = 0x8000, scoped, tag = 'input window, operand 6, single buffered']
    #allocation7 [shape = 's32[1]{0}', space=sflag, size = 0x4, scoped, tag = 'scoped memory for base_controller_forward_seq.1']
    %14 = vsyncpa [#allocation5], 0
    %15 = vsyncpa [#allocation7], 0
    // Predicated region
    $region2: #{base_controller_forward_seq.1} parent=1 // pred_check
      _
    $region3: #{base_controller_forward_seq.1} parent=1 // pred_check_branch
      %17 = sbr.rel (0) target = $region5
    $region4: #{base_controller_forward_seq.1} parent=1 // pred_region
      _
    $region5: #{base_controller_forward_seq.1} parent=1 // pred_fallthru
      _
    // Predicated region
    $region6: #{base_controller_forward_seq.1} parent=1 // pred_check
      _
    $region7: #{base_controller_forward_seq.1} parent=1 // pred_check_branch
      %19 = sbr.rel (0) target = $region9
    $region8: #{base_controller_forward_seq.1} parent=1 // pred_region
      _
    $region9: #{base_controller_forward_seq.1} parent=1 // pred_fallthru
      _
    // Predicated region
    $region10: #{base_controller_forward_seq.1} parent=1 // pred_check
      _
    $region11: #{base_controller_forward_seq.1} parent=1 // pred_check_branch
      %21 = sbr.rel (0) target = $region13
    $region12: #{base_controller_forward_seq.1} parent=1 // pred_region
      %s23 = ssub.s32 1280, 1280
      %24 = vsyncadd [#allocation5], %s23
      %s25 = sshll.u32 [#allocation4], 4
      %s26 = int_to_ptr.vmem [resolvable:$true] %s25
      %31 = dma.hbm_to_vmem [thread:$0]  %s2, 1280, %s26, [#allocation5], 256, 256, 16
    $region13: #{base_controller_forward_seq.1} parent=1 // pred_fallthru
      _
    // Predicated region
    $region14: #{base_controller_forward_seq.1} parent=1 // pred_check
      _
    $region15: #{base_controller_forward_seq.1} parent=1 // pred_check_branch
      %33 = sbr.rel (0) target = $region17
    $region16: #{base_controller_forward_seq.1} parent=1 // pred_region
      _
    $region17: #{base_controller_forward_seq.1} parent=1 // pred_fallthru
      _
    // Predicated region
    $region18: #{base_controller_forward_seq.1} parent=1 // pred_check
      _
    $region19: #{base_controller_forward_seq.1} parent=1 // pred_check_branch
      %35 = sbr.rel (0) target = $region21
    $region20: #{base_controller_forward_seq.1} parent=1 // pred_region
      _
    $region21: #{base_controller_forward_seq.1} parent=1 // pred_fallthru
      _
    // Predicated region
    $region22: #{base_controller_forward_seq.1} parent=1 // pred_check
      _
    $region23: #{base_controller_forward_seq.1} parent=1 // pred_check_branch
      %37 = sbr.rel (0) target = $region25
    $region24: #{base_controller_forward_seq.1} parent=1 // pred_region
      _
    $region25: #{base_controller_forward_seq.1} parent=1 // pred_fallthru
      _
    // Predicated region
    $region26: #{base_controller_forward_seq.1} parent=1 // pred_check
      _
    $region27: #{base_controller_forward_seq.1} parent=1 // pred_check_branch
      %39 = sbr.rel (0) target = $region29
    $region28: #{base_controller_forward_seq.1} parent=1 // pred_region
      %s41 = ssub.s32 1024, 1024
      %42 = vsyncadd [#allocation7], %s41
      %s43 = sshll.u32 [#allocation6], 4
      %s44 = int_to_ptr.vmem [resolvable:$true] %s43
      %49 = dma.hbm_to_vmem [thread:$0]  %s6, 1024, %s44, [#allocation7], 128, 128, 8
    $region29: #{base_controller_forward_seq.1} parent=1 // pred_fallthru
      _
    // Predicated region
    $region30: #{base_controller_forward_seq.1} parent=1 // pred_check
      _
    $region31: #{base_controller_forward_seq.1} parent=1 // pred_check_branch
      %51 = sbr.rel (0) target = $region33
    $region32: #{base_controller_forward_seq.1} parent=1 // pred_region
      %52 = dma.done [#allocation5], 1280
    $region33: #{base_controller_forward_seq.1} parent=1 // pred_fallthru
      _
    // Predicated region
    $region34: #{base_controller_forward_seq.1} parent=1 // pred_check
      _
    $region35: #{base_controller_forward_seq.1} parent=1 // pred_check_branch
      %54 = sbr.rel (0) target = $region37
    $region36: #{base_controller_forward_seq.1} parent=1 // pred_region
      %55 = dma.done [#allocation7], 1024
    $region37: #{base_controller_forward_seq.1} parent=1 // pred_fallthru
      _
    %p56 = scmp.eq.s32.totalorder 0, 0
    // Predicated region
    $region38: #{base_controller_forward_seq.1} parent=1 // pred_check
      %p57 = pneg %p56
    $region39: #{base_controller_forward_seq.1} parent=1 // pred_check_branch
      %59 = sbr.rel (%p57) target = $region41
    $region40: #{base_controller_forward_seq.1} parent=1 // pred_region
      %v60 = vld [vmem:[%s1] sm:$0xff]
      %vm61 = vcmask 523264
      %62 = vst.msk [vmem:[%s8] sm:$0xff] %vm61, %v60
    $region41: #{base_controller_forward_seq.1} parent=1 // pred_fallthru
      _
    %v63 = vld [vmem:[%s0] sm:$0xff]
    %v64 = vld [vmem:[%s0 + $0x8] sm:$0xff]
    %v65 = vld [vmem:[%s0 + $0x10] sm:$0xff]
    %v66 = vld [vmem:[%s0 + $0x18] sm:$0xff]
    %v67 = vld [vmem:[%s0 + $0x20] sm:$0xff]
    %v68 = vld [vmem:[%s0 + $0x28] sm:$0xff]
    %v69 = vld [vmem:[%s0 + $0x30] sm:$0xff]
    %v70 = vld [vmem:[%s0 + $0x38] sm:$0xff]
    %v71 = vld [vmem:[#allocation4] sm:$0xff]
    %v72 = vld [vmem:[#allocation4 + $0x8] sm:$0xff]
    %v73 = vld [vmem:[#allocation4 + $0x10] sm:$0xff]
    %v74 = vld [vmem:[#allocation4 + $0x18] sm:$0xff]
    %v75 = vld [vmem:[#allocation4 + $0x20] sm:$0xff]
    %v76 = vld [vmem:[#allocation4 + $0x28] sm:$0xff]
    %v77 = vld [vmem:[#allocation4 + $0x30] sm:$0xff]
    %v78 = vld [vmem:[#allocation4 + $0x38] sm:$0xff]
    %v79 = vld [vmem:[#allocation4 + $0x40] sm:$0x1]
    %v80 = vld [vmem:[#allocation4 + $0x48] sm:$0x1]
    %v81 = vld [vmem:[%s3] sm:$0x3]
    %v83 = vlaneseq
    %v84 = vshrl.u32 %v83, 7
    %v85 = vsub.s32 0, %v84
    %v86 = vrot.slane %v81, %v85
    %v87 = vlaneseq
    %v88 = vshrl.u32 %v87, 7
    %v89 = vsub.s32 1, %v88
    %v90 = vrot.slane %v81, %v89
    %vm93 = vcmask 269312
    %v95 = vsel %vm93, %v63, 0
    %v98 = vsel %vm93, %v64, 0
    %v101 = vsel %vm93, %v65, 0
    %v104 = vsel %vm93, %v66, 0
    %v107 = vsel %vm93, %v67, 0
    %v110 = vsel %vm93, %v68, 0
    %v113 = vsel %vm93, %v69, 0
    %v116 = vsel %vm93, %v70, 0
    %vm118 = vcmask 1040384
    %v120 = vsel %vm118, %v79, 0
    %v123 = vsel %vm118, %v80, 0
    %125 = vmatprep.subr.mxu0 %v72
    %126 = vmatpush1.msra.mxu0 %v71
    %127 = vmatprep.subr.mxu0 %v74
    %128 = vmatpush1.msra.mxu0 %v73
    %129 = vmatprep.subr.mxu0 %v76
    %130 = vmatpush1.msra.mxu0 %v75
    %131 = vmatprep.subr.mxu0 %v78
    %132 = vmatpush1.msra.mxu0 %v77
    %133 = vmatprep.subr.mxu0 %v123
    %134 = vmatpush1.msra.mxu0 %v120
    %135 = vmatprep.subr.mxu0 0.0
    %136 = vmatpush1.msra.mxu0 0.0
    %137 = vmatprep.subr.mxu0 0.0
    %138 = vmatpush1.msra.mxu0 0.0
    %139 = vmatprep.subr.mxu0 0.0
    %140 = vmatpush1.msra.mxu0 0.0
    %141 = vmatprep.subr.mxu0 0.0
    %142 = vmatpush1.msra.mxu0 0.0
    %143 = vmatprep.subr.mxu0 0.0
    %144 = vmatpush1.msra.mxu0 0.0
    %145 = vmatprep.subr.mxu0 0.0
    %146 = vmatpush1.msra.mxu0 0.0
    %147 = vmatprep.subr.mxu0 0.0
    %148 = vmatpush1.msra.mxu0 0.0
    %149 = vmatprep.subr.mxu0 0.0
    %150 = vmatpush1.msra.mxu0 0.0
    %151 = vmatprep.subr.mxu0 0.0
    %152 = vmatpush1.msra.mxu0 0.0
    %153 = vmatprep.subr.mxu0 0.0
    %154 = vmatpush1.msra.mxu0 0.0
    %155 = vmatprep.subr.mxu0 0.0
    %156 = vmatpush1.msra.mxu0 0.0
    %157 = vmatprep.subr.mxu0 0.0
    %158 = vmatpush1.msra.mxu0 0.0
    %159 = vmatprep.subr.mxu0 0.0
    %160 = vmatpush1.msra.mxu0 0.0
    %161 = vmatprep.subr.mxu0 0.0
    %162 = vmatpush1.msra.mxu0 0.0
    %163 = vmatprep.subr.mxu0 0.0
    %164 = vmatpush1.msra.mxu0 0.0
    %165 = vmatprep.subr.mxu0 0.0
    %166 = vmatpush1.msra.mxu0 0.0
    %167 = vmatprep.subr.mxu0 0.0
    %168 = vmatpush1.msra.mxu0 0.0
    %169 = vmatprep.subr.mxu0 0.0
    %170 = vmatpush1.msra.mxu0 0.0
    %171 = vmatprep.subr.mxu0 0.0
    %172 = vmatpush1.msra.mxu0 0.0
    %173 = vmatprep.subr.mxu0 0.0
    %174 = vmatpush1.msra.mxu0 0.0
    %175 = vmatprep.subr.mxu0 0.0
    %176 = vmatpush1.msra.mxu0 0.0
    %177 = vmatprep.subr.mxu0 0.0
    %178 = vmatpush1.msra.mxu0 0.0
    %179 = vmatprep.subr.mxu0 0.0
    %180 = vmatpush1.msra.mxu0 0.0
    %181 = vmatprep.subr.mxu0 0.0
    %182 = vmatpush1.msra.mxu0 0.0
    %183 = vmatprep.subr.mxu0 0.0
    %184 = vmatpush1.msra.mxu0 0.0
    %185 = vmatprep.subr.mxu0 0.0
    %186 = vmatpush1.msra.mxu0 0.0
    %187 = vmatprep.subr.mxu0 0.0
    %188 = vmatpush1.msra.mxu0 0.0
    %189 = vmatprep.mubr.f32.mxu0 0.0
    %190 = vmatmul.mubr.f32.gmra.mrb[0].mxu0 %v95
    %v191 = vpop.f32.mrb[0].mxu0
    %v192 = vadd.f32 %v86, %v191
    %v193 = vpop.f32.mrb[0].mxu0
    %v194 = vadd.f32 %v90, %v193
    %195 = vmatprep.mubr.f32.mxu0 0.0
    %196 = vmatmul.mubr.f32.gmra.mrb[0].mxu0 %v98
    %v197 = vpop.f32.mrb[0].mxu0
    %v198 = vadd.f32 %v86, %v197
    %v199 = vpop.f32.mrb[0].mxu0
    %v200 = vadd.f32 %v90, %v199
    %201 = vmatprep.mubr.f32.mxu0 0.0
    %202 = vmatmul.mubr.f32.gmra.mrb[0].mxu0 %v101
    %v203 = vpop.f32.mrb[0].mxu0
    %v204 = vadd.f32 %v86, %v203
    %v205 = vpop.f32.mrb[0].mxu0
    %v206 = vadd.f32 %v90, %v205
    %207 = vmatprep.mubr.f32.mxu0 0.0
    %208 = vmatmul.mubr.f32.gmra.mrb[0].mxu0 %v104
    %v209 = vpop.f32.mrb[0].mxu0
    %v210 = vadd.f32 %v86, %v209
    %v211 = vpop.f32.mrb[0].mxu0
    %v212 = vadd.f32 %v90, %v211
    %213 = vmatprep.mubr.f32.mxu0 0.0
    %214 = vmatmul.mubr.f32.gmra.mrb[0].mxu0 %v107
    %v215 = vpop.f32.mrb[0].mxu0
    %v216 = vadd.f32 %v86, %v215
    %v217 = vpop.f32.mrb[0].mxu0
    %v218 = vadd.f32 %v90, %v217
    %219 = vmatprep.mubr.f32.mxu0 0.0
    %220 = vmatmul.mubr.f32.gmra.mrb[0].mxu0 %v110
    %v221 = vpop.f32.mrb[0].mxu0
    %v222 = vadd.f32 %v86, %v221
    %v223 = vpop.f32.mrb[0].mxu0
    %v224 = vadd.f32 %v90, %v223
    %225 = vmatprep.mubr.f32.mxu0 0.0
    %226 = vmatmul.mubr.f32.gmra.mrb[0].mxu0 %v113
    %v227 = vpop.f32.mrb[0].mxu0
    %v228 = vadd.f32 %v86, %v227
    %v229 = vpop.f32.mrb[0].mxu0
    %v230 = vadd.f32 %v90, %v229
    %231 = vmatprep.mubr.f32.mxu0 0.0
    %232 = vmatmul.mubr.f32.gmra.mrb[0].mxu0 %v116
    %v233 = vpop.f32.mrb[0].mxu0
    %v234 = vadd.f32 %v86, %v233
    %v235 = vpop.f32.mrb[0].mxu0
    %v236 = vadd.f32 %v90, %v235
    %237 = vdwg.mxu0
    %238 = vst [vmem:[#allocation2] sm:$0xff] %v192
    %239 = vst [vmem:[#allocation2 + $0x8] sm:$0xff] %v194
    %240 = vst [vmem:[#allocation2 + $0x10] sm:$0xff] %v198
    %241 = vst [vmem:[#allocation2 + $0x18] sm:$0xff] %v200
    %242 = vst [vmem:[#allocation2 + $0x20] sm:$0xff] %v204
    %243 = vst [vmem:[#allocation2 + $0x28] sm:$0xff] %v206
    %244 = vst [vmem:[#allocation2 + $0x30] sm:$0xff] %v210
    %245 = vst [vmem:[#allocation2 + $0x38] sm:$0xff] %v212
    %246 = vst [vmem:[#allocation2 + $0x40] sm:$0xff] %v216
    %247 = vst [vmem:[#allocation2 + $0x48] sm:$0xff] %v218
    %248 = vst [vmem:[#allocation2 + $0x50] sm:$0xff] %v222
    %249 = vst [vmem:[#allocation2 + $0x58] sm:$0xff] %v224
    %250 = vst [vmem:[#allocation2 + $0x60] sm:$0xff] %v228
    %251 = vst [vmem:[#allocation2 + $0x68] sm:$0xff] %v230
    %252 = vst [vmem:[#allocation2 + $0x70] sm:$0xff] %v234
    %253 = vst [vmem:[#allocation2 + $0x78] sm:$0xff] %v236
    %v254 = vld [vmem:[%s4] sm:$0xff]
    %v255 = vld [vmem:[%s4 + $0x8] sm:$0xff]
    %v256 = vld [vmem:[%s4 + $0x10] sm:$0xff]
    %v257 = vld [vmem:[%s4 + $0x18] sm:$0xff]
    %v258 = vld [vmem:[%s4 + $0x20] sm:$0xff]
    %v259 = vld [vmem:[%s4 + $0x28] sm:$0xff]
    %v260 = vld [vmem:[%s4 + $0x30] sm:$0xff]
    %v261 = vld [vmem:[%s4 + $0x38] sm:$0xff]
    %v262 = vld [vmem:[%s4 + $0x40] sm:$0xff]
    %v263 = vld [vmem:[%s4 + $0x48] sm:$0xff]
    %v264 = vld [vmem:[%s4 + $0x50] sm:$0xff]
    %v265 = vld [vmem:[%s4 + $0x58] sm:$0xff]
    %v266 = vld [vmem:[%s4 + $0x60] sm:$0xff]
    %v267 = vld [vmem:[%s4 + $0x68] sm:$0xff]
    %v268 = vld [vmem:[%s4 + $0x70] sm:$0xff]
    %v269 = vld [vmem:[%s4 + $0x78] sm:$0xff]
    %v270 = vld [vmem:[%s5] sm:$0x1]
    %v272 = vlaneseq
    %v273 = vshrl.u32 %v272, 7
    %v274 = vsub.s32 0, %v273
    %v275 = vrot.slane %v270, %v274
    %v277 = vld [vmem:[%s8] sm:$0xff]
    %s278 = smul.u32 0, 2
    %s279 = smul.addr %s278, 8
    %s280 = scalar_lea.vmem [#allocation2], %s279
    %v281 = vld [vmem:[%s280] sm:$0xff]
    %v282 = vld [vmem:[%s280 + $0x8] sm:$0xff]
    %vm283 = vcmask 523264
    %v285 = vsel %vm283, %v277, 0
    %v287 = vand.u32 %v255, 4294901760
    %288 = vmatprep.subr.mxu0 %v287
    %v289 = vand.u32 %v254, 4294901760
    %290 = vmatpush1.msra.mxu0 %v289
    %v291 = vand.u32 %v257, 4294901760
    %292 = vmatprep.subr.mxu0 %v291
    %v293 = vand.u32 %v256, 4294901760
    %294 = vmatpush1.msra.mxu0 %v293
    %v295 = vand.u32 %v259, 4294901760
    %296 = vmatprep.subr.mxu0 %v295
    %v297 = vand.u32 %v258, 4294901760
    %298 = vmatpush1.msra.mxu0 %v297
    %v299 = vand.u32 %v261, 4294901760
    %300 = vmatprep.subr.mxu0 %v299
    %v301 = vand.u32 %v260, 4294901760
    %302 = vmatpush1.msra.mxu0 %v301
    %v303 = vand.u32 %v263, 4294901760
    %304 = vmatprep.subr.mxu0 %v303
    %v305 = vand.u32 %v262, 4294901760
    %306 = vmatpush1.msra.mxu0 %v305
    %v307 = vand.u32 %v265, 4294901760
    %308 = vmatprep.subr.mxu0 %v307
    %v309 = vand.u32 %v264, 4294901760
    %310 = vmatpush1.msra.mxu0 %v309
    %v311 = vand.u32 %v267, 4294901760
    %312 = vmatprep.subr.mxu0 %v311
    %v313 = vand.u32 %v266, 4294901760
    %314 = vmatpush1.msra.mxu0 %v313
    %v315 = vand.u32 %v269, 4294901760
    %316 = vmatprep.subr.mxu0 %v315
    %v317 = vand.u32 %v268, 4294901760
    %318 = vmatpush1.msra.mxu0 %v317
    %319 = vmatprep.subr.mxu0 0.0
    %320 = vmatpush1.msra.mxu0 0.0
    %321 = vmatprep.subr.mxu0 0.0
    %322 = vmatpush1.msra.mxu0 0.0
    %323 = vmatprep.subr.mxu0 0.0
    %324 = vmatpush1.msra.mxu0 0.0
    %325 = vmatprep.subr.mxu0 0.0
    %326 = vmatpush1.msra.mxu0 0.0
    %327 = vmatprep.subr.mxu0 0.0
    %328 = vmatpush1.msra.mxu0 0.0
    %329 = vmatprep.subr.mxu0 0.0
    %330 = vmatpush1.msra.mxu0 0.0
    %331 = vmatprep.subr.mxu0 0.0
    %332 = vmatpush1.msra.mxu0 0.0
    %333 = vmatprep.subr.mxu0 0.0
    %334 = vmatpush1.msra.mxu0 0.0
    %335 = vmatprep.subr.mxu0 0.0
    %336 = vmatpush1.msra.mxu0 0.0
    %337 = vmatprep.subr.mxu0 0.0
    %338 = vmatpush1.msra.mxu0 0.0
    %339 = vmatprep.subr.mxu0 0.0
    %340 = vmatpush1.msra.mxu0 0.0
    %341 = vmatprep.subr.mxu0 0.0
    %342 = vmatpush1.msra.mxu0 0.0
    %343 = vmatprep.subr.mxu0 0.0
    %344 = vmatpush1.msra.mxu0 0.0
    %345 = vmatprep.subr.mxu0 0.0
    %346 = vmatpush1.msra.mxu0 0.0
    %347 = vmatprep.subr.mxu0 0.0
    %348 = vmatpush1.msra.mxu0 0.0
    %349 = vmatprep.subr.mxu0 0.0
    %350 = vmatpush1.msra.mxu0 0.0
    %351 = vmatprep.subr.mxu0 0.0
    %352 = vmatpush1.msra.mxu0 0.0
    %353 = vmatprep.subr.mxu0 0.0
    %354 = vmatpush1.msra.mxu0 0.0
    %355 = vmatprep.subr.mxu0 0.0
    %356 = vmatpush1.msra.mxu0 0.0
    %357 = vmatprep.subr.mxu0 0.0
    %358 = vmatpush1.msra.mxu0 0.0
    %359 = vmatprep.subr.mxu0 0.0
    %360 = vmatpush1.msra.mxu0 0.0
    %361 = vmatprep.subr.mxu0 0.0
    %362 = vmatpush1.msra.mxu0 0.0
    %363 = vmatprep.subr.mxu0 0.0
    %364 = vmatpush1.msra.mxu0 0.0
    %365 = vmatprep.subr.mxu0 0.0
    %366 = vmatpush1.msra.mxu0 0.0
    %367 = vmatprep.mubr.f32.mxu0 0.0
    %v368 = vand.u32 %v285, 4294901760
    %v369 = vsub.f32 %v285, %v368
    %v370 = vand.u32 %v369, 4294901760
    %v371 = vsub.f32 %v369, %v370
    %v372 = vand.u32 %v371, 4294901760
    %373 = vmatmul.mubr.f32.gmra.mrb[0].mxu0 %v372
    %v374 = vpop.f32.mrb[0].mxu0
    %v375 = vadd.f32 0.0, %v374
    %v376 = vpop.f32.mrb[0].mxu0
    %v377 = vadd.f32 0.0, %v376
    %378 = vdwg.mxu0
    %v379 = vand.u32 %v255, 4294901760
    %v380 = vsub.f32 %v255, %v379
    %v381 = vand.u32 %v380, 4294901760
    %v382 = vsub.f32 %v380, %v381
    %v383 = vand.u32 %v382, 4294901760
    %384 = vmatprep.subr.mxu0 %v383
    %v385 = vand.u32 %v254, 4294901760
    %v386 = vsub.f32 %v254, %v385
    %v387 = vand.u32 %v386, 4294901760
    %v388 = vsub.f32 %v386, %v387
    %v389 = vand.u32 %v388, 4294901760
    %390 = vmatpush1.msra.mxu0 %v389
    %v391 = vand.u32 %v257, 4294901760
    %v392 = vsub.f32 %v257, %v391
    %v393 = vand.u32 %v392, 4294901760
    %v394 = vsub.f32 %v392, %v393
    %v395 = vand.u32 %v394, 4294901760
    %396 = vmatprep.subr.mxu0 %v395
    %v397 = vand.u32 %v256, 4294901760
    %v398 = vsub.f32 %v256, %v397
    %v399 = vand.u32 %v398, 4294901760
    %v400 = vsub.f32 %v398, %v399
    %v401 = vand.u32 %v400, 4294901760
    %402 = vmatpush1.msra.mxu0 %v401
    %v403 = vand.u32 %v259, 4294901760
    %v404 = vsub.f32 %v259, %v403
    %v405 = vand.u32 %v404, 4294901760
    %v406 = vsub.f32 %v404, %v405
    %v407 = vand.u32 %v406, 4294901760
    %408 = vmatprep.subr.mxu0 %v407
    %v409 = vand.u32 %v258, 4294901760
    %v410 = vsub.f32 %v258, %v409
    %v411 = vand.u32 %v410, 4294901760
    %v412 = vsub.f32 %v410, %v411
    %v413 = vand.u32 %v412, 4294901760
    %414 = vmatpush1.msra.mxu0 %v413
    %v415 = vand.u32 %v261, 4294901760
    %v416 = vsub.f32 %v261, %v415
    %v417 = vand.u32 %v416, 4294901760
    %v418 = vsub.f32 %v416, %v417
    %v419 = vand.u32 %v418, 4294901760
    %420 = vmatprep.subr.mxu0 %v419
    %v421 = vand.u32 %v260, 4294901760
    %v422 = vsub.f32 %v260, %v421
    %v423 = vand.u32 %v422, 4294901760
    %v424 = vsub.f32 %v422, %v423
    %v425 = vand.u32 %v424, 4294901760
    %426 = vmatpush1.msra.mxu0 %v425
    %v427 = vand.u32 %v263, 4294901760
    %v428 = vsub.f32 %v263, %v427
    %v429 = vand.u32 %v428, 4294901760
    %v430 = vsub.f32 %v428, %v429
    %v431 = vand.u32 %v430, 4294901760
    %432 = vmatprep.subr.mxu0 %v431
    %v433 = vand.u32 %v262, 4294901760
    %v434 = vsub.f32 %v262, %v433
    %v435 = vand.u32 %v434, 4294901760
    %v436 = vsub.f32 %v434, %v435
    %v437 = vand.u32 %v436, 4294901760
    %438 = vmatpush1.msra.mxu0 %v437
    %v439 = vand.u32 %v265, 4294901760
    %v440 = vsub.f32 %v265, %v439
    %v441 = vand.u32 %v440, 4294901760
    %v442 = vsub.f32 %v440, %v441
    %v443 = vand.u32 %v442, 4294901760
    %444 = vmatprep.subr.mxu0 %v443
    %v445 = vand.u32 %v264, 4294901760
    %v446 = vsub.f32 %v264, %v445
    %v447 = vand.u32 %v446, 4294901760
    %v448 = vsub.f32 %v446, %v447
    %v449 = vand.u32 %v448, 4294901760
    %450 = vmatpush1.msra.mxu0 %v449
    %v451 = vand.u32 %v267, 4294901760
    %v452 = vsub.f32 %v267, %v451
    %v453 = vand.u32 %v452, 4294901760
    %v454 = vsub.f32 %v452, %v453
    %v455 = vand.u32 %v454, 4294901760
    %456 = vmatprep.subr.mxu0 %v455
    %v457 = vand.u32 %v266, 4294901760
    %v458 = vsub.f32 %v266, %v457
    %v459 = vand.u32 %v458, 4294901760
    %v460 = vsub.f32 %v458, %v459
    %v461 = vand.u32 %v460, 4294901760
    %462 = vmatpush1.msra.mxu0 %v461
    %v463 = vand.u32 %v269, 4294901760
    %v464 = vsub.f32 %v269, %v463
    %v465 = vand.u32 %v464, 4294901760
    %v466 = vsub.f32 %v464, %v465
    %v467 = vand.u32 %v466, 4294901760
    %468 = vmatprep.subr.mxu0 %v467
    %v469 = vand.u32 %v268, 4294901760
    %v470 = vsub.f32 %v268, %v469
    %v471 = vand.u32 %v470, 4294901760
    %v472 = vsub.f32 %v470, %v471
    %v473 = vand.u32 %v472, 4294901760
    %474 = vmatpush1.msra.mxu0 %v473
    %475 = vmatprep.subr.mxu0 0.0
    %476 = vmatpush1.msra.mxu0 0.0
    %477 = vmatprep.subr.mxu0 0.0
    %478 = vmatpush1.msra.mxu0 0.0
    %479 = vmatprep.subr.mxu0 0.0
    %480 = vmatpush1.msra.mxu0 0.0
    %481 = vmatprep.subr.mxu0 0.0
    %482 = vmatpush1.msra.mxu0 0.0
    %483 = vmatprep.subr.mxu0 0.0
    %484 = vmatpush1.msra.mxu0 0.0
    %485 = vmatprep.subr.mxu0 0.0
    %486 = vmatpush1.msra.mxu0 0.0
    %487 = vmatprep.subr.mxu0 0.0
    %488 = vmatpush1.msra.mxu0 0.0
    %489 = vmatprep.subr.mxu0 0.0
    %490 = vmatpush1.msra.mxu0 0.0
    %491 = vmatprep.subr.mxu0 0.0
    %492 = vmatpush1.msra.mxu0 0.0
    %493 = vmatprep.subr.mxu0 0.0
    %494 = vmatpush1.msra.mxu0 0.0
    %495 = vmatprep.subr.mxu0 0.0
    %496 = vmatpush1.msra.mxu0 0.0
    %497 = vmatprep.subr.mxu0 0.0
    %498 = vmatpush1.msra.mxu0 0.0
    %499 = vmatprep.subr.mxu0 0.0
    %500 = vmatpush1.msra.mxu0 0.0
    %501 = vmatprep.subr.mxu0 0.0
    %502 = vmatpush1.msra.mxu0 0.0
    %503 = vmatprep.subr.mxu0 0.0
    %504 = vmatpush1.msra.mxu0 0.0
    %505 = vmatprep.subr.mxu0 0.0
    %506 = vmatpush1.msra.mxu0 0.0
    %507 = vmatprep.subr.mxu0 0.0
    %508 = vmatpush1.msra.mxu0 0.0
    %509 = vmatprep.subr.mxu0 0.0
    %510 = vmatpush1.msra.mxu0 0.0
    %511 = vmatprep.subr.mxu0 0.0
    %512 = vmatpush1.msra.mxu0 0.0
    %513 = vmatprep.subr.mxu0 0.0
    %514 = vmatpush1.msra.mxu0 0.0
    %515 = vmatprep.subr.mxu0 0.0
    %516 = vmatpush1.msra.mxu0 0.0
    %517 = vmatprep.subr.mxu0 0.0
    %518 = vmatpush1.msra.mxu0 0.0
    %519 = vmatprep.subr.mxu0 0.0
    %520 = vmatpush1.msra.mxu0 0.0
    %521 = vmatprep.subr.mxu0 0.0
    %522 = vmatpush1.msra.mxu0 0.0
    %523 = vmatprep.mubr.f32.mxu0 0.0
    %v524 = vand.u32 %v285, 4294901760
    %525 = vmatmul.mubr.f32.gmra.mrb[0].mxu0 %v524
    %v526 = vpop.f32.mrb[0].mxu0
    %v527 = vadd.f32 %v375, %v526
    %v528 = vpop.f32.mrb[0].mxu0
    %v529 = vadd.f32 %v377, %v528
    %530 = vdwg.mxu0
    %v531 = vand.u32 %v255, 4294901760
    %v532 = vsub.f32 %v255, %v531
    %533 = vmatprep.subr.mxu0 %v532
    %v534 = vand.u32 %v254, 4294901760
    %v535 = vsub.f32 %v254, %v534
    %536 = vmatpush1.msra.mxu0 %v535
    %v537 = vand.u32 %v257, 4294901760
    %v538 = vsub.f32 %v257, %v537
    %539 = vmatprep.subr.mxu0 %v538
    %v540 = vand.u32 %v256, 4294901760
    %v541 = vsub.f32 %v256, %v540
    %542 = vmatpush1.msra.mxu0 %v541
    %v543 = vand.u32 %v259, 4294901760
    %v544 = vsub.f32 %v259, %v543
    %545 = vmatprep.subr.mxu0 %v544
    %v546 = vand.u32 %v258, 4294901760
    %v547 = vsub.f32 %v258, %v546
    %548 = vmatpush1.msra.mxu0 %v547
    %v549 = vand.u32 %v261, 4294901760
    %v550 = vsub.f32 %v261, %v549
    %551 = vmatprep.subr.mxu0 %v550
    %v552 = vand.u32 %v260, 4294901760
    %v553 = vsub.f32 %v260, %v552
    %554 = vmatpush1.msra.mxu0 %v553
    %v555 = vand.u32 %v263, 4294901760
    %v556 = vsub.f32 %v263, %v555
    %557 = vmatprep.subr.mxu0 %v556
    %v558 = vand.u32 %v262, 4294901760
    %v559 = vsub.f32 %v262, %v558
    %560 = vmatpush1.msra.mxu0 %v559
    %v561 = vand.u32 %v265, 4294901760
    %v562 = vsub.f32 %v265, %v561
    %563 = vmatprep.subr.mxu0 %v562
    %v564 = vand.u32 %v264, 4294901760
    %v565 = vsub.f32 %v264, %v564
    %566 = vmatpush1.msra.mxu0 %v565
    %v567 = vand.u32 %v267, 4294901760
    %v568 = vsub.f32 %v267, %v567
    %569 = vmatprep.subr.mxu0 %v568
    %v570 = vand.u32 %v266, 4294901760
    %v571 = vsub.f32 %v266, %v570
    %572 = vmatpush1.msra.mxu0 %v571
    %v573 = vand.u32 %v269, 4294901760
    %v574 = vsub.f32 %v269, %v573
    %575 = vmatprep.subr.mxu0 %v574
    %v576 = vand.u32 %v268, 4294901760
    %v577 = vsub.f32 %v268, %v576
    %578 = vmatpush1.msra.mxu0 %v577
    %579 = vmatprep.subr.mxu0 0.0
    %580 = vmatpush1.msra.mxu0 0.0
    %581 = vmatprep.subr.mxu0 0.0
    %582 = vmatpush1.msra.mxu0 0.0
    %583 = vmatprep.subr.mxu0 0.0
    %584 = vmatpush1.msra.mxu0 0.0
    %585 = vmatprep.subr.mxu0 0.0
    %586 = vmatpush1.msra.mxu0 0.0
    %587 = vmatprep.subr.mxu0 0.0
    %588 = vmatpush1.msra.mxu0 0.0
    %589 = vmatprep.subr.mxu0 0.0
    %590 = vmatpush1.msra.mxu0 0.0
    %591 = vmatprep.subr.mxu0 0.0
    %592 = vmatpush1.msra.mxu0 0.0
    %593 = vmatprep.subr.mxu0 0.0
    %594 = vmatpush1.msra.mxu0 0.0
    %595 = vmatprep.subr.mxu0 0.0
    %596 = vmatpush1.msra.mxu0 0.0
    %597 = vmatprep.subr.mxu0 0.0
    %598 = vmatpush1.msra.mxu0 0.0
    %599 = vmatprep.subr.mxu0 0.0
    %600 = vmatpush1.msra.mxu0 0.0
    %601 = vmatprep.subr.mxu0 0.0
    %602 = vmatpush1.msra.mxu0 0.0
    %603 = vmatprep.subr.mxu0 0.0
    %604 = vmatpush1.msra.mxu0 0.0
    %605 = vmatprep.subr.mxu0 0.0
    %606 = vmatpush1.msra.mxu0 0.0
    %607 = vmatprep.subr.mxu0 0.0
    %608 = vmatpush1.msra.mxu0 0.0
    %609 = vmatprep.subr.mxu0 0.0
    %610 = vmatpush1.msra.mxu0 0.0
    %611 = vmatprep.subr.mxu0 0.0
    %612 = vmatpush1.msra.mxu0 0.0
    %613 = vmatprep.subr.mxu0 0.0
    %614 = vmatpush1.msra.mxu0 0.0
    %615 = vmatprep.subr.mxu0 0.0
    %616 = vmatpush1.msra.mxu0 0.0
    %617 = vmatprep.subr.mxu0 0.0
    %618 = vmatpush1.msra.mxu0 0.0
    %619 = vmatprep.subr.mxu0 0.0
    %620 = vmatpush1.msra.mxu0 0.0
    %621 = vmatprep.subr.mxu0 0.0
    %622 = vmatpush1.msra.mxu0 0.0
    %623 = vmatprep.subr.mxu0 0.0
    %624 = vmatpush1.msra.mxu0 0.0
    %625 = vmatprep.subr.mxu0 0.0
    %626 = vmatpush1.msra.mxu0 0.0
    %627 = vmatprep.mubr.f32.mxu0 0.0
    %v628 = vand.u32 %v285, 4294901760
    %v629 = vsub.f32 %v285, %v628
    %630 = vmatmul.mubr.f32.gmra.mrb[0].mxu0 %v629
    %v631 = vpop.f32.mrb[0].mxu0
    %v632 = vadd.f32 %v527, %v631
    %v633 = vpop.f32.mrb[0].mxu0
    %v634 = vadd.f32 %v529, %v633
    %635 = vdwg.mxu0
    %v636 = vand.u32 %v255, 4294901760
    %637 = vmatprep.subr.mxu0 %v636
    %v638 = vand.u32 %v254, 4294901760
    %639 = vmatpush1.msra.mxu0 %v638
    %v640 = vand.u32 %v257, 4294901760
    %641 = vmatprep.subr.mxu0 %v640
    %v642 = vand.u32 %v256, 4294901760
    %643 = vmatpush1.msra.mxu0 %v642
    %v644 = vand.u32 %v259, 4294901760
    %645 = vmatprep.subr.mxu0 %v644
    %v646 = vand.u32 %v258, 4294901760
    %647 = vmatpush1.msra.mxu0 %v646
    %v648 = vand.u32 %v261, 4294901760
    %649 = vmatprep.subr.mxu0 %v648
    %v650 = vand.u32 %v260, 4294901760
    %651 = vmatpush1.msra.mxu0 %v650
    %v652 = vand.u32 %v263, 4294901760
    %653 = vmatprep.subr.mxu0 %v652
    %v654 = vand.u32 %v262, 4294901760
    %655 = vmatpush1.msra.mxu0 %v654
    %v656 = vand.u32 %v265, 4294901760
    %657 = vmatprep.subr.mxu0 %v656
    %v658 = vand.u32 %v264, 4294901760
    %659 = vmatpush1.msra.mxu0 %v658
    %v660 = vand.u32 %v267, 4294901760
    %661 = vmatprep.subr.mxu0 %v660
    %v662 = vand.u32 %v266, 4294901760
    %663 = vmatpush1.msra.mxu0 %v662
    %v664 = vand.u32 %v269, 4294901760
    %665 = vmatprep.subr.mxu0 %v664
    %v666 = vand.u32 %v268, 4294901760
    %667 = vmatpush1.msra.mxu0 %v666
    %668 = vmatprep.subr.mxu0 0.0
    %669 = vmatpush1.msra.mxu0 0.0
    %670 = vmatprep.subr.mxu0 0.0
    %671 = vmatpush1.msra.mxu0 0.0
    %672 = vmatprep.subr.mxu0 0.0
    %673 = vmatpush1.msra.mxu0 0.0
    %674 = vmatprep.subr.mxu0 0.0
    %675 = vmatpush1.msra.mxu0 0.0
    %676 = vmatprep.subr.mxu0 0.0
    %677 = vmatpush1.msra.mxu0 0.0
    %678 = vmatprep.subr.mxu0 0.0
    %679 = vmatpush1.msra.mxu0 0.0
    %680 = vmatprep.subr.mxu0 0.0
    %681 = vmatpush1.msra.mxu0 0.0
    %682 = vmatprep.subr.mxu0 0.0
    %683 = vmatpush1.msra.mxu0 0.0
    %684 = vmatprep.subr.mxu0 0.0
    %685 = vmatpush1.msra.mxu0 0.0
    %686 = vmatprep.subr.mxu0 0.0
    %687 = vmatpush1.msra.mxu0 0.0
    %688 = vmatprep.subr.mxu0 0.0
    %689 = vmatpush1.msra.mxu0 0.0
    %690 = vmatprep.subr.mxu0 0.0
    %691 = vmatpush1.msra.mxu0 0.0
    %692 = vmatprep.subr.mxu0 0.0
    %693 = vmatpush1.msra.mxu0 0.0
    %694 = vmatprep.subr.mxu0 0.0
    %695 = vmatpush1.msra.mxu0 0.0
    %696 = vmatprep.subr.mxu0 0.0
    %697 = vmatpush1.msra.mxu0 0.0
    %698 = vmatprep.subr.mxu0 0.0
    %699 = vmatpush1.msra.mxu0 0.0
    %700 = vmatprep.subr.mxu0 0.0
    %701 = vmatpush1.msra.mxu0 0.0
    %702 = vmatprep.subr.mxu0 0.0
    %703 = vmatpush1.msra.mxu0 0.0
    %704 = vmatprep.subr.mxu0 0.0
    %705 = vmatpush1.msra.mxu0 0.0
    %706 = vmatprep.subr.mxu0 0.0
    %707 = vmatpush1.msra.mxu0 0.0
    %708 = vmatprep.subr.mxu0 0.0
    %709 = vmatpush1.msra.mxu0 0.0
    %710 = vmatprep.subr.mxu0 0.0
    %711 = vmatpush1.msra.mxu0 0.0
    %712 = vmatprep.subr.mxu0 0.0
    %713 = vmatpush1.msra.mxu0 0.0
    %714 = vmatprep.subr.mxu0 0.0
    %715 = vmatpush1.msra.mxu0 0.0
    %716 = vmatprep.mubr.f32.mxu0 0.0
    %v717 = vand.u32 %v285, 4294901760
    %v718 = vsub.f32 %v285, %v717
    %v719 = vand.u32 %v718, 4294901760
    %720 = vmatmul.mubr.f32.gmra.mrb[0].mxu0 %v719
    %v721 = vpop.f32.mrb[0].mxu0
    %v722 = vadd.f32 %v632, %v721
    %v723 = vpop.f32.mrb[0].mxu0
    %v724 = vadd.f32 %v634, %v723
    %725 = vdwg.mxu0
    %v726 = vand.u32 %v255, 4294901760
    %v727 = vsub.f32 %v255, %v726
    %v728 = vand.u32 %v727, 4294901760
    %729 = vmatprep.subr.mxu0 %v728
    %v730 = vand.u32 %v254, 4294901760
    %v731 = vsub.f32 %v254, %v730
    %v732 = vand.u32 %v731, 4294901760
    %733 = vmatpush1.msra.mxu0 %v732
    %v734 = vand.u32 %v257, 4294901760
    %v735 = vsub.f32 %v257, %v734
    %v736 = vand.u32 %v735, 4294901760
    %737 = vmatprep.subr.mxu0 %v736
    %v738 = vand.u32 %v256, 4294901760
    %v739 = vsub.f32 %v256, %v738
    %v740 = vand.u32 %v739, 4294901760
    %741 = vmatpush1.msra.mxu0 %v740
    %v742 = vand.u32 %v259, 4294901760
    %v743 = vsub.f32 %v259, %v742
    %v744 = vand.u32 %v743, 4294901760
    %745 = vmatprep.subr.mxu0 %v744
    %v746 = vand.u32 %v258, 4294901760
    %v747 = vsub.f32 %v258, %v746
    %v748 = vand.u32 %v747, 4294901760
    %749 = vmatpush1.msra.mxu0 %v748
    %v750 = vand.u32 %v261, 4294901760
    %v751 = vsub.f32 %v261, %v750
    %v752 = vand.u32 %v751, 4294901760
    %753 = vmatprep.subr.mxu0 %v752
    %v754 = vand.u32 %v260, 4294901760
    %v755 = vsub.f32 %v260, %v754
    %v756 = vand.u32 %v755, 4294901760
    %757 = vmatpush1.msra.mxu0 %v756
    %v758 = vand.u32 %v263, 4294901760
    %v759 = vsub.f32 %v263, %v758
    %v760 = vand.u32 %v759, 4294901760
    %761 = vmatprep.subr.mxu0 %v760
    %v762 = vand.u32 %v262, 4294901760
    %v763 = vsub.f32 %v262, %v762
    %v764 = vand.u32 %v763, 4294901760
    %765 = vmatpush1.msra.mxu0 %v764
    %v766 = vand.u32 %v265, 4294901760
    %v767 = vsub.f32 %v265, %v766
    %v768 = vand.u32 %v767, 4294901760
    %769 = vmatprep.subr.mxu0 %v768
    %v770 = vand.u32 %v264, 4294901760
    %v771 = vsub.f32 %v264, %v770
    %v772 = vand.u32 %v771, 4294901760
    %773 = vmatpush1.msra.mxu0 %v772
    %v774 = vand.u32 %v267, 4294901760
    %v775 = vsub.f32 %v267, %v774
    %v776 = vand.u32 %v775, 4294901760
    %777 = vmatprep.subr.mxu0 %v776
    %v778 = vand.u32 %v266, 4294901760
    %v779 = vsub.f32 %v266, %v778
    %v780 = vand.u32 %v779, 4294901760
    %781 = vmatpush1.msra.mxu0 %v780
    %v782 = vand.u32 %v269, 4294901760
    %v783 = vsub.f32 %v269, %v782
    %v784 = vand.u32 %v783, 4294901760
    %785 = vmatprep.subr.mxu0 %v784
    %v786 = vand.u32 %v268, 4294901760
    %v787 = vsub.f32 %v268, %v786
    %v788 = vand.u32 %v787, 4294901760
    %789 = vmatpush1.msra.mxu0 %v788
    %790 = vmatprep.subr.mxu0 0.0
    %791 = vmatpush1.msra.mxu0 0.0
    %792 = vmatprep.subr.mxu0 0.0
    %793 = vmatpush1.msra.mxu0 0.0
    %794 = vmatprep.subr.mxu0 0.0
    %795 = vmatpush1.msra.mxu0 0.0
    %796 = vmatprep.subr.mxu0 0.0
    %797 = vmatpush1.msra.mxu0 0.0
    %798 = vmatprep.subr.mxu0 0.0
    %799 = vmatpush1.msra.mxu0 0.0
    %800 = vmatprep.subr.mxu0 0.0
    %801 = vmatpush1.msra.mxu0 0.0
    %802 = vmatprep.subr.mxu0 0.0
    %803 = vmatpush1.msra.mxu0 0.0
    %804 = vmatprep.subr.mxu0 0.0
    %805 = vmatpush1.msra.mxu0 0.0
    %806 = vmatprep.subr.mxu0 0.0
    %807 = vmatpush1.msra.mxu0 0.0
    %808 = vmatprep.subr.mxu0 0.0
    %809 = vmatpush1.msra.mxu0 0.0
    %810 = vmatprep.subr.mxu0 0.0
    %811 = vmatpush1.msra.mxu0 0.0
    %812 = vmatprep.subr.mxu0 0.0
    %813 = vmatpush1.msra.mxu0 0.0
    %814 = vmatprep.subr.mxu0 0.0
    %815 = vmatpush1.msra.mxu0 0.0
    %816 = vmatprep.subr.mxu0 0.0
    %817 = vmatpush1.msra.mxu0 0.0
    %818 = vmatprep.subr.mxu0 0.0
    %819 = vmatpush1.msra.mxu0 0.0
    %820 = vmatprep.subr.mxu0 0.0
    %821 = vmatpush1.msra.mxu0 0.0
    %822 = vmatprep.subr.mxu0 0.0
    %823 = vmatpush1.msra.mxu0 0.0
    %824 = vmatprep.subr.mxu0 0.0
    %825 = vmatpush1.msra.mxu0 0.0
    %826 = vmatprep.subr.mxu0 0.0
    %827 = vmatpush1.msra.mxu0 0.0
    %828 = vmatprep.subr.mxu0 0.0
    %829 = vmatpush1.msra.mxu0 0.0
    %830 = vmatprep.subr.mxu0 0.0
    %831 = vmatpush1.msra.mxu0 0.0
    %832 = vmatprep.subr.mxu0 0.0
    %833 = vmatpush1.msra.mxu0 0.0
    %834 = vmatprep.subr.mxu0 0.0
    %835 = vmatpush1.msra.mxu0 0.0
    %836 = vmatprep.subr.mxu0 0.0
    %837 = vmatpush1.msra.mxu0 0.0
    %838 = vmatprep.mubr.f32.mxu0 0.0
    %v839 = vand.u32 %v285, 4294901760
    %840 = vmatmul.mubr.f32.gmra.mrb[0].mxu0 %v839
    %v841 = vpop.f32.mrb[0].mxu0
    %v842 = vadd.f32 %v722, %v841
    %v843 = vpop.f32.mrb[0].mxu0
    %v844 = vadd.f32 %v724, %v843
    %845 = vdwg.mxu0
    %v846 = vand.u32 %v255, 4294901760
    %847 = vmatprep.subr.mxu0 %v846
    %v848 = vand.u32 %v254, 4294901760
    %849 = vmatpush1.msra.mxu0 %v848
    %v850 = vand.u32 %v257, 4294901760
    %851 = vmatprep.subr.mxu0 %v850
    %v852 = vand.u32 %v256, 4294901760
    %853 = vmatpush1.msra.mxu0 %v852
    %v854 = vand.u32 %v259, 4294901760
    %855 = vmatprep.subr.mxu0 %v854
    %v856 = vand.u32 %v258, 4294901760
    %857 = vmatpush1.msra.mxu0 %v856
    %v858 = vand.u32 %v261, 4294901760
    %859 = vmatprep.subr.mxu0 %v858
    %v860 = vand.u32 %v260, 4294901760
    %861 = vmatpush1.msra.mxu0 %v860
    %v862 = vand.u32 %v263, 4294901760
    %863 = vmatprep.subr.mxu0 %v862
    %v864 = vand.u32 %v262, 4294901760
    %865 = vmatpush1.msra.mxu0 %v864
    %v866 = vand.u32 %v265, 4294901760
    %867 = vmatprep.subr.mxu0 %v866
    %v868 = vand.u32 %v264, 4294901760
    %869 = vmatpush1.msra.mxu0 %v868
    %v870 = vand.u32 %v267, 4294901760
    %871 = vmatprep.subr.mxu0 %v870
    %v872 = vand.u32 %v266, 4294901760
    %873 = vmatpush1.msra.mxu0 %v872
    %v874 = vand.u32 %v269, 4294901760
    %875 = vmatprep.subr.mxu0 %v874
    %v876 = vand.u32 %v268, 4294901760
    %877 = vmatpush1.msra.mxu0 %v876
    %878 = vmatprep.subr.mxu0 0.0
    %879 = vmatpush1.msra.mxu0 0.0
    %880 = vmatprep.subr.mxu0 0.0
    %881 = vmatpush1.msra.mxu0 0.0
    %882 = vmatprep.subr.mxu0 0.0
    %883 = vmatpush1.msra.mxu0 0.0
    %884 = vmatprep.subr.mxu0 0.0
    %885 = vmatpush1.msra.mxu0 0.0
    %886 = vmatprep.subr.mxu0 0.0
    %887 = vmatpush1.msra.mxu0 0.0
    %888 = vmatprep.subr.mxu0 0.0
    %889 = vmatpush1.msra.mxu0 0.0
    %890 = vmatprep.subr.mxu0 0.0
    %891 = vmatpush1.msra.mxu0 0.0
    %892 = vmatprep.subr.mxu0 0.0
    %893 = vmatpush1.msra.mxu0 0.0
    %894 = vmatprep.subr.mxu0 0.0
    %895 = vmatpush1.msra.mxu0 0.0
    %896 = vmatprep.subr.mxu0 0.0
    %897 = vmatpush1.msra.mxu0 0.0
    %898 = vmatprep.subr.mxu0 0.0
    %899 = vmatpush1.msra.mxu0 0.0
    %900 = vmatprep.subr.mxu0 0.0
    %901 = vmatpush1.msra.mxu0 0.0
    %902 = vmatprep.subr.mxu0 0.0
    %903 = vmatpush1.msra.mxu0 0.0
    %904 = vmatprep.subr.mxu0 0.0
    %905 = vmatpush1.msra.mxu0 0.0
    %906 = vmatprep.subr.mxu0 0.0
    %907 = vmatpush1.msra.mxu0 0.0
    %908 = vmatprep.subr.mxu0 0.0
    %909 = vmatpush1.msra.mxu0 0.0
    %910 = vmatprep.subr.mxu0 0.0
    %911 = vmatpush1.msra.mxu0 0.0
    %912 = vmatprep.subr.mxu0 0.0
    %913 = vmatpush1.msra.mxu0 0.0
    %914 = vmatprep.subr.mxu0 0.0
    %915 = vmatpush1.msra.mxu0 0.0
    %916 = vmatprep.subr.mxu0 0.0
    %917 = vmatpush1.msra.mxu0 0.0
    %918 = vmatprep.subr.mxu0 0.0
    %919 = vmatpush1.msra.mxu0 0.0
    %920 = vmatprep.subr.mxu0 0.0
    %921 = vmatpush1.msra.mxu0 0.0
    %922 = vmatprep.subr.mxu0 0.0
    %923 = vmatpush1.msra.mxu0 0.0
    %924 = vmatprep.subr.mxu0 0.0
    %925 = vmatpush1.msra.mxu0 0.0
    %926 = vmatprep.mubr.f32.mxu0 0.0
    %v927 = vand.u32 %v285, 4294901760
    %928 = vmatmul.mubr.f32.gmra.mrb[0].mxu0 %v927
    %v929 = vpop.f32.mrb[0].mxu0
    %v930 = vadd.f32 %v842, %v929
    %v931 = vpop.f32.mrb[0].mxu0
    %v932 = vadd.f32 %v844, %v931
    %933 = vdwg.mxu0
    %v934 = vadd.f32 %v281, %v930
    %v935 = vxor.u32 %v934, 2147483648
    %v936 = vmul.f32 %v935, 1.442695
    %v937 = vpow.pop %v936
    %v938 = vadd.f32 %v937, 1.0
    %v939 = vrcp.pop %v938
    %v940 = vmul.f32 1.0, %v939
    %v941 = vadd.f32 %v932, %v275
    %v942 = vmul.f32 %v940, %v941
    %v943 = vadd.f32 %v282, %v942
    %v944 = vtanh.pop %v943
    %v945 = vsub.f32 1.0, %v940
    %947 = vrot.lane.b32.xlu0 %v944, 64
    %v948 = vpop.permute.xlu0 %947
    %v950 = vmul.f32 %v945, %v948
    %951 = vrot.lane.b32.xlu0 %v277, 64
    %v952 = vpop.permute.xlu0 %951
    %v954 = vmul.f32 %v940, %v952
    %v955 = vadd.f32 %v950, %v954
    %957 = vrot.lane.b32.xlu0 %v955, 64
    %v958 = vpop.permute.xlu0 %957
    %960 = vst.msk [vmem:[#allocation3] sm:$0xff] %vm283, %v958
    %s961 = smul.u32 1, 2
    %s962 = smul.addr %s961, 8
    %s963 = scalar_lea.vmem [#allocation2], %s962
    %v964 = vld [vmem:[%s963] sm:$0xff]
    %v965 = vld [vmem:[%s963 + $0x8] sm:$0xff]
    %v966 = vsel %vm283, %v958, 0
    %v968 = vand.u32 %v255, 4294901760
    %969 = vmatprep.subr.mxu0 %v968
    %v970 = vand.u32 %v254, 4294901760
    %971 = vmatpush1.msra.mxu0 %v970
    %v972 = vand.u32 %v257, 4294901760
    %973 = vmatprep.subr.mxu0 %v972
    %v974 = vand.u32 %v256, 4294901760
    %975 = vmatpush1.msra.mxu0 %v974
    %v976 = vand.u32 %v259, 4294901760
    %977 = vmatprep.subr.mxu0 %v976
    %v978 = vand.u32 %v258, 4294901760
    %979 = vmatpush1.msra.mxu0 %v978
    %v980 = vand.u32 %v261, 4294901760
    %981 = vmatprep.subr.mxu0 %v980
    %v982 = vand.u32 %v260, 4294901760
    %983 = vmatpush1.msra.mxu0 %v982
    %v984 = vand.u32 %v263, 4294901760
    %985 = vmatprep.subr.mxu0 %v984
    %v986 = vand.u32 %v262, 4294901760
    %987 = vmatpush1.msra.mxu0 %v986
    %v988 = vand.u32 %v265, 4294901760
    %989 = vmatprep.subr.mxu0 %v988
    %v990 = vand.u32 %v264, 4294901760
    %991 = vmatpush1.msra.mxu0 %v990
    %v992 = vand.u32 %v267, 4294901760
    %993 = vmatprep.subr.mxu0 %v992
    %v994 = vand.u32 %v266, 4294901760
    %995 = vmatpush1.msra.mxu0 %v994
    %v996 = vand.u32 %v269, 4294901760
    %997 = vmatprep.subr.mxu0 %v996
    %v998 = vand.u32 %v268, 4294901760
    %999 = vmatpush1.msra.mxu0 %v998
    %1000 = vmatprep.subr.mxu0 0.0
    %1001 = vmatpush1.msra.mxu0 0.0
    %1002 = vmatprep.subr.mxu0 0.0
    %1003 = vmatpush1.msra.mxu0 0.0
    %1004 = vmatprep.subr.mxu0 0.0
    %1005 = vmatpush1.msra.mxu0 0.0
    %1006 = vmatprep.subr.mxu0 0.0
    %1007 = vmatpush1.msra.mxu0 0.0
    %1008 = vmatprep.subr.mxu0 0.0
    %1009 = vmatpush1.msra.mxu0 0.0
    %1010 = vmatprep.subr.mxu0 0.0
    %1011 = vmatpush1.msra.mxu0 0.0
    %1012 = vmatprep.subr.mxu0 0.0
    %1013 = vmatpush1.msra.mxu0 0.0
    %1014 = vmatprep.subr.mxu0 0.0
    %1015 = vmatpush1.msra.mxu0 0.0
    %1016 = vmatprep.subr.mxu0 0.0
    %1017 = vmatpush1.msra.mxu0 0.0
    %1018 = vmatprep.subr.mxu0 0.0
    %1019 = vmatpush1.msra.mxu0 0.0
    %1020 = vmatprep.subr.mxu0 0.0
    %1021 = vmatpush1.msra.mxu0 0.0
    %1022 = vmatprep.subr.mxu0 0.0
    %1023 = vmatpush1.msra.mxu0 0.0
    %1024 = vmatprep.subr.mxu0 0.0
    %1025 = vmatpush1.msra.mxu0 0.0
    %1026 = vmatprep.subr.mxu0 0.0
    %1027 = vmatpush1.msra.mxu0 0.0
    %1028 = vmatprep.subr.mxu0 0.0
    %1029 = vmatpush1.msra.mxu0 0.0
    %1030 = vmatprep.subr.mxu0 0.0
    %1031 = vmatpush1.msra.mxu0 0.0
    %1032 = vmatprep.subr.mxu0 0.0
    %1033 = vmatpush1.msra.mxu0 0.0
    %1034 = vmatprep.subr.mxu0 0.0
    %1035 = vmatpush1.msra.mxu0 0.0
    %1036 = vmatprep.subr.mxu0 0.0
    %1037 = vmatpush1.msra.mxu0 0.0
    %1038 = vmatprep.subr.mxu0 0.0
    %1039 = vmatpush1.msra.mxu0 0.0
    %1040 = vmatprep.subr.mxu0 0.0
    %1041 = vmatpush1.msra.mxu0 0.0
    %1042 = vmatprep.subr.mxu0 0.0
    %1043 = vmatpush1.msra.mxu0 0.0
    %1044 = vmatprep.subr.mxu0 0.0
    %1045 = vmatpush1.msra.mxu0 0.0
    %1046 = vmatprep.subr.mxu0 0.0
    %1047 = vmatpush1.msra.mxu0 0.0
    %1048 = vmatprep.mubr.f32.mxu0 0.0
    %v1049 = vand.u32 %v966, 4294901760
    %v1050 = vsub.f32 %v966, %v1049
    %v1051 = vand.u32 %v1050, 4294901760
    %v1052 = vsub.f32 %v1050, %v1051
    %v1053 = vand.u32 %v1052, 4294901760
    %1054 = vmatmul.mubr.f32.gmra.mrb[0].mxu0 %v1053
    %v1055 = vpop.f32.mrb[0].mxu0
    %v1056 = vadd.f32 0.0, %v1055
    %v1057 = vpop.f32.mrb[0].mxu0
    %v1058 = vadd.f32 0.0, %v1057
    %1059 = vdwg.mxu0
    %v1060 = vand.u32 %v255, 4294901760
    %v1061 = vsub.f32 %v255, %v1060
    %v1062 = vand.u32 %v1061, 4294901760
    %v1063 = vsub.f32 %v1061, %v1062
    %v1064 = vand.u32 %v1063, 4294901760
    %1065 = vmatprep.subr.mxu0 %v1064
    %v1066 = vand.u32 %v254, 4294901760
    %v1067 = vsub.f32 %v254, %v1066
    %v1068 = vand.u32 %v1067, 4294901760
    %v1069 = vsub.f32 %v1067, %v1068
    %v1070 = vand.u32 %v1069, 4294901760
    %1071 = vmatpush1.msra.mxu0 %v1070
    %v1072 = vand.u32 %v257, 4294901760
    %v1073 = vsub.f32 %v257, %v1072
    %v1074 = vand.u32 %v1073, 4294901760
    %v1075 = vsub.f32 %v1073, %v1074
    %v1076 = vand.u32 %v1075, 4294901760
    %1077 = vmatprep.subr.mxu0 %v1076
    %v1078 = vand.u32 %v256, 4294901760
    %v1079 = vsub.f32 %v256, %v1078
    %v1080 = vand.u32 %v1079, 4294901760
    %v1081 = vsub.f32 %v1079, %v1080
    %v1082 = vand.u32 %v1081, 4294901760
    %1083 = vmatpush1.msra.mxu0 %v1082
    %v1084 = vand.u32 %v259, 4294901760
    %v1085 = vsub.f32 %v259, %v1084
    %v1086 = vand.u32 %v1085, 4294901760
    %v1087 = vsub.f32 %v1085, %v1086
    %v1088 = vand.u32 %v1087, 4294901760
    %1089 = vmatprep.subr.mxu0 %v1088
    %v1090 = vand.u32 %v258, 4294901760
    %v1091 = vsub.f32 %v258, %v1090
    %v1092 = vand.u32 %v1091, 4294901760
    %v1093 = vsub.f32 %v1091, %v1092
    %v1094 = vand.u32 %v1093, 4294901760
    %1095 = vmatpush1.msra.mxu0 %v1094
    %v1096 = vand.u32 %v261, 4294901760
    %v1097 = vsub.f32 %v261, %v1096
    %v1098 = vand.u32 %v1097, 4294901760
    %v1099 = vsub.f32 %v1097, %v1098
    %v1100 = vand.u32 %v1099, 4294901760
    %1101 = vmatprep.subr.mxu0 %v1100
    %v1102 = vand.u32 %v260, 4294901760
    %v1103 = vsub.f32 %v260, %v1102
    %v1104 = vand.u32 %v1103, 4294901760
    %v1105 = vsub.f32 %v1103, %v1104
    %v1106 = vand.u32 %v1105, 4294901760
    %1107 = vmatpush1.msra.mxu0 %v1106
    %v1108 = vand.u32 %v263, 4294901760
    %v1109 = vsub.f32 %v263, %v1108
    %v1110 = vand.u32 %v1109, 4294901760
    %v1111 = vsub.f32 %v1109, %v1110
    %v1112 = vand.u32 %v1111, 4294901760
    %1113 = vmatprep.subr.mxu0 %v1112
    %v1114 = vand.u32 %v262, 4294901760
    %v1115 = vsub.f32 %v262, %v1114
    %v1116 = vand.u32 %v1115, 4294901760
    %v1117 = vsub.f32 %v1115, %v1116
    %v1118 = vand.u32 %v1117, 4294901760
    %1119 = vmatpush1.msra.mxu0 %v1118
    %v1120 = vand.u32 %v265, 4294901760
    %v1121 = vsub.f32 %v265, %v1120
    %v1122 = vand.u32 %v1121, 4294901760
    %v1123 = vsub.f32 %v1121, %v1122
    %v1124 = vand.u32 %v1123, 4294901760
    %1125 = vmatprep.subr.mxu0 %v1124
    %v1126 = vand.u32 %v264, 4294901760
    %v1127 = vsub.f32 %v264, %v1126
    %v1128 = vand.u32 %v1127, 4294901760
    %v1129 = vsub.f32 %v1127, %v1128
    %v1130 = vand.u32 %v1129, 4294901760
    %1131 = vmatpush1.msra.mxu0 %v1130
    %v1132 = vand.u32 %v267, 4294901760
    %v1133 = vsub.f32 %v267, %v1132
    %v1134 = vand.u32 %v1133, 4294901760
    %v1135 = vsub.f32 %v1133, %v1134
    %v1136 = vand.u32 %v1135, 4294901760
    %1137 = vmatprep.subr.mxu0 %v1136
    %v1138 = vand.u32 %v266, 4294901760
    %v1139 = vsub.f32 %v266, %v1138
    %v1140 = vand.u32 %v1139, 4294901760
    %v1141 = vsub.f32 %v1139, %v1140
    %v1142 = vand.u32 %v1141, 4294901760
    %1143 = vmatpush1.msra.mxu0 %v1142
    %v1144 = vand.u32 %v269, 4294901760
    %v1145 = vsub.f32 %v269, %v1144
    %v1146 = vand.u32 %v1145, 4294901760
    %v1147 = vsub.f32 %v1145, %v1146
    %v1148 = vand.u32 %v1147, 4294901760
    %1149 = vmatprep.subr.mxu0 %v1148
    %v1150 = vand.u32 %v268, 4294901760
    %v1151 = vsub.f32 %v268, %v1150
    %v1152 = vand.u32 %v1151, 4294901760
    %v1153 = vsub.f32 %v1151, %v1152
    %v1154 = vand.u32 %v1153, 4294901760
    %1155 = vmatpush1.msra.mxu0 %v1154
    %1156 = vmatprep.subr.mxu0 0.0
    %1157 = vmatpush1.msra.mxu0 0.0
    %1158 = vmatprep.subr.mxu0 0.0
    %1159 = vmatpush1.msra.mxu0 0.0
    %1160 = vmatprep.subr.mxu0 0.0
    %1161 = vmatpush1.msra.mxu0 0.0
    %1162 = vmatprep.subr.mxu0 0.0
    %1163 = vmatpush1.msra.mxu0 0.0
    %1164 = vmatprep.subr.mxu0 0.0
    %1165 = vmatpush1.msra.mxu0 0.0
    %1166 = vmatprep.subr.mxu0 0.0
    %1167 = vmatpush1.msra.mxu0 0.0
    %1168 = vmatprep.subr.mxu0 0.0
    %1169 = vmatpush1.msra.mxu0 0.0
    %1170 = vmatprep.subr.mxu0 0.0
    %1171 = vmatpush1.msra.mxu0 0.0
    %1172 = vmatprep.subr.mxu0 0.0
    %1173 = vmatpush1.msra.mxu0 0.0
    %1174 = vmatprep.subr.mxu0 0.0
    %1175 = vmatpush1.msra.mxu0 0.0
    %1176 = vmatprep.subr.mxu0 0.0
    %1177 = vmatpush1.msra.mxu0 0.0
    %1178 = vmatprep.subr.mxu0 0.0
    %1179 = vmatpush1.msra.mxu0 0.0
    %1180 = vmatprep.subr.mxu0 0.0
    %1181 = vmatpush1.msra.mxu0 0.0
    %1182 = vmatprep.subr.mxu0 0.0
    %1183 = vmatpush1.msra.mxu0 0.0
    %1184 = vmatprep.subr.mxu0 0.0
    %1185 = vmatpush1.msra.mxu0 0.0
    %1186 = vmatprep.subr.mxu0 0.0
    %1187 = vmatpush1.msra.mxu0 0.0
    %1188 = vmatprep.subr.mxu0 0.0
    %1189 = vmatpush1.msra.mxu0 0.0
    %1190 = vmatprep.subr.mxu0 0.0
    %1191 = vmatpush1.msra.mxu0 0.0
    %1192 = vmatprep.subr.mxu0 0.0
    %1193 = vmatpush1.msra.mxu0 0.0
    %1194 = vmatprep.subr.mxu0 0.0
    %1195 = vmatpush1.msra.mxu0 0.0
    %1196 = vmatprep.subr.mxu0 0.0
    %1197 = vmatpush1.msra.mxu0 0.0
    %1198 = vmatprep.subr.mxu0 0.0
    %1199 = vmatpush1.msra.mxu0 0.0
    %1200 = vmatprep.subr.mxu0 0.0
    %1201 = vmatpush1.msra.mxu0 0.0
    %1202 = vmatprep.subr.mxu0 0.0
    %1203 = vmatpush1.msra.mxu0 0.0
    %1204 = vmatprep.mubr.f32.mxu0 0.0
    %v1205 = vand.u32 %v966, 4294901760
    %1206 = vmatmul.mubr.f32.gmra.mrb[0].mxu0 %v1205
    %v1207 = vpop.f32.mrb[0].mxu0
    %v1208 = vadd.f32 %v1056, %v1207
    %v1209 = vpop.f32.mrb[0].mxu0
    %v1210 = vadd.f32 %v1058, %v1209
    %1211 = vdwg.mxu0
    %v1212 = vand.u32 %v255, 4294901760
    %v1213 = vsub.f32 %v255, %v1212
    %1214 = vmatprep.subr.mxu0 %v1213
    %v1215 = vand.u32 %v254, 4294901760
    %v1216 = vsub.f32 %v254, %v1215
    %1217 = vmatpush1.msra.mxu0 %v1216
    %v1218 = vand.u32 %v257, 4294901760
    %v1219 = vsub.f32 %v257, %v1218
    %1220 = vmatprep.subr.mxu0 %v1219
    %v1221 = vand.u32 %v256, 4294901760
    %v1222 = vsub.f32 %v256, %v1221
    %1223 = vmatpush1.msra.mxu0 %v1222
    %v1224 = vand.u32 %v259, 4294901760
    %v1225 = vsub.f32 %v259, %v1224
    %1226 = vmatprep.subr.mxu0 %v1225
    %v1227 = vand.u32 %v258, 4294901760
    %v1228 = vsub.f32 %v258, %v1227
    %1229 = vmatpush1.msra.mxu0 %v1228
    %v1230 = vand.u32 %v261, 4294901760
    %v1231 = vsub.f32 %v261, %v1230
    %1232 = vmatprep.subr.mxu0 %v1231
    %v1233 = vand.u32 %v260, 4294901760
    %v1234 = vsub.f32 %v260, %v1233
    %1235 = vmatpush1.msra.mxu0 %v1234
    %v1236 = vand.u32 %v263, 4294901760
    %v1237 = vsub.f32 %v263, %v1236
    %1238 = vmatprep.subr.mxu0 %v1237
    %v1239 = vand.u32 %v262, 4294901760
    %v1240 = vsub.f32 %v262, %v1239
    %1241 = vmatpush1.msra.mxu0 %v1240
    %v1242 = vand.u32 %v265, 4294901760
    %v1243 = vsub.f32 %v265, %v1242
    %1244 = vmatprep.subr.mxu0 %v1243
    %v1245 = vand.u32 %v264, 4294901760
    %v1246 = vsub.f32 %v264, %v1245
    %1247 = vmatpush1.msra.mxu0 %v1246
    %v1248 = vand.u32 %v267, 4294901760
    %v1249 = vsub.f32 %v267, %v1248
    %1250 = vmatprep.subr.mxu0 %v1249
    %v1251 = vand.u32 %v266, 4294901760
    %v1252 = vsub.f32 %v266, %v1251
    %1253 = vmatpush1.msra.mxu0 %v1252
    %v1254 = vand.u32 %v269, 4294901760
    %v1255 = vsub.f32 %v269, %v1254
    %1256 = vmatprep.subr.mxu0 %v1255
    %v1257 = vand.u32 %v268, 4294901760
    %v1258 = vsub.f32 %v268, %v1257
    %1259 = vmatpush1.msra.mxu0 %v1258
    %1260 = vmatprep.subr.mxu0 0.0
    %1261 = vmatpush1.msra.mxu0 0.0
    %1262 = vmatprep.subr.mxu0 0.0
    %1263 = vmatpush1.msra.mxu0 0.0
    %1264 = vmatprep.subr.mxu0 0.0
    %1265 = vmatpush1.msra.mxu0 0.0
    %1266 = vmatprep.subr.mxu0 0.0
    %1267 = vmatpush1.msra.mxu0 0.0
    %1268 = vmatprep.subr.mxu0 0.0
    %1269 = vmatpush1.msra.mxu0 0.0
    %1270 = vmatprep.subr.mxu0 0.0
    %1271 = vmatpush1.msra.mxu0 0.0
    %1272 = vmatprep.subr.mxu0 0.0
    %1273 = vmatpush1.msra.mxu0 0.0
    %1274 = vmatprep.subr.mxu0 0.0
    %1275 = vmatpush1.msra.mxu0 0.0
    %1276 = vmatprep.subr.mxu0 0.0
    %1277 = vmatpush1.msra.mxu0 0.0
    %1278 = vmatprep.subr.mxu0 0.0
    %1279 = vmatpush1.msra.mxu0 0.0
    %1280 = vmatprep.subr.mxu0 0.0
    %1281 = vmatpush1.msra.mxu0 0.0
    %1282 = vmatprep.subr.mxu0 0.0
    %1283 = vmatpush1.msra.mxu0 0.0
    %1284 = vmatprep.subr.mxu0 0.0
    %1285 = vmatpush1.msra.mxu0 0.0
    %1286 = vmatprep.subr.mxu0 0.0
    %1287 = vmatpush1.msra.mxu0 0.0
    %1288 = vmatprep.subr.mxu0 0.0
    %1289 = vmatpush1.msra.mxu0 0.0
    %1290 = vmatprep.subr.mxu0 0.0
    %1291 = vmatpush1.msra.mxu0 0.0
    %1292 = vmatprep.subr.mxu0 0.0
    %1293 = vmatpush1.msra.mxu0 0.0
    %1294 = vmatprep.subr.mxu0 0.0
    %1295 = vmatpush1.msra.mxu0 0.0
    %1296 = vmatprep.subr.mxu0 0.0
    %1297 = vmatpush1.msra.mxu0 0.0
    %1298 = vmatprep.subr.mxu0 0.0
    %1299 = vmatpush1.msra.mxu0 0.0
    %1300 = vmatprep.subr.mxu0 0.0
    %1301 = vmatpush1.msra.mxu0 0.0
    %1302 = vmatprep.subr.mxu0 0.0
    %1303 = vmatpush1.msra.mxu0 0.0
    %1304 = vmatprep.subr.mxu0 0.0
    %1305 = vmatpush1.msra.mxu0 0.0
    %1306 = vmatprep.subr.mxu0 0.0
    %1307 = vmatpush1.msra.mxu0 0.0
    %1308 = vmatprep.mubr.f32.mxu0 0.0
    %v1309 = vand.u32 %v966, 4294901760
    %v1310 = vsub.f32 %v966, %v1309
    %1311 = vmatmul.mubr.f32.gmra.mrb[0].mxu0 %v1310
    %v1312 = vpop.f32.mrb[0].mxu0
    %v1313 = vadd.f32 %v1208, %v1312
    %v1314 = vpop.f32.mrb[0].mxu0
    %v1315 = vadd.f32 %v1210, %v1314
    %1316 = vdwg.mxu0
    %v1317 = vand.u32 %v255, 4294901760
    %1318 = vmatprep.subr.mxu0 %v1317
    %v1319 = vand.u32 %v254, 4294901760
    %1320 = vmatpush1.msra.mxu0 %v1319
    %v1321 = vand.u32 %v257, 4294901760
    %1322 = vmatprep.subr.mxu0 %v1321
    %v1323 = vand.u32 %v256, 4294901760
    %1324 = vmatpush1.msra.mxu0 %v1323
    %v1325 = vand.u32 %v259, 4294901760
    %1326 = vmatprep.subr.mxu0 %v1325
    %v1327 = vand.u32 %v258, 4294901760
    %1328 = vmatpush1.msra.mxu0 %v1327
    %v1329 = vand.u32 %v261, 4294901760
    %1330 = vmatprep.subr.mxu0 %v1329
    %v1331 = vand.u32 %v260, 4294901760
    %1332 = vmatpush1.msra.mxu0 %v1331
    %v1333 = vand.u32 %v263, 4294901760
    %1334 = vmatprep.subr.mxu0 %v1333
    %v1335 = vand.u32 %v262, 4294901760
    %1336 = vmatpush1.msra.mxu0 %v1335
    %v1337 = vand.u32 %v265, 4294901760
    %1338 = vmatprep.subr.mxu0 %v1337
    %v1339 = vand.u32 %v264, 4294901760
    %1340 = vmatpush1.msra.mxu0 %v1339
    %v1341 = vand.u32 %v267, 4294901760
    %1342 = vmatprep.subr.mxu0 %v1341
    %v1343 = vand.u32 %v266, 4294901760
    %1344 = vmatpush1.msra.mxu0 %v1343
    %v1345 = vand.u32 %v269, 4294901760
    %1346 = vmatprep.subr.mxu0 %v1345
    %v1347 = vand.u32 %v268, 4294901760
    %1348 = vmatpush1.msra.mxu0 %v1347
    %1349 = vmatprep.subr.mxu0 0.0
    %1350 = vmatpush1.msra.mxu0 0.0
    %1351 = vmatprep.subr.mxu0 0.0
    %1352 = vmatpush1.msra.mxu0 0.0
    %1353 = vmatprep.subr.mxu0 0.0
    %1354 = vmatpush1.msra.mxu0 0.0
    %1355 = vmatprep.subr.mxu0 0.0
    %1356 = vmatpush1.msra.mxu0 0.0
    %1357 = vmatprep.subr.mxu0 0.0
    %1358 = vmatpush1.msra.mxu0 0.0
    %1359 = vmatprep.subr.mxu0 0.0
    %1360 = vmatpush1.msra.mxu0 0.0
    %1361 = vmatprep.subr.mxu0 0.0
    %1362 = vmatpush1.msra.mxu0 0.0
    %1363 = vmatprep.subr.mxu0 0.0
    %1364 = vmatpush1.msra.mxu0 0.0
    %1365 = vmatprep.subr.mxu0 0.0
    %1366 = vmatpush1.msra.mxu0 0.0
    %1367 = vmatprep.subr.mxu0 0.0
    %1368 = vmatpush1.msra.mxu0 0.0
    %1369 = vmatprep.subr.mxu0 0.0
    %1370 = vmatpush1.msra.mxu0 0.0
    %1371 = vmatprep.subr.mxu0 0.0
    %1372 = vmatpush1.msra.mxu0 0.0
    %1373 = vmatprep.subr.mxu0 0.0
    %1374 = vmatpush1.msra.mxu0 0.0
    %1375 = vmatprep.subr.mxu0 0.0
    %1376 = vmatpush1.msra.mxu0 0.0
    %1377 = vmatprep.subr.mxu0 0.0
    %1378 = vmatpush1.msra.mxu0 0.0
    %1379 = vmatprep.subr.mxu0 0.0
    %1380 = vmatpush1.msra.mxu0 0.0
    %1381 = vmatprep.subr.mxu0 0.0
    %1382 = vmatpush1.msra.mxu0 0.0
    %1383 = vmatprep.subr.mxu0 0.0
    %1384 = vmatpush1.msra.mxu0 0.0
    %1385 = vmatprep.subr.mxu0 0.0
    %1386 = vmatpush1.msra.mxu0 0.0
    %1387 = vmatprep.subr.mxu0 0.0
    %1388 = vmatpush1.msra.mxu0 0.0
    %1389 = vmatprep.subr.mxu0 0.0
    %1390 = vmatpush1.msra.mxu0 0.0
    %1391 = vmatprep.subr.mxu0 0.0
    %1392 = vmatpush1.msra.mxu0 0.0
    %1393 = vmatprep.subr.mxu0 0.0
    %1394 = vmatpush1.msra.mxu0 0.0
    %1395 = vmatprep.subr.mxu0 0.0
    %1396 = vmatpush1.msra.mxu0 0.0
    %1397 = vmatprep.mubr.f32.mxu0 0.0
    %v1398 = vand.u32 %v966, 4294901760
    %v1399 = vsub.f32 %v966, %v1398
    %v1400 = vand.u32 %v1399, 4294901760
    %1401 = vmatmul.mubr.f32.gmra.mrb[0].mxu0 %v1400
    %v1402 = vpop.f32.mrb[0].mxu0
    %v1403 = vadd.f32 %v1313, %v1402
    %v1404 = vpop.f32.mrb[0].mxu0
    %v1405 = vadd.f32 %v1315, %v1404
    %1406 = vdwg.mxu0
    %v1407 = vand.u32 %v255, 4294901760
    %v1408 = vsub.f32 %v255, %v1407
    %v1409 = vand.u32 %v1408, 4294901760
    %1410 = vmatprep.subr.mxu0 %v1409
    %v1411 = vand.u32 %v254, 4294901760
    %v1412 = vsub.f32 %v254, %v1411
    %v1413 = vand.u32 %v1412, 4294901760
    %1414 = vmatpush1.msra.mxu0 %v1413
    %v1415 = vand.u32 %v257, 4294901760
    %v1416 = vsub.f32 %v257, %v1415
    %v1417 = vand.u32 %v1416, 4294901760
    %1418 = vmatprep.subr.mxu0 %v1417
    %v1419 = vand.u32 %v256, 4294901760
    %v1420 = vsub.f32 %v256, %v1419
    %v1421 = vand.u32 %v1420, 4294901760
    %1422 = vmatpush1.msra.mxu0 %v1421
    %v1423 = vand.u32 %v259, 4294901760
    %v1424 = vsub.f32 %v259, %v1423
    %v1425 = vand.u32 %v1424, 4294901760
    %1426 = vmatprep.subr.mxu0 %v1425
    %v1427 = vand.u32 %v258, 4294901760
    %v1428 = vsub.f32 %v258, %v1427
    %v1429 = vand.u32 %v1428, 4294901760
    %1430 = vmatpush1.msra.mxu0 %v1429
    %v1431 = vand.u32 %v261, 4294901760
    %v1432 = vsub.f32 %v261, %v1431
    %v1433 = vand.u32 %v1432, 4294901760
    %1434 = vmatprep.subr.mxu0 %v1433
    %v1435 = vand.u32 %v260, 4294901760
    %v1436 = vsub.f32 %v260, %v1435
    %v1437 = vand.u32 %v1436, 4294901760
    %1438 = vmatpush1.msra.mxu0 %v1437
    %v1439 = vand.u32 %v263, 4294901760
    %v1440 = vsub.f32 %v263, %v1439
    %v1441 = vand.u32 %v1440, 4294901760
    %1442 = vmatprep.subr.mxu0 %v1441
    %v1443 = vand.u32 %v262, 4294901760
    %v1444 = vsub.f32 %v262, %v1443
    %v1445 = vand.u32 %v1444, 4294901760
    %1446 = vmatpush1.msra.mxu0 %v1445
    %v1447 = vand.u32 %v265, 4294901760
    %v1448 = vsub.f32 %v265, %v1447
    %v1449 = vand.u32 %v1448, 4294901760
    %1450 = vmatprep.subr.mxu0 %v1449
    %v1451 = vand.u32 %v264, 4294901760
    %v1452 = vsub.f32 %v264, %v1451
    %v1453 = vand.u32 %v1452, 4294901760
    %1454 = vmatpush1.msra.mxu0 %v1453
    %v1455 = vand.u32 %v267, 4294901760
    %v1456 = vsub.f32 %v267, %v1455
    %v1457 = vand.u32 %v1456, 4294901760
    %1458 = vmatprep.subr.mxu0 %v1457
    %v1459 = vand.u32 %v266, 4294901760
    %v1460 = vsub.f32 %v266, %v1459
    %v1461 = vand.u32 %v1460, 4294901760
    %1462 = vmatpush1.msra.mxu0 %v1461
    %v1463 = vand.u32 %v269, 4294901760
    %v1464 = vsub.f32 %v269, %v1463
    %v1465 = vand.u32 %v1464, 4294901760
    %1466 = vmatprep.subr.mxu0 %v1465
    %v1467 = vand.u32 %v268, 4294901760
    %v1468 = vsub.f32 %v268, %v1467
    %v1469 = vand.u32 %v1468, 4294901760
    %1470 = vmatpush1.msra.mxu0 %v1469
    %1471 = vmatprep.subr.mxu0 0.0
    %1472 = vmatpush1.msra.mxu0 0.0
    %1473 = vmatprep.subr.mxu0 0.0
    %1474 = vmatpush1.msra.mxu0 0.0
    %1475 = vmatprep.subr.mxu0 0.0
    %1476 = vmatpush1.msra.mxu0 0.0
    %1477 = vmatprep.subr.mxu0 0.0
    %1478 = vmatpush1.msra.mxu0 0.0
    %1479 = vmatprep.subr.mxu0 0.0
    %1480 = vmatpush1.msra.mxu0 0.0
    %1481 = vmatprep.subr.mxu0 0.0
    %1482 = vmatpush1.msra.mxu0 0.0
    %1483 = vmatprep.subr.mxu0 0.0
    %1484 = vmatpush1.msra.mxu0 0.0
    %1485 = vmatprep.subr.mxu0 0.0
    %1486 = vmatpush1.msra.mxu0 0.0
    %1487 = vmatprep.subr.mxu0 0.0
    %1488 = vmatpush1.msra.mxu0 0.0
    %1489 = vmatprep.subr.mxu0 0.0
    %1490 = vmatpush1.msra.mxu0 0.0
    %1491 = vmatprep.subr.mxu0 0.0
    %1492 = vmatpush1.msra.mxu0 0.0
    %1493 = vmatprep.subr.mxu0 0.0
    %1494 = vmatpush1.msra.mxu0 0.0
    %1495 = vmatprep.subr.mxu0 0.0
    %1496 = vmatpush1.msra.mxu0 0.0
    %1497 = vmatprep.subr.mxu0 0.0
    %1498 = vmatpush1.msra.mxu0 0.0
    %1499 = vmatprep.subr.mxu0 0.0
    %1500 = vmatpush1.msra.mxu0 0.0
    %1501 = vmatprep.subr.mxu0 0.0
    %1502 = vmatpush1.msra.mxu0 0.0
    %1503 = vmatprep.subr.mxu0 0.0
    %1504 = vmatpush1.msra.mxu0 0.0
    %1505 = vmatprep.subr.mxu0 0.0
    %1506 = vmatpush1.msra.mxu0 0.0
    %1507 = vmatprep.subr.mxu0 0.0
    %1508 = vmatpush1.msra.mxu0 0.0
    %1509 = vmatprep.subr.mxu0 0.0
    %1510 = vmatpush1.msra.mxu0 0.0
    %1511 = vmatprep.subr.mxu0 0.0
    %1512 = vmatpush1.msra.mxu0 0.0
    %1513 = vmatprep.subr.mxu0 0.0
    %1514 = vmatpush1.msra.mxu0 0.0
    %1515 = vmatprep.subr.mxu0 0.0
    %1516 = vmatpush1.msra.mxu0 0.0
    %1517 = vmatprep.subr.mxu0 0.0
    %1518 = vmatpush1.msra.mxu0 0.0
    %1519 = vmatprep.mubr.f32.mxu0 0.0
    %v1520 = vand.u32 %v966, 4294901760
    %1521 = vmatmul.mubr.f32.gmra.mrb[0].mxu0 %v1520
    %v1522 = vpop.f32.mrb[0].mxu0
    %v1523 = vadd.f32 %v1403, %v1522
    %v1524 = vpop.f32.mrb[0].mxu0
    %v1525 = vadd.f32 %v1405, %v1524
    %1526 = vdwg.mxu0
    %v1527 = vand.u32 %v255, 4294901760
    %1528 = vmatprep.subr.mxu0 %v1527
    %v1529 = vand.u32 %v254, 4294901760
    %1530 = vmatpush1.msra.mxu0 %v1529
    %v1531 = vand.u32 %v257, 4294901760
    %1532 = vmatprep.subr.mxu0 %v1531
    %v1533 = vand.u32 %v256, 4294901760
    %1534 = vmatpush1.msra.mxu0 %v1533
    %v1535 = vand.u32 %v259, 4294901760
    %1536 = vmatprep.subr.mxu0 %v1535
    %v1537 = vand.u32 %v258, 4294901760
    %1538 = vmatpush1.msra.mxu0 %v1537
    %v1539 = vand.u32 %v261, 4294901760
    %1540 = vmatprep.subr.mxu0 %v1539
    %v1541 = vand.u32 %v260, 4294901760
    %1542 = vmatpush1.msra.mxu0 %v1541
    %v1543 = vand.u32 %v263, 4294901760
    %1544 = vmatprep.subr.mxu0 %v1543
    %v1545 = vand.u32 %v262, 4294901760
    %1546 = vmatpush1.msra.mxu0 %v1545
    %v1547 = vand.u32 %v265, 4294901760
    %1548 = vmatprep.subr.mxu0 %v1547
    %v1549 = vand.u32 %v264, 4294901760
    %1550 = vmatpush1.msra.mxu0 %v1549
    %v1551 = vand.u32 %v267, 4294901760
    %1552 = vmatprep.subr.mxu0 %v1551
    %v1553 = vand.u32 %v266, 4294901760
    %1554 = vmatpush1.msra.mxu0 %v1553
    %v1555 = vand.u32 %v269, 4294901760
    %1556 = vmatprep.subr.mxu0 %v1555
    %v1557 = vand.u32 %v268, 4294901760
    %1558 = vmatpush1.msra.mxu0 %v1557
    %1559 = vmatprep.subr.mxu0 0.0
    %1560 = vmatpush1.msra.mxu0 0.0
    %1561 = vmatprep.subr.mxu0 0.0
    %1562 = vmatpush1.msra.mxu0 0.0
    %1563 = vmatprep.subr.mxu0 0.0
    %1564 = vmatpush1.msra.mxu0 0.0
    %1565 = vmatprep.subr.mxu0 0.0
    %1566 = vmatpush1.msra.mxu0 0.0
    %1567 = vmatprep.subr.mxu0 0.0
    %1568 = vmatpush1.msra.mxu0 0.0
    %1569 = vmatprep.subr.mxu0 0.0
    %1570 = vmatpush1.msra.mxu0 0.0
    %1571 = vmatprep.subr.mxu0 0.0
    %1572 = vmatpush1.msra.mxu0 0.0
    %1573 = vmatprep.subr.mxu0 0.0
    %1574 = vmatpush1.msra.mxu0 0.0
    %1575 = vmatprep.subr.mxu0 0.0
    %1576 = vmatpush1.msra.mxu0 0.0
    %1577 = vmatprep.subr.mxu0 0.0
    %1578 = vmatpush1.msra.mxu0 0.0
    %1579 = vmatprep.subr.mxu0 0.0
    %1580 = vmatpush1.msra.mxu0 0.0
    %1581 = vmatprep.subr.mxu0 0.0
    %1582 = vmatpush1.msra.mxu0 0.0
    %1583 = vmatprep.subr.mxu0 0.0
    %1584 = vmatpush1.msra.mxu0 0.0
    %1585 = vmatprep.subr.mxu0 0.0
    %1586 = vmatpush1.msra.mxu0 0.0
    %1587 = vmatprep.subr.mxu0 0.0
    %1588 = vmatpush1.msra.mxu0 0.0
    %1589 = vmatprep.subr.mxu0 0.0
    %1590 = vmatpush1.msra.mxu0 0.0
    %1591 = vmatprep.subr.mxu0 0.0
    %1592 = vmatpush1.msra.mxu0 0.0
    %1593 = vmatprep.subr.mxu0 0.0
    %1594 = vmatpush1.msra.mxu0 0.0
    %1595 = vmatprep.subr.mxu0 0.0
    %1596 = vmatpush1.msra.mxu0 0.0
    %1597 = vmatprep.subr.mxu0 0.0
    %1598 = vmatpush1.msra.mxu0 0.0
    %1599 = vmatprep.subr.mxu0 0.0
    %1600 = vmatpush1.msra.mxu0 0.0
    %1601 = vmatprep.subr.mxu0 0.0
    %1602 = vmatpush1.msra.mxu0 0.0
    %1603 = vmatprep.subr.mxu0 0.0
    %1604 = vmatpush1.msra.mxu0 0.0
    %1605 = vmatprep.subr.mxu0 0.0
    %1606 = vmatpush1.msra.mxu0 0.0
    %1607 = vmatprep.mubr.f32.mxu0 0.0
    %v1608 = vand.u32 %v966, 4294901760
    %1609 = vmatmul.mubr.f32.gmra.mrb[0].mxu0 %v1608
    %v1610 = vpop.f32.mrb[0].mxu0
    %v1611 = vadd.f32 %v1523, %v1610
    %v1612 = vpop.f32.mrb[0].mxu0
    %v1613 = vadd.f32 %v1525, %v1612
    %1614 = vdwg.mxu0
    %v1615 = vadd.f32 %v964, %v1611
    %v1616 = vxor.u32 %v1615, 2147483648
    %v1617 = vmul.f32 %v1616, 1.442695
    %v1618 = vpow.pop %v1617
    %v1619 = vadd.f32 %v1618, 1.0
    %v1620 = vrcp.pop %v1619
    %v1621 = vmul.f32 1.0, %v1620
    %v1622 = vadd.f32 %v1613, %v275
    %v1623 = vmul.f32 %v1621, %v1622
    %v1624 = vadd.f32 %v965, %v1623
    %v1625 = vtanh.pop %v1624
    %v1626 = vsub.f32 1.0, %v1621
    %1628 = vrot.lane.b32.xlu0 %v1625, 64
    %v1629 = vpop.permute.xlu0 %1628
    %v1631 = vmul.f32 %v1626, %v1629
    %v1632 = vmul.f32 %v1621, %v955
    %v1633 = vadd.f32 %v1631, %v1632
    %1635 = vrot.lane.b32.xlu0 %v1633, 64
    %v1636 = vpop.permute.xlu0 %1635
    %s1638 = scalar_lea.vmem [#allocation3], 8
    %1639 = vst.msk [vmem:[%s1638] sm:$0xff] %vm283, %v1636
    %s1640 = smul.u32 2, 2
    %s1641 = smul.addr %s1640, 8
    %s1642 = scalar_lea.vmem [#allocation2], %s1641
    %v1643 = vld [vmem:[%s1642] sm:$0xff]
    %v1644 = vld [vmem:[%s1642 + $0x8] sm:$0xff]
    %v1645 = vsel %vm283, %v1636, 0
    %v1647 = vand.u32 %v255, 4294901760
    %1648 = vmatprep.subr.mxu0 %v1647
    %v1649 = vand.u32 %v254, 4294901760
    %1650 = vmatpush1.msra.mxu0 %v1649
    %v1651 = vand.u32 %v257, 4294901760
    %1652 = vmatprep.subr.mxu0 %v1651
    %v1653 = vand.u32 %v256, 4294901760
    %1654 = vmatpush1.msra.mxu0 %v1653
    %v1655 = vand.u32 %v259, 4294901760
    %1656 = vmatprep.subr.mxu0 %v1655
    %v1657 = vand.u32 %v258, 4294901760
    %1658 = vmatpush1.msra.mxu0 %v1657
    %v1659 = vand.u32 %v261, 4294901760
    %1660 = vmatprep.subr.mxu0 %v1659
    %v1661 = vand.u32 %v260, 4294901760
    %1662 = vmatpush1.msra.mxu0 %v1661
    %v1663 = vand.u32 %v263, 4294901760
    %1664 = vmatprep.subr.mxu0 %v1663
    %v1665 = vand.u32 %v262, 4294901760
    %1666 = vmatpush1.msra.mxu0 %v1665
    %v1667 = vand.u32 %v265, 4294901760
    %1668 = vmatprep.subr.mxu0 %v1667
    %v1669 = vand.u32 %v264, 4294901760
    %1670 = vmatpush1.msra.mxu0 %v1669
    %v1671 = vand.u32 %v267, 4294901760
    %1672 = vmatprep.subr.mxu0 %v1671
    %v1673 = vand.u32 %v266, 4294901760
    %1674 = vmatpush1.msra.mxu0 %v1673
    %v1675 = vand.u32 %v269, 4294901760
    %1676 = vmatprep.subr.mxu0 %v1675
    %v1677 = vand.u32 %v268, 4294901760
    %1678 = vmatpush1.msra.mxu0 %v1677
    %1679 = vmatprep.subr.mxu0 0.0
    %1680 = vmatpush1.msra.mxu0 0.0
    %1681 = vmatprep.subr.mxu0 0.0
    %1682 = vmatpush1.msra.mxu0 0.0
    %1683 = vmatprep.subr.mxu0 0.0
    %1684 = vmatpush1.msra.mxu0 0.0
    %1685 = vmatprep.subr.mxu0 0.0
    %1686 = vmatpush1.msra.mxu0 0.0
    %1687 = vmatprep.subr.mxu0 0.0
    %1688 = vmatpush1.msra.mxu0 0.0
    %1689 = vmatprep.subr.mxu0 0.0
    %1690 = vmatpush1.msra.mxu0 0.0
    %1691 = vmatprep.subr.mxu0 0.0
    %1692 = vmatpush1.msra.mxu0 0.0
    %1693 = vmatprep.subr.mxu0 0.0
    %1694 = vmatpush1.msra.mxu0 0.0
    %1695 = vmatprep.subr.mxu0 0.0
    %1696 = vmatpush1.msra.mxu0 0.0
    %1697 = vmatprep.subr.mxu0 0.0
    %1698 = vmatpush1.msra.mxu0 0.0
    %1699 = vmatprep.subr.mxu0 0.0
    %1700 = vmatpush1.msra.mxu0 0.0
    %1701 = vmatprep.subr.mxu0 0.0
    %1702 = vmatpush1.msra.mxu0 0.0
    %1703 = vmatprep.subr.mxu0 0.0
    %1704 = vmatpush1.msra.mxu0 0.0
    %1705 = vmatprep.subr.mxu0 0.0
    %1706 = vmatpush1.msra.mxu0 0.0
    %1707 = vmatprep.subr.mxu0 0.0
    %1708 = vmatpush1.msra.mxu0 0.0
    %1709 = vmatprep.subr.mxu0 0.0
    %1710 = vmatpush1.msra.mxu0 0.0
    %1711 = vmatprep.subr.mxu0 0.0
    %1712 = vmatpush1.msra.mxu0 0.0
    %1713 = vmatprep.subr.mxu0 0.0
    %1714 = vmatpush1.msra.mxu0 0.0
    %1715 = vmatprep.subr.mxu0 0.0
    %1716 = vmatpush1.msra.mxu0 0.0
    %1717 = vmatprep.subr.mxu0 0.0
    %1718 = vmatpush1.msra.mxu0 0.0
    %1719 = vmatprep.subr.mxu0 0.0
    %1720 = vmatpush1.msra.mxu0 0.0
    %1721 = vmatprep.subr.mxu0 0.0
    %1722 = vmatpush1.msra.mxu0 0.0
    %1723 = vmatprep.subr.mxu0 0.0
    %1724 = vmatpush1.msra.mxu0 0.0
    %1725 = vmatprep.subr.mxu0 0.0
    %1726 = vmatpush1.msra.mxu0 0.0
    %1727 = vmatprep.mubr.f32.mxu0 0.0
    %v1728 = vand.u32 %v1645, 4294901760
    %v1729 = vsub.f32 %v1645, %v1728
    %v1730 = vand.u32 %v1729, 4294901760
    %v1731 = vsub.f32 %v1729, %v1730
    %v1732 = vand.u32 %v1731, 4294901760
    %1733 = vmatmul.mubr.f32.gmra.mrb[0].mxu0 %v1732
    %v1734 = vpop.f32.mrb[0].mxu0
    %v1735 = vadd.f32 0.0, %v1734
    %v1736 = vpop.f32.mrb[0].mxu0
    %v1737 = vadd.f32 0.0, %v1736
    %1738 = vdwg.mxu0
    %v1739 = vand.u32 %v255, 4294901760
    %v1740 = vsub.f32 %v255, %v1739
    %v1741 = vand.u32 %v1740, 4294901760
    %v1742 = vsub.f32 %v1740, %v1741
    %v1743 = vand.u32 %v1742, 4294901760
    %1744 = vmatprep.subr.mxu0 %v1743
    %v1745 = vand.u32 %v254, 4294901760
    %v1746 = vsub.f32 %v254, %v1745
    %v1747 = vand.u32 %v1746, 4294901760
    %v1748 = vsub.f32 %v1746, %v1747
    %v1749 = vand.u32 %v1748, 4294901760
    %1750 = vmatpush1.msra.mxu0 %v1749
    %v1751 = vand.u32 %v257, 4294901760
    %v1752 = vsub.f32 %v257, %v1751
    %v1753 = vand.u32 %v1752, 4294901760
    %v1754 = vsub.f32 %v1752, %v1753
    %v1755 = vand.u32 %v1754, 4294901760
    %1756 = vmatprep.subr.mxu0 %v1755
    %v1757 = vand.u32 %v256, 4294901760
    %v1758 = vsub.f32 %v256, %v1757
    %v1759 = vand.u32 %v1758, 4294901760
    %v1760 = vsub.f32 %v1758, %v1759
    %v1761 = vand.u32 %v1760, 4294901760
    %1762 = vmatpush1.msra.mxu0 %v1761
    %v1763 = vand.u32 %v259, 4294901760
    %v1764 = vsub.f32 %v259, %v1763
    %v1765 = vand.u32 %v1764, 4294901760
    %v1766 = vsub.f32 %v1764, %v1765
    %v1767 = vand.u32 %v1766, 4294901760
    %1768 = vmatprep.subr.mxu0 %v1767
    %v1769 = vand.u32 %v258, 4294901760
    %v1770 = vsub.f32 %v258, %v1769
    %v1771 = vand.u32 %v1770, 4294901760
    %v1772 = vsub.f32 %v1770, %v1771
    %v1773 = vand.u32 %v1772, 4294901760
    %1774 = vmatpush1.msra.mxu0 %v1773
    %v1775 = vand.u32 %v261, 4294901760
    %v1776 = vsub.f32 %v261, %v1775
    %v1777 = vand.u32 %v1776, 4294901760
    %v1778 = vsub.f32 %v1776, %v1777
    %v1779 = vand.u32 %v1778, 4294901760
    %1780 = vmatprep.subr.mxu0 %v1779
    %v1781 = vand.u32 %v260, 4294901760
    %v1782 = vsub.f32 %v260, %v1781
    %v1783 = vand.u32 %v1782, 4294901760
    %v1784 = vsub.f32 %v1782, %v1783
    %v1785 = vand.u32 %v1784, 4294901760
    %1786 = vmatpush1.msra.mxu0 %v1785
    %v1787 = vand.u32 %v263, 4294901760
    %v1788 = vsub.f32 %v263, %v1787
    %v1789 = vand.u32 %v1788, 4294901760
    %v1790 = vsub.f32 %v1788, %v1789
    %v1791 = vand.u32 %v1790, 4294901760
    %1792 = vmatprep.subr.mxu0 %v1791
    %v1793 = vand.u32 %v262, 4294901760
    %v1794 = vsub.f32 %v262, %v1793
    %v1795 = vand.u32 %v1794, 4294901760
    %v1796 = vsub.f32 %v1794, %v1795
    %v1797 = vand.u32 %v1796, 4294901760
    %1798 = vmatpush1.msra.mxu0 %v1797
    %v1799 = vand.u32 %v265, 4294901760
    %v1800 = vsub.f32 %v265, %v1799
    %v1801 = vand.u32 %v1800, 4294901760
    %v1802 = vsub.f32 %v1800, %v1801
    %v1803 = vand.u32 %v1802, 4294901760
    %1804 = vmatprep.subr.mxu0 %v1803
    %v1805 = vand.u32 %v264, 4294901760
    %v1806 = vsub.f32 %v264, %v1805
    %v1807 = vand.u32 %v1806, 4294901760
    %v1808 = vsub.f32 %v1806, %v1807
    %v1809 = vand.u32 %v1808, 4294901760
    %1810 = vmatpush1.msra.mxu0 %v1809
    %v1811 = vand.u32 %v267, 4294901760
    %v1812 = vsub.f32 %v267, %v1811
    %v1813 = vand.u32 %v1812, 4294901760
    %v1814 = vsub.f32 %v1812, %v1813
    %v1815 = vand.u32 %v1814, 4294901760
    %1816 = vmatprep.subr.mxu0 %v1815
    %v1817 = vand.u32 %v266, 4294901760
    %v1818 = vsub.f32 %v266, %v1817
    %v1819 = vand.u32 %v1818, 4294901760
    %v1820 = vsub.f32 %v1818, %v1819
    %v1821 = vand.u32 %v1820, 4294901760
    %1822 = vmatpush1.msra.mxu0 %v1821
    %v1823 = vand.u32 %v269, 4294901760
    %v1824 = vsub.f32 %v269, %v1823
    %v1825 = vand.u32 %v1824, 4294901760
    %v1826 = vsub.f32 %v1824, %v1825
    %v1827 = vand.u32 %v1826, 4294901760
    %1828 = vmatprep.subr.mxu0 %v1827
    %v1829 = vand.u32 %v268, 4294901760
    %v1830 = vsub.f32 %v268, %v1829
    %v1831 = vand.u32 %v1830, 4294901760
    %v1832 = vsub.f32 %v1830, %v1831
    %v1833 = vand.u32 %v1832, 4294901760
    %1834 = vmatpush1.msra.mxu0 %v1833
    %1835 = vmatprep.subr.mxu0 0.0
    %1836 = vmatpush1.msra.mxu0 0.0
    %1837 = vmatprep.subr.mxu0 0.0
    %1838 = vmatpush1.msra.mxu0 0.0
    %1839 = vmatprep.subr.mxu0 0.0
    %1840 = vmatpush1.msra.mxu0 0.0
    %1841 = vmatprep.subr.mxu0 0.0
    %1842 = vmatpush1.msra.mxu0 0.0
    %1843 = vmatprep.subr.mxu0 0.0
    %1844 = vmatpush1.msra.mxu0 0.0
    %1845 = vmatprep.subr.mxu0 0.0
    %1846 = vmatpush1.msra.mxu0 0.0
    %1847 = vmatprep.subr.mxu0 0.0
    %1848 = vmatpush1.msra.mxu0 0.0
    %1849 = vmatprep.subr.mxu0 0.0
    %1850 = vmatpush1.msra.mxu0 0.0
    %1851 = vmatprep.subr.mxu0 0.0
    %1852 = vmatpush1.msra.mxu0 0.0
    %1853 = vmatprep.subr.mxu0 0.0
    %1854 = vmatpush1.msra.mxu0 0.0
    %1855 = vmatprep.subr.mxu0 0.0
    %1856 = vmatpush1.msra.mxu0 0.0
    %1857 = vmatprep.subr.mxu0 0.0
    %1858 = vmatpush1.msra.mxu0 0.0
    %1859 = vmatprep.subr.mxu0 0.0
    %1860 = vmatpush1.msra.mxu0 0.0
    %1861 = vmatprep.subr.mxu0 0.0
    %1862 = vmatpush1.msra.mxu0 0.0
    %1863 = vmatprep.subr.mxu0 0.0
    %1864 = vmatpush1.msra.mxu0 0.0
    %1865 = vmatprep.subr.mxu0 0.0
    %1866 = vmatpush1.msra.mxu0 0.0
    %1867 = vmatprep.subr.mxu0 0.0
    %1868 = vmatpush1.msra.mxu0 0.0
    %1869 = vmatprep.subr.mxu0 0.0
    %1870 = vmatpush1.msra.mxu0 0.0
    %1871 = vmatprep.subr.mxu0 0.0
    %1872 = vmatpush1.msra.mxu0 0.0
    %1873 = vmatprep.subr.mxu0 0.0
    %1874 = vmatpush1.msra.mxu0 0.0
    %1875 = vmatprep.subr.mxu0 0.0
    %1876 = vmatpush1.msra.mxu0 0.0
    %1877 = vmatprep.subr.mxu0 0.0
    %1878 = vmatpush1.msra.mxu0 0.0
    %1879 = vmatprep.subr.mxu0 0.0
    %1880 = vmatpush1.msra.mxu0 0.0
    %1881 = vmatprep.subr.mxu0 0.0
    %1882 = vmatpush1.msra.mxu0 0.0
    %1883 = vmatprep.mubr.f32.mxu0 0.0
    %v1884 = vand.u32 %v1645, 4294901760
    %1885 = vmatmul.mubr.f32.gmra.mrb[0].mxu0 %v1884
    %v1886 = vpop.f32.mrb[0].mxu0
    %v1887 = vadd.f32 %v1735, %v1886
    %v1888 = vpop.f32.mrb[0].mxu0
    %v1889 = vadd.f32 %v1737, %v1888
    %1890 = vdwg.mxu0
    %v1891 = vand.u32 %v255, 4294901760
    %v1892 = vsub.f32 %v255, %v1891
    %1893 = vmatprep.subr.mxu0 %v1892
    %v1894 = vand.u32 %v254, 4294901760
    %v1895 = vsub.f32 %v254, %v1894
    %1896 = vmatpush1.msra.mxu0 %v1895
    %v1897 = vand.u32 %v257, 4294901760
    %v1898 = vsub.f32 %v257, %v1897
    %1899 = vmatprep.subr.mxu0 %v1898
    %v1900 = vand.u32 %v256, 4294901760
    %v1901 = vsub.f32 %v256, %v1900
    %1902 = vmatpush1.msra.mxu0 %v1901
    %v1903 = vand.u32 %v259, 4294901760
    %v1904 = vsub.f32 %v259, %v1903
    %1905 = vmatprep.subr.mxu0 %v1904
    %v1906 = vand.u32 %v258, 4294901760
    %v1907 = vsub.f32 %v258, %v1906
    %1908 = vmatpush1.msra.mxu0 %v1907
    %v1909 = vand.u32 %v261, 4294901760
    %v1910 = vsub.f32 %v261, %v1909
    %1911 = vmatprep.subr.mxu0 %v1910
    %v1912 = vand.u32 %v260, 4294901760
    %v1913 = vsub.f32 %v260, %v1912
    %1914 = vmatpush1.msra.mxu0 %v1913
    %v1915 = vand.u32 %v263, 4294901760
    %v1916 = vsub.f32 %v263, %v1915
    %1917 = vmatprep.subr.mxu0 %v1916
    %v1918 = vand.u32 %v262, 4294901760
    %v1919 = vsub.f32 %v262, %v1918
    %1920 = vmatpush1.msra.mxu0 %v1919
    %v1921 = vand.u32 %v265, 4294901760
    %v1922 = vsub.f32 %v265, %v1921
    %1923 = vmatprep.subr.mxu0 %v1922
    %v1924 = vand.u32 %v264, 4294901760
    %v1925 = vsub.f32 %v264, %v1924
    %1926 = vmatpush1.msra.mxu0 %v1925
    %v1927 = vand.u32 %v267, 4294901760
    %v1928 = vsub.f32 %v267, %v1927
    %1929 = vmatprep.subr.mxu0 %v1928
    %v1930 = vand.u32 %v266, 4294901760
    %v1931 = vsub.f32 %v266, %v1930
    %1932 = vmatpush1.msra.mxu0 %v1931
    %v1933 = vand.u32 %v269, 4294901760
    %v1934 = vsub.f32 %v269, %v1933
    %1935 = vmatprep.subr.mxu0 %v1934
    %v1936 = vand.u32 %v268, 4294901760
    %v1937 = vsub.f32 %v268, %v1936
    %1938 = vmatpush1.msra.mxu0 %v1937
    %1939 = vmatprep.subr.mxu0 0.0
    %1940 = vmatpush1.msra.mxu0 0.0
    %1941 = vmatprep.subr.mxu0 0.0
    %1942 = vmatpush1.msra.mxu0 0.0
    %1943 = vmatprep.subr.mxu0 0.0
    %1944 = vmatpush1.msra.mxu0 0.0
    %1945 = vmatprep.subr.mxu0 0.0
    %1946 = vmatpush1.msra.mxu0 0.0
    %1947 = vmatprep.subr.mxu0 0.0
    %1948 = vmatpush1.msra.mxu0 0.0
    %1949 = vmatprep.subr.mxu0 0.0
    %1950 = vmatpush1.msra.mxu0 0.0
    %1951 = vmatprep.subr.mxu0 0.0
    %1952 = vmatpush1.msra.mxu0 0.0
    %1953 = vmatprep.subr.mxu0 0.0
    %1954 = vmatpush1.msra.mxu0 0.0
    %1955 = vmatprep.subr.mxu0 0.0
    %1956 = vmatpush1.msra.mxu0 0.0
    %1957 = vmatprep.subr.mxu0 0.0
    %1958 = vmatpush1.msra.mxu0 0.0
    %1959 = vmatprep.subr.mxu0 0.0
    %1960 = vmatpush1.msra.mxu0 0.0
    %1961 = vmatprep.subr.mxu0 0.0
    %1962 = vmatpush1.msra.mxu0 0.0
    %1963 = vmatprep.subr.mxu0 0.0
    %1964 = vmatpush1.msra.mxu0 0.0
    %1965 = vmatprep.subr.mxu0 0.0
    %1966 = vmatpush1.msra.mxu0 0.0
    %1967 = vmatprep.subr.mxu0 0.0
    %1968 = vmatpush1.msra.mxu0 0.0
    %1969 = vmatprep.subr.mxu0 0.0
    %1970 = vmatpush1.msra.mxu0 0.0
    %1971 = vmatprep.subr.mxu0 0.0
    %1972 = vmatpush1.msra.mxu0 0.0
    %1973 = vmatprep.subr.mxu0 0.0
    %1974 = vmatpush1.msra.mxu0 0.0
    %1975 = vmatprep.subr.mxu0 0.0
    %1976 = vmatpush1.msra.mxu0 0.0
    %1977 = vmatprep.subr.mxu0 0.0
    %1978 = vmatpush1.msra.mxu0 0.0
    %1979 = vmatprep.subr.mxu0 0.0
    %1980 = vmatpush1.msra.mxu0 0.0
    %1981 = vmatprep.subr.mxu0 0.0
    %1982 = vmatpush1.msra.mxu0 0.0
    %1983 = vmatprep.subr.mxu0 0.0
    %1984 = vmatpush1.msra.mxu0 0.0
    %1985 = vmatprep.subr.mxu0 0.0
    %1986 = vmatpush1.msra.mxu0 0.0
    %1987 = vmatprep.mubr.f32.mxu0 0.0
    %v1988 = vand.u32 %v1645, 4294901760
    %v1989 = vsub.f32 %v1645, %v1988
    %1990 = vmatmul.mubr.f32.gmra.mrb[0].mxu0 %v1989
    %v1991 = vpop.f32.mrb[0].mxu0
    %v1992 = vadd.f32 %v1887, %v1991
    %v1993 = vpop.f32.mrb[0].mxu0
    %v1994 = vadd.f32 %v1889, %v1993
    %1995 = vdwg.mxu0
    %v1996 = vand.u32 %v255, 4294901760
    %1997 = vmatprep.subr.mxu0 %v1996
    %v1998 = vand.u32 %v254, 4294901760
    %1999 = vmatpush1.msra.mxu0 %v1998
    %v2000 = vand.u32 %v257, 4294901760
    %2001 = vmatprep.subr.mxu0 %v2000
    %v2002 = vand.u32 %v256, 4294901760
    %2003 = vmatpush1.msra.mxu0 %v2002
    %v2004 = vand.u32 %v259, 4294901760
    %2005 = vmatprep.subr.mxu0 %v2004
    %v2006 = vand.u32 %v258, 4294901760
    %2007 = vmatpush1.msra.mxu0 %v2006
    %v2008 = vand.u32 %v261, 4294901760
    %2009 = vmatprep.subr.mxu0 %v2008
    %v2010 = vand.u32 %v260, 4294901760
    %2011 = vmatpush1.msra.mxu0 %v2010
    %v2012 = vand.u32 %v263, 4294901760
    %2013 = vmatprep.subr.mxu0 %v2012
    %v2014 = vand.u32 %v262, 4294901760
    %2015 = vmatpush1.msra.mxu0 %v2014
    %v2016 = vand.u32 %v265, 4294901760
    %2017 = vmatprep.subr.mxu0 %v2016
    %v2018 = vand.u32 %v264, 4294901760
    %2019 = vmatpush1.msra.mxu0 %v2018
    %v2020 = vand.u32 %v267, 4294901760
    %2021 = vmatprep.subr.mxu0 %v2020
    %v2022 = vand.u32 %v266, 4294901760
    %2023 = vmatpush1.msra.mxu0 %v2022
    %v2024 = vand.u32 %v269, 4294901760
    %2025 = vmatprep.subr.mxu0 %v2024
    %v2026 = vand.u32 %v268, 4294901760
    %2027 = vmatpush1.msra.mxu0 %v2026
    %2028 = vmatprep.subr.mxu0 0.0
    %2029 = vmatpush1.msra.mxu0 0.0
    %2030 = vmatprep.subr.mxu0 0.0
    %2031 = vmatpush1.msra.mxu0 0.0
    %2032 = vmatprep.subr.mxu0 0.0
    %2033 = vmatpush1.msra.mxu0 0.0
    %2034 = vmatprep.subr.mxu0 0.0
    %2035 = vmatpush1.msra.mxu0 0.0
    %2036 = vmatprep.subr.mxu0 0.0
    %2037 = vmatpush1.msra.mxu0 0.0
    %2038 = vmatprep.subr.mxu0 0.0
    %2039 = vmatpush1.msra.mxu0 0.0
    %2040 = vmatprep.subr.mxu0 0.0
    %2041 = vmatpush1.msra.mxu0 0.0
    %2042 = vmatprep.subr.mxu0 0.0
    %2043 = vmatpush1.msra.mxu0 0.0
    %2044 = vmatprep.subr.mxu0 0.0
    %2045 = vmatpush1.msra.mxu0 0.0
    %2046 = vmatprep.subr.mxu0 0.0
    %2047 = vmatpush1.msra.mxu0 0.0
    %2048 = vmatprep.subr.mxu0 0.0
    %2049 = vmatpush1.msra.mxu0 0.0
    %2050 = vmatprep.subr.mxu0 0.0
    %2051 = vmatpush1.msra.mxu0 0.0
    %2052 = vmatprep.subr.mxu0 0.0
    %2053 = vmatpush1.msra.mxu0 0.0
    %2054 = vmatprep.subr.mxu0 0.0
    %2055 = vmatpush1.msra.mxu0 0.0
    %2056 = vmatprep.subr.mxu0 0.0
    %2057 = vmatpush1.msra.mxu0 0.0
    %2058 = vmatprep.subr.mxu0 0.0
    %2059 = vmatpush1.msra.mxu0 0.0
    %2060 = vmatprep.subr.mxu0 0.0
    %2061 = vmatpush1.msra.mxu0 0.0
    %2062 = vmatprep.subr.mxu0 0.0
    %2063 = vmatpush1.msra.mxu0 0.0
    %2064 = vmatprep.subr.mxu0 0.0
    %2065 = vmatpush1.msra.mxu0 0.0
    %2066 = vmatprep.subr.mxu0 0.0
    %2067 = vmatpush1.msra.mxu0 0.0
    %2068 = vmatprep.subr.mxu0 0.0
    %2069 = vmatpush1.msra.mxu0 0.0
    %2070 = vmatprep.subr.mxu0 0.0
    %2071 = vmatpush1.msra.mxu0 0.0
    %2072 = vmatprep.subr.mxu0 0.0
    %2073 = vmatpush1.msra.mxu0 0.0
    %2074 = vmatprep.subr.mxu0 0.0
    %2075 = vmatpush1.msra.mxu0 0.0
    %2076 = vmatprep.mubr.f32.mxu0 0.0
    %v2077 = vand.u32 %v1645, 4294901760
    %v2078 = vsub.f32 %v1645, %v2077
    %v2079 = vand.u32 %v2078, 4294901760
    %2080 = vmatmul.mubr.f32.gmra.mrb[0].mxu0 %v2079
    %v2081 = vpop.f32.mrb[0].mxu0
    %v2082 = vadd.f32 %v1992, %v2081
    %v2083 = vpop.f32.mrb[0].mxu0
    %v2084 = vadd.f32 %v1994, %v2083
    %2085 = vdwg.mxu0
    %v2086 = vand.u32 %v255, 4294901760
    %v2087 = vsub.f32 %v255, %v2086
    %v2088 = vand.u32 %v2087, 4294901760
    %2089 = vmatprep.subr.mxu0 %v2088
    %v2090 = vand.u32 %v254, 4294901760
    %v2091 = vsub.f32 %v254, %v2090
    %v2092 = vand.u32 %v2091, 4294901760
    %2093 = vmatpush1.msra.mxu0 %v2092
    %v2094 = vand.u32 %v257, 4294901760
    %v2095 = vsub.f32 %v257, %v2094
    %v2096 = vand.u32 %v2095, 4294901760
    %2097 = vmatprep.subr.mxu0 %v2096
    %v2098 = vand.u32 %v256, 4294901760
    %v2099 = vsub.f32 %v256, %v2098
    %v2100 = vand.u32 %v2099, 4294901760
    %2101 = vmatpush1.msra.mxu0 %v2100
    %v2102 = vand.u32 %v259, 4294901760
    %v2103 = vsub.f32 %v259, %v2102
    %v2104 = vand.u32 %v2103, 4294901760
    %2105 = vmatprep.subr.mxu0 %v2104
    %v2106 = vand.u32 %v258, 4294901760
    %v2107 = vsub.f32 %v258, %v2106
    %v2108 = vand.u32 %v2107, 4294901760
    %2109 = vmatpush1.msra.mxu0 %v2108
    %v2110 = vand.u32 %v261, 4294901760
    %v2111 = vsub.f32 %v261, %v2110
    %v2112 = vand.u32 %v2111, 4294901760
    %2113 = vmatprep.subr.mxu0 %v2112
    %v2114 = vand.u32 %v260, 4294901760
    %v2115 = vsub.f32 %v260, %v2114
    %v2116 = vand.u32 %v2115, 4294901760
    %2117 = vmatpush1.msra.mxu0 %v2116
    %v2118 = vand.u32 %v263, 4294901760
    %v2119 = vsub.f32 %v263, %v2118
    %v2120 = vand.u32 %v2119, 4294901760
    %2121 = vmatprep.subr.mxu0 %v2120
    %v2122 = vand.u32 %v262, 4294901760
    %v2123 = vsub.f32 %v262, %v2122
    %v2124 = vand.u32 %v2123, 4294901760
    %2125 = vmatpush1.msra.mxu0 %v2124
    %v2126 = vand.u32 %v265, 4294901760
    %v2127 = vsub.f32 %v265, %v2126
    %v2128 = vand.u32 %v2127, 4294901760
    %2129 = vmatprep.subr.mxu0 %v2128
    %v2130 = vand.u32 %v264, 4294901760
    %v2131 = vsub.f32 %v264, %v2130
    %v2132 = vand.u32 %v2131, 4294901760
    %2133 = vmatpush1.msra.mxu0 %v2132
    %v2134 = vand.u32 %v267, 4294901760
    %v2135 = vsub.f32 %v267, %v2134
    %v2136 = vand.u32 %v2135, 4294901760
    %2137 = vmatprep.subr.mxu0 %v2136
    %v2138 = vand.u32 %v266, 4294901760
    %v2139 = vsub.f32 %v266, %v2138
    %v2140 = vand.u32 %v2139, 4294901760
    %2141 = vmatpush1.msra.mxu0 %v2140
    %v2142 = vand.u32 %v269, 4294901760
    %v2143 = vsub.f32 %v269, %v2142
    %v2144 = vand.u32 %v2143, 4294901760
    %2145 = vmatprep.subr.mxu0 %v2144
    %v2146 = vand.u32 %v268, 4294901760
    %v2147 = vsub.f32 %v268, %v2146
    %v2148 = vand.u32 %v2147, 4294901760
    %2149 = vmatpush1.msra.mxu0 %v2148
    %2150 = vmatprep.subr.mxu0 0.0
    %2151 = vmatpush1.msra.mxu0 0.0
    %2152 = vmatprep.subr.mxu0 0.0
    %2153 = vmatpush1.msra.mxu0 0.0
    %2154 = vmatprep.subr.mxu0 0.0
    %2155 = vmatpush1.msra.mxu0 0.0
    %2156 = vmatprep.subr.mxu0 0.0
    %2157 = vmatpush1.msra.mxu0 0.0
    %2158 = vmatprep.subr.mxu0 0.0
    %2159 = vmatpush1.msra.mxu0 0.0
    %2160 = vmatprep.subr.mxu0 0.0
    %2161 = vmatpush1.msra.mxu0 0.0
    %2162 = vmatprep.subr.mxu0 0.0
    %2163 = vmatpush1.msra.mxu0 0.0
    %2164 = vmatprep.subr.mxu0 0.0
    %2165 = vmatpush1.msra.mxu0 0.0
    %2166 = vmatprep.subr.mxu0 0.0
    %2167 = vmatpush1.msra.mxu0 0.0
    %2168 = vmatprep.subr.mxu0 0.0
    %2169 = vmatpush1.msra.mxu0 0.0
    %2170 = vmatprep.subr.mxu0 0.0
    %2171 = vmatpush1.msra.mxu0 0.0
    %2172 = vmatprep.subr.mxu0 0.0
    %2173 = vmatpush1.msra.mxu0 0.0
    %2174 = vmatprep.subr.mxu0 0.0
    %2175 = vmatpush1.msra.mxu0 0.0
    %2176 = vmatprep.subr.mxu0 0.0
    %2177 = vmatpush1.msra.mxu0 0.0
    %2178 = vmatprep.subr.mxu0 0.0
    %2179 = vmatpush1.msra.mxu0 0.0
    %2180 = vmatprep.subr.mxu0 0.0
    %2181 = vmatpush1.msra.mxu0 0.0
    %2182 = vmatprep.subr.mxu0 0.0
    %2183 = vmatpush1.msra.mxu0 0.0
    %2184 = vmatprep.subr.mxu0 0.0
    %2185 = vmatpush1.msra.mxu0 0.0
    %2186 = vmatprep.subr.mxu0 0.0
    %2187 = vmatpush1.msra.mxu0 0.0
    %2188 = vmatprep.subr.mxu0 0.0
    %2189 = vmatpush1.msra.mxu0 0.0
    %2190 = vmatprep.subr.mxu0 0.0
    %2191 = vmatpush1.msra.mxu0 0.0
    %2192 = vmatprep.subr.mxu0 0.0
    %2193 = vmatpush1.msra.mxu0 0.0
    %2194 = vmatprep.subr.mxu0 0.0
    %2195 = vmatpush1.msra.mxu0 0.0
    %2196 = vmatprep.subr.mxu0 0.0
    %2197 = vmatpush1.msra.mxu0 0.0
    %2198 = vmatprep.mubr.f32.mxu0 0.0
    %v2199 = vand.u32 %v1645, 4294901760
    %2200 = vmatmul.mubr.f32.gmra.mrb[0].mxu0 %v2199
    %v2201 = vpop.f32.mrb[0].mxu0
    %v2202 = vadd.f32 %v2082, %v2201
    %v2203 = vpop.f32.mrb[0].mxu0
    %v2204 = vadd.f32 %v2084, %v2203
    %2205 = vdwg.mxu0
    %v2206 = vand.u32 %v255, 4294901760
    %2207 = vmatprep.subr.mxu0 %v2206
    %v2208 = vand.u32 %v254, 4294901760
    %2209 = vmatpush1.msra.mxu0 %v2208
    %v2210 = vand.u32 %v257, 4294901760
    %2211 = vmatprep.subr.mxu0 %v2210
    %v2212 = vand.u32 %v256, 4294901760
    %2213 = vmatpush1.msra.mxu0 %v2212
    %v2214 = vand.u32 %v259, 4294901760
    %2215 = vmatprep.subr.mxu0 %v2214
    %v2216 = vand.u32 %v258, 4294901760
    %2217 = vmatpush1.msra.mxu0 %v2216
    %v2218 = vand.u32 %v261, 4294901760
    %2219 = vmatprep.subr.mxu0 %v2218
    %v2220 = vand.u32 %v260, 4294901760
    %2221 = vmatpush1.msra.mxu0 %v2220
    %v2222 = vand.u32 %v263, 4294901760
    %2223 = vmatprep.subr.mxu0 %v2222
    %v2224 = vand.u32 %v262, 4294901760
    %2225 = vmatpush1.msra.mxu0 %v2224
    %v2226 = vand.u32 %v265, 4294901760
    %2227 = vmatprep.subr.mxu0 %v2226
    %v2228 = vand.u32 %v264, 4294901760
    %2229 = vmatpush1.msra.mxu0 %v2228
    %v2230 = vand.u32 %v267, 4294901760
    %2231 = vmatprep.subr.mxu0 %v2230
    %v2232 = vand.u32 %v266, 4294901760
    %2233 = vmatpush1.msra.mxu0 %v2232
    %v2234 = vand.u32 %v269, 4294901760
    %2235 = vmatprep.subr.mxu0 %v2234
    %v2236 = vand.u32 %v268, 4294901760
    %2237 = vmatpush1.msra.mxu0 %v2236
    %2238 = vmatprep.subr.mxu0 0.0
    %2239 = vmatpush1.msra.mxu0 0.0
    %2240 = vmatprep.subr.mxu0 0.0
    %2241 = vmatpush1.msra.mxu0 0.0
    %2242 = vmatprep.subr.mxu0 0.0
    %2243 = vmatpush1.msra.mxu0 0.0
    %2244 = vmatprep.subr.mxu0 0.0
    %2245 = vmatpush1.msra.mxu0 0.0
    %2246 = vmatprep.subr.mxu0 0.0
    %2247 = vmatpush1.msra.mxu0 0.0
    %2248 = vmatprep.subr.mxu0 0.0
    %2249 = vmatpush1.msra.mxu0 0.0
    %2250 = vmatprep.subr.mxu0 0.0
    %2251 = vmatpush1.msra.mxu0 0.0
    %2252 = vmatprep.subr.mxu0 0.0
    %2253 = vmatpush1.msra.mxu0 0.0
    %2254 = vmatprep.subr.mxu0 0.0
    %2255 = vmatpush1.msra.mxu0 0.0
    %2256 = vmatprep.subr.mxu0 0.0
    %2257 = vmatpush1.msra.mxu0 0.0
    %2258 = vmatprep.subr.mxu0 0.0
    %2259 = vmatpush1.msra.mxu0 0.0
    %2260 = vmatprep.subr.mxu0 0.0
    %2261 = vmatpush1.msra.mxu0 0.0
    %2262 = vmatprep.subr.mxu0 0.0
    %2263 = vmatpush1.msra.mxu0 0.0
    %2264 = vmatprep.subr.mxu0 0.0
    %2265 = vmatpush1.msra.mxu0 0.0
    %2266 = vmatprep.subr.mxu0 0.0
    %2267 = vmatpush1.msra.mxu0 0.0
    %2268 = vmatprep.subr.mxu0 0.0
    %2269 = vmatpush1.msra.mxu0 0.0
    %2270 = vmatprep.subr.mxu0 0.0
    %2271 = vmatpush1.msra.mxu0 0.0
    %2272 = vmatprep.subr.mxu0 0.0
    %2273 = vmatpush1.msra.mxu0 0.0
    %2274 = vmatprep.subr.mxu0 0.0
    %2275 = vmatpush1.msra.mxu0 0.0
    %2276 = vmatprep.subr.mxu0 0.0
    %2277 = vmatpush1.msra.mxu0 0.0
    %2278 = vmatprep.subr.mxu0 0.0
    %2279 = vmatpush1.msra.mxu0 0.0
    %2280 = vmatprep.subr.mxu0 0.0
    %2281 = vmatpush1.msra.mxu0 0.0
    %2282 = vmatprep.subr.mxu0 0.0
    %2283 = vmatpush1.msra.mxu0 0.0
    %2284 = vmatprep.subr.mxu0 0.0
    %2285 = vmatpush1.msra.mxu0 0.0
    %2286 = vmatprep.mubr.f32.mxu0 0.0
    %v2287 = vand.u32 %v1645, 4294901760
    %2288 = vmatmul.mubr.f32.gmra.mrb[0].mxu0 %v2287
    %v2289 = vpop.f32.mrb[0].mxu0
    %v2290 = vadd.f32 %v2202, %v2289
    %v2291 = vpop.f32.mrb[0].mxu0
    %v2292 = vadd.f32 %v2204, %v2291
    %2293 = vdwg.mxu0
    %v2294 = vadd.f32 %v1643, %v2290
    %v2295 = vxor.u32 %v2294, 2147483648
    %v2296 = vmul.f32 %v2295, 1.442695
    %v2297 = vpow.pop %v2296
    %v2298 = vadd.f32 %v2297, 1.0
    %v2299 = vrcp.pop %v2298
    %v2300 = vmul.f32 1.0, %v2299
    %v2301 = vadd.f32 %v2292, %v275
    %v2302 = vmul.f32 %v2300, %v2301
    %v2303 = vadd.f32 %v1644, %v2302
    %v2304 = vtanh.pop %v2303
    %v2305 = vsub.f32 1.0, %v2300
    %2307 = vrot.lane.b32.xlu0 %v2304, 64
    %v2308 = vpop.permute.xlu0 %2307
    %v2310 = vmul.f32 %v2305, %v2308
    %v2311 = vmul.f32 %v2300, %v1633
    %v2312 = vadd.f32 %v2310, %v2311
    %2314 = vrot.lane.b32.xlu0 %v2312, 64
    %v2315 = vpop.permute.xlu0 %2314
    %s2317 = scalar_lea.vmem [#allocation3], 16
    %2318 = vst.msk [vmem:[%s2317] sm:$0xff] %vm283, %v2315
    %s2319 = smul.u32 3, 2
    %s2320 = smul.addr %s2319, 8
    %s2321 = scalar_lea.vmem [#allocation2], %s2320
    %v2322 = vld [vmem:[%s2321] sm:$0xff]
    %v2323 = vld [vmem:[%s2321 + $0x8] sm:$0xff]
    %v2324 = vsel %vm283, %v2315, 0
    %v2326 = vand.u32 %v255, 4294901760
    %2327 = vmatprep.subr.mxu0 %v2326
    %v2328 = vand.u32 %v254, 4294901760
    %2329 = vmatpush1.msra.mxu0 %v2328
    %v2330 = vand.u32 %v257, 4294901760
    %2331 = vmatprep.subr.mxu0 %v2330
    %v2332 = vand.u32 %v256, 4294901760
    %2333 = vmatpush1.msra.mxu0 %v2332
    %v2334 = vand.u32 %v259, 4294901760
    %2335 = vmatprep.subr.mxu0 %v2334
    %v2336 = vand.u32 %v258, 4294901760
    %2337 = vmatpush1.msra.mxu0 %v2336
    %v2338 = vand.u32 %v261, 4294901760
    %2339 = vmatprep.subr.mxu0 %v2338
    %v2340 = vand.u32 %v260, 4294901760
    %2341 = vmatpush1.msra.mxu0 %v2340
    %v2342 = vand.u32 %v263, 4294901760
    %2343 = vmatprep.subr.mxu0 %v2342
    %v2344 = vand.u32 %v262, 4294901760
    %2345 = vmatpush1.msra.mxu0 %v2344
    %v2346 = vand.u32 %v265, 4294901760
    %2347 = vmatprep.subr.mxu0 %v2346
    %v2348 = vand.u32 %v264, 4294901760
    %2349 = vmatpush1.msra.mxu0 %v2348
    %v2350 = vand.u32 %v267, 4294901760
    %2351 = vmatprep.subr.mxu0 %v2350
    %v2352 = vand.u32 %v266, 4294901760
    %2353 = vmatpush1.msra.mxu0 %v2352
    %v2354 = vand.u32 %v269, 4294901760
    %2355 = vmatprep.subr.mxu0 %v2354
    %v2356 = vand.u32 %v268, 4294901760
    %2357 = vmatpush1.msra.mxu0 %v2356
    %2358 = vmatprep.subr.mxu0 0.0
    %2359 = vmatpush1.msra.mxu0 0.0
    %2360 = vmatprep.subr.mxu0 0.0
    %2361 = vmatpush1.msra.mxu0 0.0
    %2362 = vmatprep.subr.mxu0 0.0
    %2363 = vmatpush1.msra.mxu0 0.0
    %2364 = vmatprep.subr.mxu0 0.0
    %2365 = vmatpush1.msra.mxu0 0.0
    %2366 = vmatprep.subr.mxu0 0.0
    %2367 = vmatpush1.msra.mxu0 0.0
    %2368 = vmatprep.subr.mxu0 0.0
    %2369 = vmatpush1.msra.mxu0 0.0
    %2370 = vmatprep.subr.mxu0 0.0
    %2371 = vmatpush1.msra.mxu0 0.0
    %2372 = vmatprep.subr.mxu0 0.0
    %2373 = vmatpush1.msra.mxu0 0.0
    %2374 = vmatprep.subr.mxu0 0.0
    %2375 = vmatpush1.msra.mxu0 0.0
    %2376 = vmatprep.subr.mxu0 0.0
    %2377 = vmatpush1.msra.mxu0 0.0
    %2378 = vmatprep.subr.mxu0 0.0
    %2379 = vmatpush1.msra.mxu0 0.0
    %2380 = vmatprep.subr.mxu0 0.0
    %2381 = vmatpush1.msra.mxu0 0.0
    %2382 = vmatprep.subr.mxu0 0.0
    %2383 = vmatpush1.msra.mxu0 0.0
    %2384 = vmatprep.subr.mxu0 0.0
    %2385 = vmatpush1.msra.mxu0 0.0
    %2386 = vmatprep.subr.mxu0 0.0
    %2387 = vmatpush1.msra.mxu0 0.0
    %2388 = vmatprep.subr.mxu0 0.0
    %2389 = vmatpush1.msra.mxu0 0.0
    %2390 = vmatprep.subr.mxu0 0.0
    %2391 = vmatpush1.msra.mxu0 0.0
    %2392 = vmatprep.subr.mxu0 0.0
    %2393 = vmatpush1.msra.mxu0 0.0
    %2394 = vmatprep.subr.mxu0 0.0
    %2395 = vmatpush1.msra.mxu0 0.0
    %2396 = vmatprep.subr.mxu0 0.0
    %2397 = vmatpush1.msra.mxu0 0.0
    %2398 = vmatprep.subr.mxu0 0.0
    %2399 = vmatpush1.msra.mxu0 0.0
    %2400 = vmatprep.subr.mxu0 0.0
    %2401 = vmatpush1.msra.mxu0 0.0
    %2402 = vmatprep.subr.mxu0 0.0
    %2403 = vmatpush1.msra.mxu0 0.0
    %2404 = vmatprep.subr.mxu0 0.0
    %2405 = vmatpush1.msra.mxu0 0.0
    %2406 = vmatprep.mubr.f32.mxu0 0.0
    %v2407 = vand.u32 %v2324, 4294901760
    %v2408 = vsub.f32 %v2324, %v2407
    %v2409 = vand.u32 %v2408, 4294901760
    %v2410 = vsub.f32 %v2408, %v2409
    %v2411 = vand.u32 %v2410, 4294901760
    %2412 = vmatmul.mubr.f32.gmra.mrb[0].mxu0 %v2411
    %v2413 = vpop.f32.mrb[0].mxu0
    %v2414 = vadd.f32 0.0, %v2413
    %v2415 = vpop.f32.mrb[0].mxu0
    %v2416 = vadd.f32 0.0, %v2415
    %2417 = vdwg.mxu0
    %v2418 = vand.u32 %v255, 4294901760
    %v2419 = vsub.f32 %v255, %v2418
    %v2420 = vand.u32 %v2419, 4294901760
    %v2421 = vsub.f32 %v2419, %v2420
    %v2422 = vand.u32 %v2421, 4294901760
    %2423 = vmatprep.subr.mxu0 %v2422
    %v2424 = vand.u32 %v254, 4294901760
    %v2425 = vsub.f32 %v254, %v2424
    %v2426 = vand.u32 %v2425, 4294901760
    %v2427 = vsub.f32 %v2425, %v2426
    %v2428 = vand.u32 %v2427, 4294901760
    %2429 = vmatpush1.msra.mxu0 %v2428
    %v2430 = vand.u32 %v257, 4294901760
    %v2431 = vsub.f32 %v257, %v2430
    %v2432 = vand.u32 %v2431, 4294901760
    %v2433 = vsub.f32 %v2431, %v2432
    %v2434 = vand.u32 %v2433, 4294901760
    %2435 = vmatprep.subr.mxu0 %v2434
    %v2436 = vand.u32 %v256, 4294901760
    %v2437 = vsub.f32 %v256, %v2436
    %v2438 = vand.u32 %v2437, 4294901760
    %v2439 = vsub.f32 %v2437, %v2438
    %v2440 = vand.u32 %v2439, 4294901760
    %2441 = vmatpush1.msra.mxu0 %v2440
    %v2442 = vand.u32 %v259, 4294901760
    %v2443 = vsub.f32 %v259, %v2442
    %v2444 = vand.u32 %v2443, 4294901760
    %v2445 = vsub.f32 %v2443, %v2444
    %v2446 = vand.u32 %v2445, 4294901760
    %2447 = vmatprep.subr.mxu0 %v2446
    %v2448 = vand.u32 %v258, 4294901760
    %v2449 = vsub.f32 %v258, %v2448
    %v2450 = vand.u32 %v2449, 4294901760
    %v2451 = vsub.f32 %v2449, %v2450
    %v2452 = vand.u32 %v2451, 4294901760
    %2453 = vmatpush1.msra.mxu0 %v2452
    %v2454 = vand.u32 %v261, 4294901760
    %v2455 = vsub.f32 %v261, %v2454
    %v2456 = vand.u32 %v2455, 4294901760
    %v2457 = vsub.f32 %v2455, %v2456
    %v2458 = vand.u32 %v2457, 4294901760
    %2459 = vmatprep.subr.mxu0 %v2458
    %v2460 = vand.u32 %v260, 4294901760
    %v2461 = vsub.f32 %v260, %v2460
    %v2462 = vand.u32 %v2461, 4294901760
    %v2463 = vsub.f32 %v2461, %v2462
    %v2464 = vand.u32 %v2463, 4294901760
    %2465 = vmatpush1.msra.mxu0 %v2464
    %v2466 = vand.u32 %v263, 4294901760
    %v2467 = vsub.f32 %v263, %v2466
    %v2468 = vand.u32 %v2467, 4294901760
    %v2469 = vsub.f32 %v2467, %v2468
    %v2470 = vand.u32 %v2469, 4294901760
    %2471 = vmatprep.subr.mxu0 %v2470
    %v2472 = vand.u32 %v262, 4294901760
    %v2473 = vsub.f32 %v262, %v2472
    %v2474 = vand.u32 %v2473, 4294901760
    %v2475 = vsub.f32 %v2473, %v2474
    %v2476 = vand.u32 %v2475, 4294901760
    %2477 = vmatpush1.msra.mxu0 %v2476
    %v2478 = vand.u32 %v265, 4294901760
    %v2479 = vsub.f32 %v265, %v2478
    %v2480 = vand.u32 %v2479, 4294901760
    %v2481 = vsub.f32 %v2479, %v2480
    %v2482 = vand.u32 %v2481, 4294901760
    %2483 = vmatprep.subr.mxu0 %v2482
    %v2484 = vand.u32 %v264, 4294901760
    %v2485 = vsub.f32 %v264, %v2484
    %v2486 = vand.u32 %v2485, 4294901760
    %v2487 = vsub.f32 %v2485, %v2486
    %v2488 = vand.u32 %v2487, 4294901760
    %2489 = vmatpush1.msra.mxu0 %v2488
    %v2490 = vand.u32 %v267, 4294901760
    %v2491 = vsub.f32 %v267, %v2490
    %v2492 = vand.u32 %v2491, 4294901760
    %v2493 = vsub.f32 %v2491, %v2492
    %v2494 = vand.u32 %v2493, 4294901760
    %2495 = vmatprep.subr.mxu0 %v2494
    %v2496 = vand.u32 %v266, 4294901760
    %v2497 = vsub.f32 %v266, %v2496
    %v2498 = vand.u32 %v2497, 4294901760
    %v2499 = vsub.f32 %v2497, %v2498
    %v2500 = vand.u32 %v2499, 4294901760
    %2501 = vmatpush1.msra.mxu0 %v2500
    %v2502 = vand.u32 %v269, 4294901760
    %v2503 = vsub.f32 %v269, %v2502
    %v2504 = vand.u32 %v2503, 4294901760
    %v2505 = vsub.f32 %v2503, %v2504
    %v2506 = vand.u32 %v2505, 4294901760
    %2507 = vmatprep.subr.mxu0 %v2506
    %v2508 = vand.u32 %v268, 4294901760
    %v2509 = vsub.f32 %v268, %v2508
    %v2510 = vand.u32 %v2509, 4294901760
    %v2511 = vsub.f32 %v2509, %v2510
    %v2512 = vand.u32 %v2511, 4294901760
    %2513 = vmatpush1.msra.mxu0 %v2512
    %2514 = vmatprep.subr.mxu0 0.0
    %2515 = vmatpush1.msra.mxu0 0.0
    %2516 = vmatprep.subr.mxu0 0.0
    %2517 = vmatpush1.msra.mxu0 0.0
    %2518 = vmatprep.subr.mxu0 0.0
    %2519 = vmatpush1.msra.mxu0 0.0
    %2520 = vmatprep.subr.mxu0 0.0
    %2521 = vmatpush1.msra.mxu0 0.0
    %2522 = vmatprep.subr.mxu0 0.0
    %2523 = vmatpush1.msra.mxu0 0.0
    %2524 = vmatprep.subr.mxu0 0.0
    %2525 = vmatpush1.msra.mxu0 0.0
    %2526 = vmatprep.subr.mxu0 0.0
    %2527 = vmatpush1.msra.mxu0 0.0
    %2528 = vmatprep.subr.mxu0 0.0
    %2529 = vmatpush1.msra.mxu0 0.0
    %2530 = vmatprep.subr.mxu0 0.0
    %2531 = vmatpush1.msra.mxu0 0.0
    %2532 = vmatprep.subr.mxu0 0.0
    %2533 = vmatpush1.msra.mxu0 0.0
    %2534 = vmatprep.subr.mxu0 0.0
    %2535 = vmatpush1.msra.mxu0 0.0
    %2536 = vmatprep.subr.mxu0 0.0
    %2537 = vmatpush1.msra.mxu0 0.0
    %2538 = vmatprep.subr.mxu0 0.0
    %2539 = vmatpush1.msra.mxu0 0.0
    %2540 = vmatprep.subr.mxu0 0.0
    %2541 = vmatpush1.msra.mxu0 0.0
    %2542 = vmatprep.subr.mxu0 0.0
    %2543 = vmatpush1.msra.mxu0 0.0
    %2544 = vmatprep.subr.mxu0 0.0
    %2545 = vmatpush1.msra.mxu0 0.0
    %2546 = vmatprep.subr.mxu0 0.0
    %2547 = vmatpush1.msra.mxu0 0.0
    %2548 = vmatprep.subr.mxu0 0.0
    %2549 = vmatpush1.msra.mxu0 0.0
    %2550 = vmatprep.subr.mxu0 0.0
    %2551 = vmatpush1.msra.mxu0 0.0
    %2552 = vmatprep.subr.mxu0 0.0
    %2553 = vmatpush1.msra.mxu0 0.0
    %2554 = vmatprep.subr.mxu0 0.0
    %2555 = vmatpush1.msra.mxu0 0.0
    %2556 = vmatprep.subr.mxu0 0.0
    %2557 = vmatpush1.msra.mxu0 0.0
    %2558 = vmatprep.subr.mxu0 0.0
    %2559 = vmatpush1.msra.mxu0 0.0
    %2560 = vmatprep.subr.mxu0 0.0
    %2561 = vmatpush1.msra.mxu0 0.0
    %2562 = vmatprep.mubr.f32.mxu0 0.0
    %v2563 = vand.u32 %v2324, 4294901760
    %2564 = vmatmul.mubr.f32.gmra.mrb[0].mxu0 %v2563
    %v2565 = vpop.f32.mrb[0].mxu0
    %v2566 = vadd.f32 %v2414, %v2565
    %v2567 = vpop.f32.mrb[0].mxu0
    %v2568 = vadd.f32 %v2416, %v2567
    %2569 = vdwg.mxu0
    %v2570 = vand.u32 %v255, 4294901760
    %v2571 = vsub.f32 %v255, %v2570
    %2572 = vmatprep.subr.mxu0 %v2571
    %v2573 = vand.u32 %v254, 4294901760
    %v2574 = vsub.f32 %v254, %v2573
    %2575 = vmatpush1.msra.mxu0 %v2574
    %v2576 = vand.u32 %v257, 4294901760
    %v2577 = vsub.f32 %v257, %v2576
    %2578 = vmatprep.subr.mxu0 %v2577
    %v2579 = vand.u32 %v256, 4294901760
    %v2580 = vsub.f32 %v256, %v2579
    %2581 = vmatpush1.msra.mxu0 %v2580
    %v2582 = vand.u32 %v259, 4294901760
    %v2583 = vsub.f32 %v259, %v2582
    %2584 = vmatprep.subr.mxu0 %v2583
    %v2585 = vand.u32 %v258, 4294901760
    %v2586 = vsub.f32 %v258, %v2585
    %2587 = vmatpush1.msra.mxu0 %v2586
    %v2588 = vand.u32 %v261, 4294901760
    %v2589 = vsub.f32 %v261, %v2588
    %2590 = vmatprep.subr.mxu0 %v2589
    %v2591 = vand.u32 %v260, 4294901760
    %v2592 = vsub.f32 %v260, %v2591
    %2593 = vmatpush1.msra.mxu0 %v2592
    %v2594 = vand.u32 %v263, 4294901760
    %v2595 = vsub.f32 %v263, %v2594
    %2596 = vmatprep.subr.mxu0 %v2595
    %v2597 = vand.u32 %v262, 4294901760
    %v2598 = vsub.f32 %v262, %v2597
    %2599 = vmatpush1.msra.mxu0 %v2598
    %v2600 = vand.u32 %v265, 4294901760
    %v2601 = vsub.f32 %v265, %v2600
    %2602 = vmatprep.subr.mxu0 %v2601
    %v2603 = vand.u32 %v264, 4294901760
    %v2604 = vsub.f32 %v264, %v2603
    %2605 = vmatpush1.msra.mxu0 %v2604
    %v2606 = vand.u32 %v267, 4294901760
    %v2607 = vsub.f32 %v267, %v2606
    %2608 = vmatprep.subr.mxu0 %v2607
    %v2609 = vand.u32 %v266, 4294901760
    %v2610 = vsub.f32 %v266, %v2609
    %2611 = vmatpush1.msra.mxu0 %v2610
    %v2612 = vand.u32 %v269, 4294901760
    %v2613 = vsub.f32 %v269, %v2612
    %2614 = vmatprep.subr.mxu0 %v2613
    %v2615 = vand.u32 %v268, 4294901760
    %v2616 = vsub.f32 %v268, %v2615
    %2617 = vmatpush1.msra.mxu0 %v2616
    %2618 = vmatprep.subr.mxu0 0.0
    %2619 = vmatpush1.msra.mxu0 0.0
    %2620 = vmatprep.subr.mxu0 0.0
    %2621 = vmatpush1.msra.mxu0 0.0
    %2622 = vmatprep.subr.mxu0 0.0
    %2623 = vmatpush1.msra.mxu0 0.0
    %2624 = vmatprep.subr.mxu0 0.0
    %2625 = vmatpush1.msra.mxu0 0.0
    %2626 = vmatprep.subr.mxu0 0.0
    %2627 = vmatpush1.msra.mxu0 0.0
    %2628 = vmatprep.subr.mxu0 0.0
    %2629 = vmatpush1.msra.mxu0 0.0
    %2630 = vmatprep.subr.mxu0 0.0
    %2631 = vmatpush1.msra.mxu0 0.0
    %2632 = vmatprep.subr.mxu0 0.0
    %2633 = vmatpush1.msra.mxu0 0.0
    %2634 = vmatprep.subr.mxu0 0.0
    %2635 = vmatpush1.msra.mxu0 0.0
    %2636 = vmatprep.subr.mxu0 0.0
    %2637 = vmatpush1.msra.mxu0 0.0
    %2638 = vmatprep.subr.mxu0 0.0
    %2639 = vmatpush1.msra.mxu0 0.0
    %2640 = vmatprep.subr.mxu0 0.0
    %2641 = vmatpush1.msra.mxu0 0.0
    %2642 = vmatprep.subr.mxu0 0.0
    %2643 = vmatpush1.msra.mxu0 0.0
    %2644 = vmatprep.subr.mxu0 0.0
    %2645 = vmatpush1.msra.mxu0 0.0
    %2646 = vmatprep.subr.mxu0 0.0
    %2647 = vmatpush1.msra.mxu0 0.0
    %2648 = vmatprep.subr.mxu0 0.0
    %2649 = vmatpush1.msra.mxu0 0.0
    %2650 = vmatprep.subr.mxu0 0.0
    %2651 = vmatpush1.msra.mxu0 0.0
    %2652 = vmatprep.subr.mxu0 0.0
    %2653 = vmatpush1.msra.mxu0 0.0
    %2654 = vmatprep.subr.mxu0 0.0
    %2655 = vmatpush1.msra.mxu0 0.0
    %2656 = vmatprep.subr.mxu0 0.0
    %2657 = vmatpush1.msra.mxu0 0.0
    %2658 = vmatprep.subr.mxu0 0.0
    %2659 = vmatpush1.msra.mxu0 0.0
    %2660 = vmatprep.subr.mxu0 0.0
    %2661 = vmatpush1.msra.mxu0 0.0
    %2662 = vmatprep.subr.mxu0 0.0
    %2663 = vmatpush1.msra.mxu0 0.0
    %2664 = vmatprep.subr.mxu0 0.0
    %2665 = vmatpush1.msra.mxu0 0.0
    %2666 = vmatprep.mubr.f32.mxu0 0.0
    %v2667 = vand.u32 %v2324, 4294901760
    %v2668 = vsub.f32 %v2324, %v2667
    %2669 = vmatmul.mubr.f32.gmra.mrb[0].mxu0 %v2668
    %v2670 = vpop.f32.mrb[0].mxu0
    %v2671 = vadd.f32 %v2566, %v2670
    %v2672 = vpop.f32.mrb[0].mxu0
    %v2673 = vadd.f32 %v2568, %v2672
    %2674 = vdwg.mxu0
    %v2675 = vand.u32 %v255, 4294901760
    %2676 = vmatprep.subr.mxu0 %v2675
    %v2677 = vand.u32 %v254, 4294901760
    %2678 = vmatpush1.msra.mxu0 %v2677
    %v2679 = vand.u32 %v257, 4294901760
    %2680 = vmatprep.subr.mxu0 %v2679
    %v2681 = vand.u32 %v256, 4294901760
    %2682 = vmatpush1.msra.mxu0 %v2681
    %v2683 = vand.u32 %v259, 4294901760
    %2684 = vmatprep.subr.mxu0 %v2683
    %v2685 = vand.u32 %v258, 4294901760
    %2686 = vmatpush1.msra.mxu0 %v2685
    %v2687 = vand.u32 %v261, 4294901760
    %2688 = vmatprep.subr.mxu0 %v2687
    %v2689 = vand.u32 %v260, 4294901760
    %2690 = vmatpush1.msra.mxu0 %v2689
    %v2691 = vand.u32 %v263, 4294901760
    %2692 = vmatprep.subr.mxu0 %v2691
    %v2693 = vand.u32 %v262, 4294901760
    %2694 = vmatpush1.msra.mxu0 %v2693
    %v2695 = vand.u32 %v265, 4294901760
    %2696 = vmatprep.subr.mxu0 %v2695
    %v2697 = vand.u32 %v264, 4294901760
    %2698 = vmatpush1.msra.mxu0 %v2697
    %v2699 = vand.u32 %v267, 4294901760
    %2700 = vmatprep.subr.mxu0 %v2699
    %v2701 = vand.u32 %v266, 4294901760
    %2702 = vmatpush1.msra.mxu0 %v2701
    %v2703 = vand.u32 %v269, 4294901760
    %2704 = vmatprep.subr.mxu0 %v2703
    %v2705 = vand.u32 %v268, 4294901760
    %2706 = vmatpush1.msra.mxu0 %v2705
    %2707 = vmatprep.subr.mxu0 0.0
    %2708 = vmatpush1.msra.mxu0 0.0
    %2709 = vmatprep.subr.mxu0 0.0
    %2710 = vmatpush1.msra.mxu0 0.0
    %2711 = vmatprep.subr.mxu0 0.0
    %2712 = vmatpush1.msra.mxu0 0.0
    %2713 = vmatprep.subr.mxu0 0.0
    %2714 = vmatpush1.msra.mxu0 0.0
    %2715 = vmatprep.subr.mxu0 0.0
    %2716 = vmatpush1.msra.mxu0 0.0
    %2717 = vmatprep.subr.mxu0 0.0
    %2718 = vmatpush1.msra.mxu0 0.0
    %2719 = vmatprep.subr.mxu0 0.0
    %2720 = vmatpush1.msra.mxu0 0.0
    %2721 = vmatprep.subr.mxu0 0.0
    %2722 = vmatpush1.msra.mxu0 0.0
    %2723 = vmatprep.subr.mxu0 0.0
    %2724 = vmatpush1.msra.mxu0 0.0
    %2725 = vmatprep.subr.mxu0 0.0
    %2726 = vmatpush1.msra.mxu0 0.0
    %2727 = vmatprep.subr.mxu0 0.0
    %2728 = vmatpush1.msra.mxu0 0.0
    %2729 = vmatprep.subr.mxu0 0.0
    %2730 = vmatpush1.msra.mxu0 0.0
    %2731 = vmatprep.subr.mxu0 0.0
    %2732 = vmatpush1.msra.mxu0 0.0
    %2733 = vmatprep.subr.mxu0 0.0
    %2734 = vmatpush1.msra.mxu0 0.0
    %2735 = vmatprep.subr.mxu0 0.0
    %2736 = vmatpush1.msra.mxu0 0.0
    %2737 = vmatprep.subr.mxu0 0.0
    %2738 = vmatpush1.msra.mxu0 0.0
    %2739 = vmatprep.subr.mxu0 0.0
    %2740 = vmatpush1.msra.mxu0 0.0
    %2741 = vmatprep.subr.mxu0 0.0
    %2742 = vmatpush1.msra.mxu0 0.0
    %2743 = vmatprep.subr.mxu0 0.0
    %2744 = vmatpush1.msra.mxu0 0.0
    %2745 = vmatprep.subr.mxu0 0.0
    %2746 = vmatpush1.msra.mxu0 0.0
    %2747 = vmatprep.subr.mxu0 0.0
    %2748 = vmatpush1.msra.mxu0 0.0
    %2749 = vmatprep.subr.mxu0 0.0
    %2750 = vmatpush1.msra.mxu0 0.0
    %2751 = vmatprep.subr.mxu0 0.0
    %2752 = vmatpush1.msra.mxu0 0.0
    %2753 = vmatprep.subr.mxu0 0.0
    %2754 = vmatpush1.msra.mxu0 0.0
    %2755 = vmatprep.mubr.f32.mxu0 0.0
    %v2756 = vand.u32 %v2324, 4294901760
    %v2757 = vsub.f32 %v2324, %v2756
    %v2758 = vand.u32 %v2757, 4294901760
    %2759 = vmatmul.mubr.f32.gmra.mrb[0].mxu0 %v2758
    %v2760 = vpop.f32.mrb[0].mxu0
    %v2761 = vadd.f32 %v2671, %v2760
    %v2762 = vpop.f32.mrb[0].mxu0
    %v2763 = vadd.f32 %v2673, %v2762
    %2764 = vdwg.mxu0
    %v2765 = vand.u32 %v255, 4294901760
    %v2766 = vsub.f32 %v255, %v2765
    %v2767 = vand.u32 %v2766, 4294901760
    %2768 = vmatprep.subr.mxu0 %v2767
    %v2769 = vand.u32 %v254, 4294901760
    %v2770 = vsub.f32 %v254, %v2769
    %v2771 = vand.u32 %v2770, 4294901760
    %2772 = vmatpush1.msra.mxu0 %v2771
    %v2773 = vand.u32 %v257, 4294901760
    %v2774 = vsub.f32 %v257, %v2773
    %v2775 = vand.u32 %v2774, 4294901760
    %2776 = vmatprep.subr.mxu0 %v2775
    %v2777 = vand.u32 %v256, 4294901760
    %v2778 = vsub.f32 %v256, %v2777
    %v2779 = vand.u32 %v2778, 4294901760
    %2780 = vmatpush1.msra.mxu0 %v2779
    %v2781 = vand.u32 %v259, 4294901760
    %v2782 = vsub.f32 %v259, %v2781
    %v2783 = vand.u32 %v2782, 4294901760
    %2784 = vmatprep.subr.mxu0 %v2783
    %v2785 = vand.u32 %v258, 4294901760
    %v2786 = vsub.f32 %v258, %v2785
    %v2787 = vand.u32 %v2786, 4294901760
    %2788 = vmatpush1.msra.mxu0 %v2787
    %v2789 = vand.u32 %v261, 4294901760
    %v2790 = vsub.f32 %v261, %v2789
    %v2791 = vand.u32 %v2790, 4294901760
    %2792 = vmatprep.subr.mxu0 %v2791
    %v2793 = vand.u32 %v260, 4294901760
    %v2794 = vsub.f32 %v260, %v2793
    %v2795 = vand.u32 %v2794, 4294901760
    %2796 = vmatpush1.msra.mxu0 %v2795
    %v2797 = vand.u32 %v263, 4294901760
    %v2798 = vsub.f32 %v263, %v2797
    %v2799 = vand.u32 %v2798, 4294901760
    %2800 = vmatprep.subr.mxu0 %v2799
    %v2801 = vand.u32 %v262, 4294901760
    %v2802 = vsub.f32 %v262, %v2801
    %v2803 = vand.u32 %v2802, 4294901760
    %2804 = vmatpush1.msra.mxu0 %v2803
    %v2805 = vand.u32 %v265, 4294901760
    %v2806 = vsub.f32 %v265, %v2805
    %v2807 = vand.u32 %v2806, 4294901760
    %2808 = vmatprep.subr.mxu0 %v2807
    %v2809 = vand.u32 %v264, 4294901760
    %v2810 = vsub.f32 %v264, %v2809
    %v2811 = vand.u32 %v2810, 4294901760
    %2812 = vmatpush1.msra.mxu0 %v2811
    %v2813 = vand.u32 %v267, 4294901760
    %v2814 = vsub.f32 %v267, %v2813
    %v2815 = vand.u32 %v2814, 4294901760
    %2816 = vmatprep.subr.mxu0 %v2815
    %v2817 = vand.u32 %v266, 4294901760
    %v2818 = vsub.f32 %v266, %v2817
    %v2819 = vand.u32 %v2818, 4294901760
    %2820 = vmatpush1.msra.mxu0 %v2819
    %v2821 = vand.u32 %v269, 4294901760
    %v2822 = vsub.f32 %v269, %v2821
    %v2823 = vand.u32 %v2822, 4294901760
    %2824 = vmatprep.subr.mxu0 %v2823
    %v2825 = vand.u32 %v268, 4294901760
    %v2826 = vsub.f32 %v268, %v2825
    %v2827 = vand.u32 %v2826, 4294901760
    %2828 = vmatpush1.msra.mxu0 %v2827
    %2829 = vmatprep.subr.mxu0 0.0
    %2830 = vmatpush1.msra.mxu0 0.0
    %2831 = vmatprep.subr.mxu0 0.0
    %2832 = vmatpush1.msra.mxu0 0.0
    %2833 = vmatprep.subr.mxu0 0.0
    %2834 = vmatpush1.msra.mxu0 0.0
    %2835 = vmatprep.subr.mxu0 0.0
    %2836 = vmatpush1.msra.mxu0 0.0
    %2837 = vmatprep.subr.mxu0 0.0
    %2838 = vmatpush1.msra.mxu0 0.0
    %2839 = vmatprep.subr.mxu0 0.0
    %2840 = vmatpush1.msra.mxu0 0.0
    %2841 = vmatprep.subr.mxu0 0.0
    %2842 = vmatpush1.msra.mxu0 0.0
    %2843 = vmatprep.subr.mxu0 0.0
    %2844 = vmatpush1.msra.mxu0 0.0
    %2845 = vmatprep.subr.mxu0 0.0
    %2846 = vmatpush1.msra.mxu0 0.0
    %2847 = vmatprep.subr.mxu0 0.0
    %2848 = vmatpush1.msra.mxu0 0.0
    %2849 = vmatprep.subr.mxu0 0.0
    %2850 = vmatpush1.msra.mxu0 0.0
    %2851 = vmatprep.subr.mxu0 0.0
    %2852 = vmatpush1.msra.mxu0 0.0
    %2853 = vmatprep.subr.mxu0 0.0
    %2854 = vmatpush1.msra.mxu0 0.0
    %2855 = vmatprep.subr.mxu0 0.0
    %2856 = vmatpush1.msra.mxu0 0.0
    %2857 = vmatprep.subr.mxu0 0.0
    %2858 = vmatpush1.msra.mxu0 0.0
    %2859 = vmatprep.subr.mxu0 0.0
    %2860 = vmatpush1.msra.mxu0 0.0
    %2861 = vmatprep.subr.mxu0 0.0
    %2862 = vmatpush1.msra.mxu0 0.0
    %2863 = vmatprep.subr.mxu0 0.0
    %2864 = vmatpush1.msra.mxu0 0.0
    %2865 = vmatprep.subr.mxu0 0.0
    %2866 = vmatpush1.msra.mxu0 0.0
    %2867 = vmatprep.subr.mxu0 0.0
    %2868 = vmatpush1.msra.mxu0 0.0
    %2869 = vmatprep.subr.mxu0 0.0
    %2870 = vmatpush1.msra.mxu0 0.0
    %2871 = vmatprep.subr.mxu0 0.0
    %2872 = vmatpush1.msra.mxu0 0.0
    %2873 = vmatprep.subr.mxu0 0.0
    %2874 = vmatpush1.msra.mxu0 0.0
    %2875 = vmatprep.subr.mxu0 0.0
    %2876 = vmatpush1.msra.mxu0 0.0
    %2877 = vmatprep.mubr.f32.mxu0 0.0
    %v2878 = vand.u32 %v2324, 4294901760
    %2879 = vmatmul.mubr.f32.gmra.mrb[0].mxu0 %v2878
    %v2880 = vpop.f32.mrb[0].mxu0
    %v2881 = vadd.f32 %v2761, %v2880
    %v2882 = vpop.f32.mrb[0].mxu0
    %v2883 = vadd.f32 %v2763, %v2882
    %2884 = vdwg.mxu0
    %v2885 = vand.u32 %v255, 4294901760
    %2886 = vmatprep.subr.mxu0 %v2885
    %v2887 = vand.u32 %v254, 4294901760
    %2888 = vmatpush1.msra.mxu0 %v2887
    %v2889 = vand.u32 %v257, 4294901760
    %2890 = vmatprep.subr.mxu0 %v2889
    %v2891 = vand.u32 %v256, 4294901760
    %2892 = vmatpush1.msra.mxu0 %v2891
    %v2893 = vand.u32 %v259, 4294901760
    %2894 = vmatprep.subr.mxu0 %v2893
    %v2895 = vand.u32 %v258, 4294901760
    %2896 = vmatpush1.msra.mxu0 %v2895
    %v2897 = vand.u32 %v261, 4294901760
    %2898 = vmatprep.subr.mxu0 %v2897
    %v2899 = vand.u32 %v260, 4294901760
    %2900 = vmatpush1.msra.mxu0 %v2899
    %v2901 = vand.u32 %v263, 4294901760
    %2902 = vmatprep.subr.mxu0 %v2901
    %v2903 = vand.u32 %v262, 4294901760
    %2904 = vmatpush1.msra.mxu0 %v2903
    %v2905 = vand.u32 %v265, 4294901760
    %2906 = vmatprep.subr.mxu0 %v2905
    %v2907 = vand.u32 %v264, 4294901760
    %2908 = vmatpush1.msra.mxu0 %v2907
    %v2909 = vand.u32 %v267, 4294901760
    %2910 = vmatprep.subr.mxu0 %v2909
    %v2911 = vand.u32 %v266, 4294901760
    %2912 = vmatpush1.msra.mxu0 %v2911
    %v2913 = vand.u32 %v269, 4294901760
    %2914 = vmatprep.subr.mxu0 %v2913
    %v2915 = vand.u32 %v268, 4294901760
    %2916 = vmatpush1.msra.mxu0 %v2915
    %2917 = vmatprep.subr.mxu0 0.0
    %2918 = vmatpush1.msra.mxu0 0.0
    %2919 = vmatprep.subr.mxu0 0.0
    %2920 = vmatpush1.msra.mxu0 0.0
    %2921 = vmatprep.subr.mxu0 0.0
    %2922 = vmatpush1.msra.mxu0 0.0
    %2923 = vmatprep.subr.mxu0 0.0
    %2924 = vmatpush1.msra.mxu0 0.0
    %2925 = vmatprep.subr.mxu0 0.0
    %2926 = vmatpush1.msra.mxu0 0.0
    %2927 = vmatprep.subr.mxu0 0.0
    %2928 = vmatpush1.msra.mxu0 0.0
    %2929 = vmatprep.subr.mxu0 0.0
    %2930 = vmatpush1.msra.mxu0 0.0
    %2931 = vmatprep.subr.mxu0 0.0
    %2932 = vmatpush1.msra.mxu0 0.0
    %2933 = vmatprep.subr.mxu0 0.0
    %2934 = vmatpush1.msra.mxu0 0.0
    %2935 = vmatprep.subr.mxu0 0.0
    %2936 = vmatpush1.msra.mxu0 0.0
    %2937 = vmatprep.subr.mxu0 0.0
    %2938 = vmatpush1.msra.mxu0 0.0
    %2939 = vmatprep.subr.mxu0 0.0
    %2940 = vmatpush1.msra.mxu0 0.0
    %2941 = vmatprep.subr.mxu0 0.0
    %2942 = vmatpush1.msra.mxu0 0.0
    %2943 = vmatprep.subr.mxu0 0.0
    %2944 = vmatpush1.msra.mxu0 0.0
    %2945 = vmatprep.subr.mxu0 0.0
    %2946 = vmatpush1.msra.mxu0 0.0
    %2947 = vmatprep.subr.mxu0 0.0
    %2948 = vmatpush1.msra.mxu0 0.0
    %2949 = vmatprep.subr.mxu0 0.0
    %2950 = vmatpush1.msra.mxu0 0.0
    %2951 = vmatprep.subr.mxu0 0.0
    %2952 = vmatpush1.msra.mxu0 0.0
    %2953 = vmatprep.subr.mxu0 0.0
    %2954 = vmatpush1.msra.mxu0 0.0
    %2955 = vmatprep.subr.mxu0 0.0
    %2956 = vmatpush1.msra.mxu0 0.0
    %2957 = vmatprep.subr.mxu0 0.0
    %2958 = vmatpush1.msra.mxu0 0.0
    %2959 = vmatprep.subr.mxu0 0.0
    %2960 = vmatpush1.msra.mxu0 0.0
    %2961 = vmatprep.subr.mxu0 0.0
    %2962 = vmatpush1.msra.mxu0 0.0
    %2963 = vmatprep.subr.mxu0 0.0
    %2964 = vmatpush1.msra.mxu0 0.0
    %2965 = vmatprep.mubr.f32.mxu0 0.0
    %v2966 = vand.u32 %v2324, 4294901760
    %2967 = vmatmul.mubr.f32.gmra.mrb[0].mxu0 %v2966
    %v2968 = vpop.f32.mrb[0].mxu0
    %v2969 = vadd.f32 %v2881, %v2968
    %v2970 = vpop.f32.mrb[0].mxu0
    %v2971 = vadd.f32 %v2883, %v2970
    %2972 = vdwg.mxu0
    %v2973 = vadd.f32 %v2322, %v2969
    %v2974 = vxor.u32 %v2973, 2147483648
    %v2975 = vmul.f32 %v2974, 1.442695
    %v2976 = vpow.pop %v2975
    %v2977 = vadd.f32 %v2976, 1.0
    %v2978 = vrcp.pop %v2977
    %v2979 = vmul.f32 1.0, %v2978
    %v2980 = vadd.f32 %v2971, %v275
    %v2981 = vmul.f32 %v2979, %v2980
    %v2982 = vadd.f32 %v2323, %v2981
    %v2983 = vtanh.pop %v2982
    %v2984 = vsub.f32 1.0, %v2979
    %2986 = vrot.lane.b32.xlu0 %v2983, 64
    %v2987 = vpop.permute.xlu0 %2986
    %v2989 = vmul.f32 %v2984, %v2987
    %v2990 = vmul.f32 %v2979, %v2312
    %v2991 = vadd.f32 %v2989, %v2990
    %2993 = vrot.lane.b32.xlu0 %v2991, 64
    %v2994 = vpop.permute.xlu0 %2993
    %s2996 = scalar_lea.vmem [#allocation3], 24
    %2997 = vst.msk [vmem:[%s2996] sm:$0xff] %vm283, %v2994
    %s2998 = smul.u32 4, 2
    %s2999 = smul.addr %s2998, 8
    %s3000 = scalar_lea.vmem [#allocation2], %s2999
    %v3001 = vld [vmem:[%s3000] sm:$0xff]
    %v3002 = vld [vmem:[%s3000 + $0x8] sm:$0xff]
    %v3003 = vsel %vm283, %v2994, 0
    %v3005 = vand.u32 %v255, 4294901760
    %3006 = vmatprep.subr.mxu0 %v3005
    %v3007 = vand.u32 %v254, 4294901760
    %3008 = vmatpush1.msra.mxu0 %v3007
    %v3009 = vand.u32 %v257, 4294901760
    %3010 = vmatprep.subr.mxu0 %v3009
    %v3011 = vand.u32 %v256, 4294901760
    %3012 = vmatpush1.msra.mxu0 %v3011
    %v3013 = vand.u32 %v259, 4294901760
    %3014 = vmatprep.subr.mxu0 %v3013
    %v3015 = vand.u32 %v258, 4294901760
    %3016 = vmatpush1.msra.mxu0 %v3015
    %v3017 = vand.u32 %v261, 4294901760
    %3018 = vmatprep.subr.mxu0 %v3017
    %v3019 = vand.u32 %v260, 4294901760
    %3020 = vmatpush1.msra.mxu0 %v3019
    %v3021 = vand.u32 %v263, 4294901760
    %3022 = vmatprep.subr.mxu0 %v3021
    %v3023 = vand.u32 %v262, 4294901760
    %3024 = vmatpush1.msra.mxu0 %v3023
    %v3025 = vand.u32 %v265, 4294901760
    %3026 = vmatprep.subr.mxu0 %v3025
    %v3027 = vand.u32 %v264, 4294901760
    %3028 = vmatpush1.msra.mxu0 %v3027
    %v3029 = vand.u32 %v267, 4294901760
    %3030 = vmatprep.subr.mxu0 %v3029
    %v3031 = vand.u32 %v266, 4294901760
    %3032 = vmatpush1.msra.mxu0 %v3031
    %v3033 = vand.u32 %v269, 4294901760
    %3034 = vmatprep.subr.mxu0 %v3033
    %v3035 = vand.u32 %v268, 4294901760
    %3036 = vmatpush1.msra.mxu0 %v3035
    %3037 = vmatprep.subr.mxu0 0.0
    %3038 = vmatpush1.msra.mxu0 0.0
    %3039 = vmatprep.subr.mxu0 0.0
    %3040 = vmatpush1.msra.mxu0 0.0
    %3041 = vmatprep.subr.mxu0 0.0
    %3042 = vmatpush1.msra.mxu0 0.0
    %3043 = vmatprep.subr.mxu0 0.0
    %3044 = vmatpush1.msra.mxu0 0.0
    %3045 = vmatprep.subr.mxu0 0.0
    %3046 = vmatpush1.msra.mxu0 0.0
    %3047 = vmatprep.subr.mxu0 0.0
    %3048 = vmatpush1.msra.mxu0 0.0
    %3049 = vmatprep.subr.mxu0 0.0
    %3050 = vmatpush1.msra.mxu0 0.0
    %3051 = vmatprep.subr.mxu0 0.0
    %3052 = vmatpush1.msra.mxu0 0.0
    %3053 = vmatprep.subr.mxu0 0.0
    %3054 = vmatpush1.msra.mxu0 0.0
    %3055 = vmatprep.subr.mxu0 0.0
    %3056 = vmatpush1.msra.mxu0 0.0
    %3057 = vmatprep.subr.mxu0 0.0
    %3058 = vmatpush1.msra.mxu0 0.0
    %3059 = vmatprep.subr.mxu0 0.0
    %3060 = vmatpush1.msra.mxu0 0.0
    %3061 = vmatprep.subr.mxu0 0.0
    %3062 = vmatpush1.msra.mxu0 0.0
    %3063 = vmatprep.subr.mxu0 0.0
    %3064 = vmatpush1.msra.mxu0 0.0
    %3065 = vmatprep.subr.mxu0 0.0
    %3066 = vmatpush1.msra.mxu0 0.0
    %3067 = vmatprep.subr.mxu0 0.0
    %3068 = vmatpush1.msra.mxu0 0.0
    %3069 = vmatprep.subr.mxu0 0.0
    %3070 = vmatpush1.msra.mxu0 0.0
    %3071 = vmatprep.subr.mxu0 0.0
    %3072 = vmatpush1.msra.mxu0 0.0
    %3073 = vmatprep.subr.mxu0 0.0
    %3074 = vmatpush1.msra.mxu0 0.0
    %3075 = vmatprep.subr.mxu0 0.0
    %3076 = vmatpush1.msra.mxu0 0.0
    %3077 = vmatprep.subr.mxu0 0.0
    %3078 = vmatpush1.msra.mxu0 0.0
    %3079 = vmatprep.subr.mxu0 0.0
    %3080 = vmatpush1.msra.mxu0 0.0
    %3081 = vmatprep.subr.mxu0 0.0
    %3082 = vmatpush1.msra.mxu0 0.0
    %3083 = vmatprep.subr.mxu0 0.0
    %3084 = vmatpush1.msra.mxu0 0.0
    %3085 = vmatprep.mubr.f32.mxu0 0.0
    %v3086 = vand.u32 %v3003, 4294901760
    %v3087 = vsub.f32 %v3003, %v3086
    %v3088 = vand.u32 %v3087, 4294901760
    %v3089 = vsub.f32 %v3087, %v3088
    %v3090 = vand.u32 %v3089, 4294901760
    %3091 = vmatmul.mubr.f32.gmra.mrb[0].mxu0 %v3090
    %v3092 = vpop.f32.mrb[0].mxu0
    %v3093 = vadd.f32 0.0, %v3092
    %v3094 = vpop.f32.mrb[0].mxu0
    %v3095 = vadd.f32 0.0, %v3094
    %3096 = vdwg.mxu0
    %v3097 = vand.u32 %v255, 4294901760
    %v3098 = vsub.f32 %v255, %v3097
    %v3099 = vand.u32 %v3098, 4294901760
    %v3100 = vsub.f32 %v3098, %v3099
    %v3101 = vand.u32 %v3100, 4294901760
    %3102 = vmatprep.subr.mxu0 %v3101
    %v3103 = vand.u32 %v254, 4294901760
    %v3104 = vsub.f32 %v254, %v3103
    %v3105 = vand.u32 %v3104, 4294901760
    %v3106 = vsub.f32 %v3104, %v3105
    %v3107 = vand.u32 %v3106, 4294901760
    %3108 = vmatpush1.msra.mxu0 %v3107
    %v3109 = vand.u32 %v257, 4294901760
    %v3110 = vsub.f32 %v257, %v3109
    %v3111 = vand.u32 %v3110, 4294901760
    %v3112 = vsub.f32 %v3110, %v3111
    %v3113 = vand.u32 %v3112, 4294901760
    %3114 = vmatprep.subr.mxu0 %v3113
    %v3115 = vand.u32 %v256, 4294901760
    %v3116 = vsub.f32 %v256, %v3115
    %v3117 = vand.u32 %v3116, 4294901760
    %v3118 = vsub.f32 %v3116, %v3117
    %v3119 = vand.u32 %v3118, 4294901760
    %3120 = vmatpush1.msra.mxu0 %v3119
    %v3121 = vand.u32 %v259, 4294901760
    %v3122 = vsub.f32 %v259, %v3121
    %v3123 = vand.u32 %v3122, 4294901760
    %v3124 = vsub.f32 %v3122, %v3123
    %v3125 = vand.u32 %v3124, 4294901760
    %3126 = vmatprep.subr.mxu0 %v3125
    %v3127 = vand.u32 %v258, 4294901760
    %v3128 = vsub.f32 %v258, %v3127
    %v3129 = vand.u32 %v3128, 4294901760
    %v3130 = vsub.f32 %v3128, %v3129
    %v3131 = vand.u32 %v3130, 4294901760
    %3132 = vmatpush1.msra.mxu0 %v3131
    %v3133 = vand.u32 %v261, 4294901760
    %v3134 = vsub.f32 %v261, %v3133
    %v3135 = vand.u32 %v3134, 4294901760
    %v3136 = vsub.f32 %v3134, %v3135
    %v3137 = vand.u32 %v3136, 4294901760
    %3138 = vmatprep.subr.mxu0 %v3137
    %v3139 = vand.u32 %v260, 4294901760
    %v3140 = vsub.f32 %v260, %v3139
    %v3141 = vand.u32 %v3140, 4294901760
    %v3142 = vsub.f32 %v3140, %v3141
    %v3143 = vand.u32 %v3142, 4294901760
    %3144 = vmatpush1.msra.mxu0 %v3143
    %v3145 = vand.u32 %v263, 4294901760
    %v3146 = vsub.f32 %v263, %v3145
    %v3147 = vand.u32 %v3146, 4294901760
    %v3148 = vsub.f32 %v3146, %v3147
    %v3149 = vand.u32 %v3148, 4294901760
    %3150 = vmatprep.subr.mxu0 %v3149
    %v3151 = vand.u32 %v262, 4294901760
    %v3152 = vsub.f32 %v262, %v3151
    %v3153 = vand.u32 %v3152, 4294901760
    %v3154 = vsub.f32 %v3152, %v3153
    %v3155 = vand.u32 %v3154, 4294901760
    %3156 = vmatpush1.msra.mxu0 %v3155
    %v3157 = vand.u32 %v265, 4294901760
    %v3158 = vsub.f32 %v265, %v3157
    %v3159 = vand.u32 %v3158, 4294901760
    %v3160 = vsub.f32 %v3158, %v3159
    %v3161 = vand.u32 %v3160, 4294901760
    %3162 = vmatprep.subr.mxu0 %v3161
    %v3163 = vand.u32 %v264, 4294901760
    %v3164 = vsub.f32 %v264, %v3163
    %v3165 = vand.u32 %v3164, 4294901760
    %v3166 = vsub.f32 %v3164, %v3165
    %v3167 = vand.u32 %v3166, 4294901760
    %3168 = vmatpush1.msra.mxu0 %v3167
    %v3169 = vand.u32 %v267, 4294901760
    %v3170 = vsub.f32 %v267, %v3169
    %v3171 = vand.u32 %v3170, 4294901760
    %v3172 = vsub.f32 %v3170, %v3171
    %v3173 = vand.u32 %v3172, 4294901760
    %3174 = vmatprep.subr.mxu0 %v3173
    %v3175 = vand.u32 %v266, 4294901760
    %v3176 = vsub.f32 %v266, %v3175
    %v3177 = vand.u32 %v3176, 4294901760
    %v3178 = vsub.f32 %v3176, %v3177
    %v3179 = vand.u32 %v3178, 4294901760
    %3180 = vmatpush1.msra.mxu0 %v3179
    %v3181 = vand.u32 %v269, 4294901760
    %v3182 = vsub.f32 %v269, %v3181
    %v3183 = vand.u32 %v3182, 4294901760
    %v3184 = vsub.f32 %v3182, %v3183
    %v3185 = vand.u32 %v3184, 4294901760
    %3186 = vmatprep.subr.mxu0 %v3185
    %v3187 = vand.u32 %v268, 4294901760
    %v3188 = vsub.f32 %v268, %v3187
    %v3189 = vand.u32 %v3188, 4294901760
    %v3190 = vsub.f32 %v3188, %v3189
    %v3191 = vand.u32 %v3190, 4294901760
    %3192 = vmatpush1.msra.mxu0 %v3191
    %3193 = vmatprep.subr.mxu0 0.0
    %3194 = vmatpush1.msra.mxu0 0.0
    %3195 = vmatprep.subr.mxu0 0.0
    %3196 = vmatpush1.msra.mxu0 0.0
    %3197 = vmatprep.subr.mxu0 0.0
    %3198 = vmatpush1.msra.mxu0 0.0
    %3199 = vmatprep.subr.mxu0 0.0
    %3200 = vmatpush1.msra.mxu0 0.0
    %3201 = vmatprep.subr.mxu0 0.0
    %3202 = vmatpush1.msra.mxu0 0.0
    %3203 = vmatprep.subr.mxu0 0.0
    %3204 = vmatpush1.msra.mxu0 0.0
    %3205 = vmatprep.subr.mxu0 0.0
    %3206 = vmatpush1.msra.mxu0 0.0
    %3207 = vmatprep.subr.mxu0 0.0
    %3208 = vmatpush1.msra.mxu0 0.0
    %3209 = vmatprep.subr.mxu0 0.0
    %3210 = vmatpush1.msra.mxu0 0.0
    %3211 = vmatprep.subr.mxu0 0.0
    %3212 = vmatpush1.msra.mxu0 0.0
    %3213 = vmatprep.subr.mxu0 0.0
    %3214 = vmatpush1.msra.mxu0 0.0
    %3215 = vmatprep.subr.mxu0 0.0
    %3216 = vmatpush1.msra.mxu0 0.0
    %3217 = vmatprep.subr.mxu0 0.0
    %3218 = vmatpush1.msra.mxu0 0.0
    %3219 = vmatprep.subr.mxu0 0.0
    %3220 = vmatpush1.msra.mxu0 0.0
    %3221 = vmatprep.subr.mxu0 0.0
    %3222 = vmatpush1.msra.mxu0 0.0
    %3223 = vmatprep.subr.mxu0 0.0
    %3224 = vmatpush1.msra.mxu0 0.0
    %3225 = vmatprep.subr.mxu0 0.0
    %3226 = vmatpush1.msra.mxu0 0.0
    %3227 = vmatprep.subr.mxu0 0.0
    %3228 = vmatpush1.msra.mxu0 0.0
    %3229 = vmatprep.subr.mxu0 0.0
    %3230 = vmatpush1.msra.mxu0 0.0
    %3231 = vmatprep.subr.mxu0 0.0
    %3232 = vmatpush1.msra.mxu0 0.0
    %3233 = vmatprep.subr.mxu0 0.0
    %3234 = vmatpush1.msra.mxu0 0.0
    %3235 = vmatprep.subr.mxu0 0.0
    %3236 = vmatpush1.msra.mxu0 0.0
    %3237 = vmatprep.subr.mxu0 0.0
    %3238 = vmatpush1.msra.mxu0 0.0
    %3239 = vmatprep.subr.mxu0 0.0
    %3240 = vmatpush1.msra.mxu0 0.0
    %3241 = vmatprep.mubr.f32.mxu0 0.0
    %v3242 = vand.u32 %v3003, 4294901760
    %3243 = vmatmul.mubr.f32.gmra.mrb[0].mxu0 %v3242
    %v3244 = vpop.f32.mrb[0].mxu0
    %v3245 = vadd.f32 %v3093, %v3244
    %v3246 = vpop.f32.mrb[0].mxu0
    %v3247 = vadd.f32 %v3095, %v3246
    %3248 = vdwg.mxu0
    %v3249 = vand.u32 %v255, 4294901760
    %v3250 = vsub.f32 %v255, %v3249
    %3251 = vmatprep.subr.mxu0 %v3250
    %v3252 = vand.u32 %v254, 4294901760
    %v3253 = vsub.f32 %v254, %v3252
    %3254 = vmatpush1.msra.mxu0 %v3253
    %v3255 = vand.u32 %v257, 4294901760
    %v3256 = vsub.f32 %v257, %v3255
    %3257 = vmatprep.subr.mxu0 %v3256
    %v3258 = vand.u32 %v256, 4294901760
    %v3259 = vsub.f32 %v256, %v3258
    %3260 = vmatpush1.msra.mxu0 %v3259
    %v3261 = vand.u32 %v259, 4294901760
    %v3262 = vsub.f32 %v259, %v3261
    %3263 = vmatprep.subr.mxu0 %v3262
    %v3264 = vand.u32 %v258, 4294901760
    %v3265 = vsub.f32 %v258, %v3264
    %3266 = vmatpush1.msra.mxu0 %v3265
    %v3267 = vand.u32 %v261, 4294901760
    %v3268 = vsub.f32 %v261, %v3267
    %3269 = vmatprep.subr.mxu0 %v3268
    %v3270 = vand.u32 %v260, 4294901760
    %v3271 = vsub.f32 %v260, %v3270
    %3272 = vmatpush1.msra.mxu0 %v3271
    %v3273 = vand.u32 %v263, 4294901760
    %v3274 = vsub.f32 %v263, %v3273
    %3275 = vmatprep.subr.mxu0 %v3274
    %v3276 = vand.u32 %v262, 4294901760
    %v3277 = vsub.f32 %v262, %v3276
    %3278 = vmatpush1.msra.mxu0 %v3277
    %v3279 = vand.u32 %v265, 4294901760
    %v3280 = vsub.f32 %v265, %v3279
    %3281 = vmatprep.subr.mxu0 %v3280
    %v3282 = vand.u32 %v264, 4294901760
    %v3283 = vsub.f32 %v264, %v3282
    %3284 = vmatpush1.msra.mxu0 %v3283
    %v3285 = vand.u32 %v267, 4294901760
    %v3286 = vsub.f32 %v267, %v3285
    %3287 = vmatprep.subr.mxu0 %v3286
    %v3288 = vand.u32 %v266, 4294901760
    %v3289 = vsub.f32 %v266, %v3288
    %3290 = vmatpush1.msra.mxu0 %v3289
    %v3291 = vand.u32 %v269, 4294901760
    %v3292 = vsub.f32 %v269, %v3291
    %3293 = vmatprep.subr.mxu0 %v3292
    %v3294 = vand.u32 %v268, 4294901760
    %v3295 = vsub.f32 %v268, %v3294
    %3296 = vmatpush1.msra.mxu0 %v3295
    %3297 = vmatprep.subr.mxu0 0.0
    %3298 = vmatpush1.msra.mxu0 0.0
    %3299 = vmatprep.subr.mxu0 0.0
    %3300 = vmatpush1.msra.mxu0 0.0
    %3301 = vmatprep.subr.mxu0 0.0
    %3302 = vmatpush1.msra.mxu0 0.0
    %3303 = vmatprep.subr.mxu0 0.0
    %3304 = vmatpush1.msra.mxu0 0.0
    %3305 = vmatprep.subr.mxu0 0.0
    %3306 = vmatpush1.msra.mxu0 0.0
    %3307 = vmatprep.subr.mxu0 0.0
    %3308 = vmatpush1.msra.mxu0 0.0
    %3309 = vmatprep.subr.mxu0 0.0
    %3310 = vmatpush1.msra.mxu0 0.0
    %3311 = vmatprep.subr.mxu0 0.0
    %3312 = vmatpush1.msra.mxu0 0.0
    %3313 = vmatprep.subr.mxu0 0.0
    %3314 = vmatpush1.msra.mxu0 0.0
    %3315 = vmatprep.subr.mxu0 0.0
    %3316 = vmatpush1.msra.mxu0 0.0
    %3317 = vmatprep.subr.mxu0 0.0
    %3318 = vmatpush1.msra.mxu0 0.0
    %3319 = vmatprep.subr.mxu0 0.0
    %3320 = vmatpush1.msra.mxu0 0.0
    %3321 = vmatprep.subr.mxu0 0.0
    %3322 = vmatpush1.msra.mxu0 0.0
    %3323 = vmatprep.subr.mxu0 0.0
    %3324 = vmatpush1.msra.mxu0 0.0
    %3325 = vmatprep.subr.mxu0 0.0
    %3326 = vmatpush1.msra.mxu0 0.0
    %3327 = vmatprep.subr.mxu0 0.0
    %3328 = vmatpush1.msra.mxu0 0.0
    %3329 = vmatprep.subr.mxu0 0.0
    %3330 = vmatpush1.msra.mxu0 0.0
    %3331 = vmatprep.subr.mxu0 0.0
    %3332 = vmatpush1.msra.mxu0 0.0
    %3333 = vmatprep.subr.mxu0 0.0
    %3334 = vmatpush1.msra.mxu0 0.0
    %3335 = vmatprep.subr.mxu0 0.0
    %3336 = vmatpush1.msra.mxu0 0.0
    %3337 = vmatprep.subr.mxu0 0.0
    %3338 = vmatpush1.msra.mxu0 0.0
    %3339 = vmatprep.subr.mxu0 0.0
    %3340 = vmatpush1.msra.mxu0 0.0
    %3341 = vmatprep.subr.mxu0 0.0
    %3342 = vmatpush1.msra.mxu0 0.0
    %3343 = vmatprep.subr.mxu0 0.0
    %3344 = vmatpush1.msra.mxu0 0.0
    %3345 = vmatprep.mubr.f32.mxu0 0.0
    %v3346 = vand.u32 %v3003, 4294901760
    %v3347 = vsub.f32 %v3003, %v3346
    %3348 = vmatmul.mubr.f32.gmra.mrb[0].mxu0 %v3347
    %v3349 = vpop.f32.mrb[0].mxu0
    %v3350 = vadd.f32 %v3245, %v3349
    %v3351 = vpop.f32.mrb[0].mxu0
    %v3352 = vadd.f32 %v3247, %v3351
    %3353 = vdwg.mxu0
    %v3354 = vand.u32 %v255, 4294901760
    %3355 = vmatprep.subr.mxu0 %v3354
    %v3356 = vand.u32 %v254, 4294901760
    %3357 = vmatpush1.msra.mxu0 %v3356
    %v3358 = vand.u32 %v257, 4294901760
    %3359 = vmatprep.subr.mxu0 %v3358
    %v3360 = vand.u32 %v256, 4294901760
    %3361 = vmatpush1.msra.mxu0 %v3360
    %v3362 = vand.u32 %v259, 4294901760
    %3363 = vmatprep.subr.mxu0 %v3362
    %v3364 = vand.u32 %v258, 4294901760
    %3365 = vmatpush1.msra.mxu0 %v3364
    %v3366 = vand.u32 %v261, 4294901760
    %3367 = vmatprep.subr.mxu0 %v3366
    %v3368 = vand.u32 %v260, 4294901760
    %3369 = vmatpush1.msra.mxu0 %v3368
    %v3370 = vand.u32 %v263, 4294901760
    %3371 = vmatprep.subr.mxu0 %v3370
    %v3372 = vand.u32 %v262, 4294901760
    %3373 = vmatpush1.msra.mxu0 %v3372
    %v3374 = vand.u32 %v265, 4294901760
    %3375 = vmatprep.subr.mxu0 %v3374
    %v3376 = vand.u32 %v264, 4294901760
    %3377 = vmatpush1.msra.mxu0 %v3376
    %v3378 = vand.u32 %v267, 4294901760
    %3379 = vmatprep.subr.mxu0 %v3378
    %v3380 = vand.u32 %v266, 4294901760
    %3381 = vmatpush1.msra.mxu0 %v3380
    %v3382 = vand.u32 %v269, 4294901760
    %3383 = vmatprep.subr.mxu0 %v3382
    %v3384 = vand.u32 %v268, 4294901760
    %3385 = vmatpush1.msra.mxu0 %v3384
    %3386 = vmatprep.subr.mxu0 0.0
    %3387 = vmatpush1.msra.mxu0 0.0
    %3388 = vmatprep.subr.mxu0 0.0
    %3389 = vmatpush1.msra.mxu0 0.0
    %3390 = vmatprep.subr.mxu0 0.0
    %3391 = vmatpush1.msra.mxu0 0.0
    %3392 = vmatprep.subr.mxu0 0.0
    %3393 = vmatpush1.msra.mxu0 0.0
    %3394 = vmatprep.subr.mxu0 0.0
    %3395 = vmatpush1.msra.mxu0 0.0
    %3396 = vmatprep.subr.mxu0 0.0
    %3397 = vmatpush1.msra.mxu0 0.0
    %3398 = vmatprep.subr.mxu0 0.0
    %3399 = vmatpush1.msra.mxu0 0.0
    %3400 = vmatprep.subr.mxu0 0.0
    %3401 = vmatpush1.msra.mxu0 0.0
    %3402 = vmatprep.subr.mxu0 0.0
    %3403 = vmatpush1.msra.mxu0 0.0
    %3404 = vmatprep.subr.mxu0 0.0
    %3405 = vmatpush1.msra.mxu0 0.0
    %3406 = vmatprep.subr.mxu0 0.0
    %3407 = vmatpush1.msra.mxu0 0.0
    %3408 = vmatprep.subr.mxu0 0.0
    %3409 = vmatpush1.msra.mxu0 0.0
    %3410 = vmatprep.subr.mxu0 0.0
    %3411 = vmatpush1.msra.mxu0 0.0
    %3412 = vmatprep.subr.mxu0 0.0
    %3413 = vmatpush1.msra.mxu0 0.0
    %3414 = vmatprep.subr.mxu0 0.0
    %3415 = vmatpush1.msra.mxu0 0.0
    %3416 = vmatprep.subr.mxu0 0.0
    %3417 = vmatpush1.msra.mxu0 0.0
    %3418 = vmatprep.subr.mxu0 0.0
    %3419 = vmatpush1.msra.mxu0 0.0
    %3420 = vmatprep.subr.mxu0 0.0
    %3421 = vmatpush1.msra.mxu0 0.0
    %3422 = vmatprep.subr.mxu0 0.0
    %3423 = vmatpush1.msra.mxu0 0.0
    %3424 = vmatprep.subr.mxu0 0.0
    %3425 = vmatpush1.msra.mxu0 0.0
    %3426 = vmatprep.subr.mxu0 0.0
    %3427 = vmatpush1.msra.mxu0 0.0
    %3428 = vmatprep.subr.mxu0 0.0
    %3429 = vmatpush1.msra.mxu0 0.0
    %3430 = vmatprep.subr.mxu0 0.0
    %3431 = vmatpush1.msra.mxu0 0.0
    %3432 = vmatprep.subr.mxu0 0.0
    %3433 = vmatpush1.msra.mxu0 0.0
    %3434 = vmatprep.mubr.f32.mxu0 0.0
    %v3435 = vand.u32 %v3003, 4294901760
    %v3436 = vsub.f32 %v3003, %v3435
    %v3437 = vand.u32 %v3436, 4294901760
    %3438 = vmatmul.mubr.f32.gmra.mrb[0].mxu0 %v3437
    %v3439 = vpop.f32.mrb[0].mxu0
    %v3440 = vadd.f32 %v3350, %v3439
    %v3441 = vpop.f32.mrb[0].mxu0
    %v3442 = vadd.f32 %v3352, %v3441
    %3443 = vdwg.mxu0
    %v3444 = vand.u32 %v255, 4294901760
    %v3445 = vsub.f32 %v255, %v3444
    %v3446 = vand.u32 %v3445, 4294901760
    %3447 = vmatprep.subr.mxu0 %v3446
    %v3448 = vand.u32 %v254, 4294901760
    %v3449 = vsub.f32 %v254, %v3448
    %v3450 = vand.u32 %v3449, 4294901760
    %3451 = vmatpush1.msra.mxu0 %v3450
    %v3452 = vand.u32 %v257, 4294901760
    %v3453 = vsub.f32 %v257, %v3452
    %v3454 = vand.u32 %v3453, 4294901760
    %3455 = vmatprep.subr.mxu0 %v3454
    %v3456 = vand.u32 %v256, 4294901760
    %v3457 = vsub.f32 %v256, %v3456
    %v3458 = vand.u32 %v3457, 4294901760
    %3459 = vmatpush1.msra.mxu0 %v3458
    %v3460 = vand.u32 %v259, 4294901760
    %v3461 = vsub.f32 %v259, %v3460
    %v3462 = vand.u32 %v3461, 4294901760
    %3463 = vmatprep.subr.mxu0 %v3462
    %v3464 = vand.u32 %v258, 4294901760
    %v3465 = vsub.f32 %v258, %v3464
    %v3466 = vand.u32 %v3465, 4294901760
    %3467 = vmatpush1.msra.mxu0 %v3466
    %v3468 = vand.u32 %v261, 4294901760
    %v3469 = vsub.f32 %v261, %v3468
    %v3470 = vand.u32 %v3469, 4294901760
    %3471 = vmatprep.subr.mxu0 %v3470
    %v3472 = vand.u32 %v260, 4294901760
    %v3473 = vsub.f32 %v260, %v3472
    %v3474 = vand.u32 %v3473, 4294901760
    %3475 = vmatpush1.msra.mxu0 %v3474
    %v3476 = vand.u32 %v263, 4294901760
    %v3477 = vsub.f32 %v263, %v3476
    %v3478 = vand.u32 %v3477, 4294901760
    %3479 = vmatprep.subr.mxu0 %v3478
    %v3480 = vand.u32 %v262, 4294901760
    %v3481 = vsub.f32 %v262, %v3480
    %v3482 = vand.u32 %v3481, 4294901760
    %3483 = vmatpush1.msra.mxu0 %v3482
    %v3484 = vand.u32 %v265, 4294901760
    %v3485 = vsub.f32 %v265, %v3484
    %v3486 = vand.u32 %v3485, 4294901760
    %3487 = vmatprep.subr.mxu0 %v3486
    %v3488 = vand.u32 %v264, 4294901760
    %v3489 = vsub.f32 %v264, %v3488
    %v3490 = vand.u32 %v3489, 4294901760
    %3491 = vmatpush1.msra.mxu0 %v3490
    %v3492 = vand.u32 %v267, 4294901760
    %v3493 = vsub.f32 %v267, %v3492
    %v3494 = vand.u32 %v3493, 4294901760
    %3495 = vmatprep.subr.mxu0 %v3494
    %v3496 = vand.u32 %v266, 4294901760
    %v3497 = vsub.f32 %v266, %v3496
    %v3498 = vand.u32 %v3497, 4294901760
    %3499 = vmatpush1.msra.mxu0 %v3498
    %v3500 = vand.u32 %v269, 4294901760
    %v3501 = vsub.f32 %v269, %v3500
    %v3502 = vand.u32 %v3501, 4294901760
    %3503 = vmatprep.subr.mxu0 %v3502
    %v3504 = vand.u32 %v268, 4294901760
    %v3505 = vsub.f32 %v268, %v3504
    %v3506 = vand.u32 %v3505, 4294901760
    %3507 = vmatpush1.msra.mxu0 %v3506
    %3508 = vmatprep.subr.mxu0 0.0
    %3509 = vmatpush1.msra.mxu0 0.0
    %3510 = vmatprep.subr.mxu0 0.0
    %3511 = vmatpush1.msra.mxu0 0.0
    %3512 = vmatprep.subr.mxu0 0.0
    %3513 = vmatpush1.msra.mxu0 0.0
    %3514 = vmatprep.subr.mxu0 0.0
    %3515 = vmatpush1.msra.mxu0 0.0
    %3516 = vmatprep.subr.mxu0 0.0
    %3517 = vmatpush1.msra.mxu0 0.0
    %3518 = vmatprep.subr.mxu0 0.0
    %3519 = vmatpush1.msra.mxu0 0.0
    %3520 = vmatprep.subr.mxu0 0.0
    %3521 = vmatpush1.msra.mxu0 0.0
    %3522 = vmatprep.subr.mxu0 0.0
    %3523 = vmatpush1.msra.mxu0 0.0
    %3524 = vmatprep.subr.mxu0 0.0
    %3525 = vmatpush1.msra.mxu0 0.0
    %3526 = vmatprep.subr.mxu0 0.0
    %3527 = vmatpush1.msra.mxu0 0.0
    %3528 = vmatprep.subr.mxu0 0.0
    %3529 = vmatpush1.msra.mxu0 0.0
    %3530 = vmatprep.subr.mxu0 0.0
    %3531 = vmatpush1.msra.mxu0 0.0
    %3532 = vmatprep.subr.mxu0 0.0
    %3533 = vmatpush1.msra.mxu0 0.0
    %3534 = vmatprep.subr.mxu0 0.0
    %3535 = vmatpush1.msra.mxu0 0.0
    %3536 = vmatprep.subr.mxu0 0.0
    %3537 = vmatpush1.msra.mxu0 0.0
    %3538 = vmatprep.subr.mxu0 0.0
    %3539 = vmatpush1.msra.mxu0 0.0
    %3540 = vmatprep.subr.mxu0 0.0
    %3541 = vmatpush1.msra.mxu0 0.0
    %3542 = vmatprep.subr.mxu0 0.0
    %3543 = vmatpush1.msra.mxu0 0.0
    %3544 = vmatprep.subr.mxu0 0.0
    %3545 = vmatpush1.msra.mxu0 0.0
    %3546 = vmatprep.subr.mxu0 0.0
    %3547 = vmatpush1.msra.mxu0 0.0
    %3548 = vmatprep.subr.mxu0 0.0
    %3549 = vmatpush1.msra.mxu0 0.0
    %3550 = vmatprep.subr.mxu0 0.0
    %3551 = vmatpush1.msra.mxu0 0.0
    %3552 = vmatprep.subr.mxu0 0.0
    %3553 = vmatpush1.msra.mxu0 0.0
    %3554 = vmatprep.subr.mxu0 0.0
    %3555 = vmatpush1.msra.mxu0 0.0
    %3556 = vmatprep.mubr.f32.mxu0 0.0
    %v3557 = vand.u32 %v3003, 4294901760
    %3558 = vmatmul.mubr.f32.gmra.mrb[0].mxu0 %v3557
    %v3559 = vpop.f32.mrb[0].mxu0
    %v3560 = vadd.f32 %v3440, %v3559
    %v3561 = vpop.f32.mrb[0].mxu0
    %v3562 = vadd.f32 %v3442, %v3561
    %3563 = vdwg.mxu0
    %v3564 = vand.u32 %v255, 4294901760
    %3565 = vmatprep.subr.mxu0 %v3564
    %v3566 = vand.u32 %v254, 4294901760
    %3567 = vmatpush1.msra.mxu0 %v3566
    %v3568 = vand.u32 %v257, 4294901760
    %3569 = vmatprep.subr.mxu0 %v3568
    %v3570 = vand.u32 %v256, 4294901760
    %3571 = vmatpush1.msra.mxu0 %v3570
    %v3572 = vand.u32 %v259, 4294901760
    %3573 = vmatprep.subr.mxu0 %v3572
    %v3574 = vand.u32 %v258, 4294901760
    %3575 = vmatpush1.msra.mxu0 %v3574
    %v3576 = vand.u32 %v261, 4294901760
    %3577 = vmatprep.subr.mxu0 %v3576
    %v3578 = vand.u32 %v260, 4294901760
    %3579 = vmatpush1.msra.mxu0 %v3578
    %v3580 = vand.u32 %v263, 4294901760
    %3581 = vmatprep.subr.mxu0 %v3580
    %v3582 = vand.u32 %v262, 4294901760
    %3583 = vmatpush1.msra.mxu0 %v3582
    %v3584 = vand.u32 %v265, 4294901760
    %3585 = vmatprep.subr.mxu0 %v3584
    %v3586 = vand.u32 %v264, 4294901760
    %3587 = vmatpush1.msra.mxu0 %v3586
    %v3588 = vand.u32 %v267, 4294901760
    %3589 = vmatprep.subr.mxu0 %v3588
    %v3590 = vand.u32 %v266, 4294901760
    %3591 = vmatpush1.msra.mxu0 %v3590
    %v3592 = vand.u32 %v269, 4294901760
    %3593 = vmatprep.subr.mxu0 %v3592
    %v3594 = vand.u32 %v268, 4294901760
    %3595 = vmatpush1.msra.mxu0 %v3594
    %3596 = vmatprep.subr.mxu0 0.0
    %3597 = vmatpush1.msra.mxu0 0.0
    %3598 = vmatprep.subr.mxu0 0.0
    %3599 = vmatpush1.msra.mxu0 0.0
    %3600 = vmatprep.subr.mxu0 0.0
    %3601 = vmatpush1.msra.mxu0 0.0
    %3602 = vmatprep.subr.mxu0 0.0
    %3603 = vmatpush1.msra.mxu0 0.0
    %3604 = vmatprep.subr.mxu0 0.0
    %3605 = vmatpush1.msra.mxu0 0.0
    %3606 = vmatprep.subr.mxu0 0.0
    %3607 = vmatpush1.msra.mxu0 0.0
    %3608 = vmatprep.subr.mxu0 0.0
    %3609 = vmatpush1.msra.mxu0 0.0
    %3610 = vmatprep.subr.mxu0 0.0
    %3611 = vmatpush1.msra.mxu0 0.0
    %3612 = vmatprep.subr.mxu0 0.0
    %3613 = vmatpush1.msra.mxu0 0.0
    %3614 = vmatprep.subr.mxu0 0.0
    %3615 = vmatpush1.msra.mxu0 0.0
    %3616 = vmatprep.subr.mxu0 0.0
    %3617 = vmatpush1.msra.mxu0 0.0
    %3618 = vmatprep.subr.mxu0 0.0
    %3619 = vmatpush1.msra.mxu0 0.0
    %3620 = vmatprep.subr.mxu0 0.0
    %3621 = vmatpush1.msra.mxu0 0.0
    %3622 = vmatprep.subr.mxu0 0.0
    %3623 = vmatpush1.msra.mxu0 0.0
    %3624 = vmatprep.subr.mxu0 0.0
    %3625 = vmatpush1.msra.mxu0 0.0
    %3626 = vmatprep.subr.mxu0 0.0
    %3627 = vmatpush1.msra.mxu0 0.0
    %3628 = vmatprep.subr.mxu0 0.0
    %3629 = vmatpush1.msra.mxu0 0.0
    %3630 = vmatprep.subr.mxu0 0.0
    %3631 = vmatpush1.msra.mxu0 0.0
    %3632 = vmatprep.subr.mxu0 0.0
    %3633 = vmatpush1.msra.mxu0 0.0
    %3634 = vmatprep.subr.mxu0 0.0
    %3635 = vmatpush1.msra.mxu0 0.0
    %3636 = vmatprep.subr.mxu0 0.0
    %3637 = vmatpush1.msra.mxu0 0.0
    %3638 = vmatprep.subr.mxu0 0.0
    %3639 = vmatpush1.msra.mxu0 0.0
    %3640 = vmatprep.subr.mxu0 0.0
    %3641 = vmatpush1.msra.mxu0 0.0
    %3642 = vmatprep.subr.mxu0 0.0
    %3643 = vmatpush1.msra.mxu0 0.0
    %3644 = vmatprep.mubr.f32.mxu0 0.0
    %v3645 = vand.u32 %v3003, 4294901760
    %3646 = vmatmul.mubr.f32.gmra.mrb[0].mxu0 %v3645
    %v3647 = vpop.f32.mrb[0].mxu0
    %v3648 = vadd.f32 %v3560, %v3647
    %v3649 = vpop.f32.mrb[0].mxu0
    %v3650 = vadd.f32 %v3562, %v3649
    %3651 = vdwg.mxu0
    %v3652 = vadd.f32 %v3001, %v3648
    %v3653 = vxor.u32 %v3652, 2147483648
    %v3654 = vmul.f32 %v3653, 1.442695
    %v3655 = vpow.pop %v3654
    %v3656 = vadd.f32 %v3655, 1.0
    %v3657 = vrcp.pop %v3656
    %v3658 = vmul.f32 1.0, %v3657
    %v3659 = vadd.f32 %v3650, %v275
    %v3660 = vmul.f32 %v3658, %v3659
    %v3661 = vadd.f32 %v3002, %v3660
    %v3662 = vtanh.pop %v3661
    %v3663 = vsub.f32 1.0, %v3658
    %3665 = vrot.lane.b32.xlu0 %v3662, 64
    %v3666 = vpop.permute.xlu0 %3665
    %v3668 = vmul.f32 %v3663, %v3666
    %v3669 = vmul.f32 %v3658, %v2991
    %v3670 = vadd.f32 %v3668, %v3669
    %3672 = vrot.lane.b32.xlu0 %v3670, 64
    %v3673 = vpop.permute.xlu0 %3672
    %s3675 = scalar_lea.vmem [#allocation3], 32
    %3676 = vst.msk [vmem:[%s3675] sm:$0xff] %vm283, %v3673
    %s3677 = smul.u32 5, 2
    %s3678 = smul.addr %s3677, 8
    %s3679 = scalar_lea.vmem [#allocation2], %s3678
    %v3680 = vld [vmem:[%s3679] sm:$0xff]
    %v3681 = vld [vmem:[%s3679 + $0x8] sm:$0xff]
    %v3682 = vsel %vm283, %v3673, 0
    %v3684 = vand.u32 %v255, 4294901760
    %3685 = vmatprep.subr.mxu0 %v3684
    %v3686 = vand.u32 %v254, 4294901760
    %3687 = vmatpush1.msra.mxu0 %v3686
    %v3688 = vand.u32 %v257, 4294901760
    %3689 = vmatprep.subr.mxu0 %v3688
    %v3690 = vand.u32 %v256, 4294901760
    %3691 = vmatpush1.msra.mxu0 %v3690
    %v3692 = vand.u32 %v259, 4294901760
    %3693 = vmatprep.subr.mxu0 %v3692
    %v3694 = vand.u32 %v258, 4294901760
    %3695 = vmatpush1.msra.mxu0 %v3694
    %v3696 = vand.u32 %v261, 4294901760
    %3697 = vmatprep.subr.mxu0 %v3696
    %v3698 = vand.u32 %v260, 4294901760
    %3699 = vmatpush1.msra.mxu0 %v3698
    %v3700 = vand.u32 %v263, 4294901760
    %3701 = vmatprep.subr.mxu0 %v3700
    %v3702 = vand.u32 %v262, 4294901760
    %3703 = vmatpush1.msra.mxu0 %v3702
    %v3704 = vand.u32 %v265, 4294901760
    %3705 = vmatprep.subr.mxu0 %v3704
    %v3706 = vand.u32 %v264, 4294901760
    %3707 = vmatpush1.msra.mxu0 %v3706
    %v3708 = vand.u32 %v267, 4294901760
    %3709 = vmatprep.subr.mxu0 %v3708
    %v3710 = vand.u32 %v266, 4294901760
    %3711 = vmatpush1.msra.mxu0 %v3710
    %v3712 = vand.u32 %v269, 4294901760
    %3713 = vmatprep.subr.mxu0 %v3712
    %v3714 = vand.u32 %v268, 4294901760
    %3715 = vmatpush1.msra.mxu0 %v3714
    %3716 = vmatprep.subr.mxu0 0.0
    %3717 = vmatpush1.msra.mxu0 0.0
    %3718 = vmatprep.subr.mxu0 0.0
    %3719 = vmatpush1.msra.mxu0 0.0
    %3720 = vmatprep.subr.mxu0 0.0
    %3721 = vmatpush1.msra.mxu0 0.0
    %3722 = vmatprep.subr.mxu0 0.0
    %3723 = vmatpush1.msra.mxu0 0.0
    %3724 = vmatprep.subr.mxu0 0.0
    %3725 = vmatpush1.msra.mxu0 0.0
    %3726 = vmatprep.subr.mxu0 0.0
    %3727 = vmatpush1.msra.mxu0 0.0
    %3728 = vmatprep.subr.mxu0 0.0
    %3729 = vmatpush1.msra.mxu0 0.0
    %3730 = vmatprep.subr.mxu0 0.0
    %3731 = vmatpush1.msra.mxu0 0.0
    %3732 = vmatprep.subr.mxu0 0.0
    %3733 = vmatpush1.msra.mxu0 0.0
    %3734 = vmatprep.subr.mxu0 0.0
    %3735 = vmatpush1.msra.mxu0 0.0
    %3736 = vmatprep.subr.mxu0 0.0
    %3737 = vmatpush1.msra.mxu0 0.0
    %3738 = vmatprep.subr.mxu0 0.0
    %3739 = vmatpush1.msra.mxu0 0.0
    %3740 = vmatprep.subr.mxu0 0.0
    %3741 = vmatpush1.msra.mxu0 0.0
    %3742 = vmatprep.subr.mxu0 0.0
    %3743 = vmatpush1.msra.mxu0 0.0
    %3744 = vmatprep.subr.mxu0 0.0
    %3745 = vmatpush1.msra.mxu0 0.0
    %3746 = vmatprep.subr.mxu0 0.0
    %3747 = vmatpush1.msra.mxu0 0.0
    %3748 = vmatprep.subr.mxu0 0.0
    %3749 = vmatpush1.msra.mxu0 0.0
    %3750 = vmatprep.subr.mxu0 0.0
    %3751 = vmatpush1.msra.mxu0 0.0
    %3752 = vmatprep.subr.mxu0 0.0
    %3753 = vmatpush1.msra.mxu0 0.0
    %3754 = vmatprep.subr.mxu0 0.0
    %3755 = vmatpush1.msra.mxu0 0.0
    %3756 = vmatprep.subr.mxu0 0.0
    %3757 = vmatpush1.msra.mxu0 0.0
    %3758 = vmatprep.subr.mxu0 0.0
    %3759 = vmatpush1.msra.mxu0 0.0
    %3760 = vmatprep.subr.mxu0 0.0
    %3761 = vmatpush1.msra.mxu0 0.0
    %3762 = vmatprep.subr.mxu0 0.0
    %3763 = vmatpush1.msra.mxu0 0.0
    %3764 = vmatprep.mubr.f32.mxu0 0.0
    %v3765 = vand.u32 %v3682, 4294901760
    %v3766 = vsub.f32 %v3682, %v3765
    %v3767 = vand.u32 %v3766, 4294901760
    %v3768 = vsub.f32 %v3766, %v3767
    %v3769 = vand.u32 %v3768, 4294901760
    %3770 = vmatmul.mubr.f32.gmra.mrb[0].mxu0 %v3769
    %v3771 = vpop.f32.mrb[0].mxu0
    %v3772 = vadd.f32 0.0, %v3771
    %v3773 = vpop.f32.mrb[0].mxu0
    %v3774 = vadd.f32 0.0, %v3773
    %3775 = vdwg.mxu0
    %v3776 = vand.u32 %v255, 4294901760
    %v3777 = vsub.f32 %v255, %v3776
    %v3778 = vand.u32 %v3777, 4294901760
    %v3779 = vsub.f32 %v3777, %v3778
    %v3780 = vand.u32 %v3779, 4294901760
    %3781 = vmatprep.subr.mxu0 %v3780
    %v3782 = vand.u32 %v254, 4294901760
    %v3783 = vsub.f32 %v254, %v3782
    %v3784 = vand.u32 %v3783, 4294901760
    %v3785 = vsub.f32 %v3783, %v3784
    %v3786 = vand.u32 %v3785, 4294901760
    %3787 = vmatpush1.msra.mxu0 %v3786
    %v3788 = vand.u32 %v257, 4294901760
    %v3789 = vsub.f32 %v257, %v3788
    %v3790 = vand.u32 %v3789, 4294901760
    %v3791 = vsub.f32 %v3789, %v3790
    %v3792 = vand.u32 %v3791, 4294901760
    %3793 = vmatprep.subr.mxu0 %v3792
    %v3794 = vand.u32 %v256, 4294901760
    %v3795 = vsub.f32 %v256, %v3794
    %v3796 = vand.u32 %v3795, 4294901760
    %v3797 = vsub.f32 %v3795, %v3796
    %v3798 = vand.u32 %v3797, 4294901760
    %3799 = vmatpush1.msra.mxu0 %v3798
    %v3800 = vand.u32 %v259, 4294901760
    %v3801 = vsub.f32 %v259, %v3800
    %v3802 = vand.u32 %v3801, 4294901760
    %v3803 = vsub.f32 %v3801, %v3802
    %v3804 = vand.u32 %v3803, 4294901760
    %3805 = vmatprep.subr.mxu0 %v3804
    %v3806 = vand.u32 %v258, 4294901760
    %v3807 = vsub.f32 %v258, %v3806
    %v3808 = vand.u32 %v3807, 4294901760
    %v3809 = vsub.f32 %v3807, %v3808
    %v3810 = vand.u32 %v3809, 4294901760
    %3811 = vmatpush1.msra.mxu0 %v3810
    %v3812 = vand.u32 %v261, 4294901760
    %v3813 = vsub.f32 %v261, %v3812
    %v3814 = vand.u32 %v3813, 4294901760
    %v3815 = vsub.f32 %v3813, %v3814
    %v3816 = vand.u32 %v3815, 4294901760
    %3817 = vmatprep.subr.mxu0 %v3816
    %v3818 = vand.u32 %v260, 4294901760
    %v3819 = vsub.f32 %v260, %v3818
    %v3820 = vand.u32 %v3819, 4294901760
    %v3821 = vsub.f32 %v3819, %v3820
    %v3822 = vand.u32 %v3821, 4294901760
    %3823 = vmatpush1.msra.mxu0 %v3822
    %v3824 = vand.u32 %v263, 4294901760
    %v3825 = vsub.f32 %v263, %v3824
    %v3826 = vand.u32 %v3825, 4294901760
    %v3827 = vsub.f32 %v3825, %v3826
    %v3828 = vand.u32 %v3827, 4294901760
    %3829 = vmatprep.subr.mxu0 %v3828
    %v3830 = vand.u32 %v262, 4294901760
    %v3831 = vsub.f32 %v262, %v3830
    %v3832 = vand.u32 %v3831, 4294901760
    %v3833 = vsub.f32 %v3831, %v3832
    %v3834 = vand.u32 %v3833, 4294901760
    %3835 = vmatpush1.msra.mxu0 %v3834
    %v3836 = vand.u32 %v265, 4294901760
    %v3837 = vsub.f32 %v265, %v3836
    %v3838 = vand.u32 %v3837, 4294901760
    %v3839 = vsub.f32 %v3837, %v3838
    %v3840 = vand.u32 %v3839, 4294901760
    %3841 = vmatprep.subr.mxu0 %v3840
    %v3842 = vand.u32 %v264, 4294901760
    %v3843 = vsub.f32 %v264, %v3842
    %v3844 = vand.u32 %v3843, 4294901760
    %v3845 = vsub.f32 %v3843, %v3844
    %v3846 = vand.u32 %v3845, 4294901760
    %3847 = vmatpush1.msra.mxu0 %v3846
    %v3848 = vand.u32 %v267, 4294901760
    %v3849 = vsub.f32 %v267, %v3848
    %v3850 = vand.u32 %v3849, 4294901760
    %v3851 = vsub.f32 %v3849, %v3850
    %v3852 = vand.u32 %v3851, 4294901760
    %3853 = vmatprep.subr.mxu0 %v3852
    %v3854 = vand.u32 %v266, 4294901760
    %v3855 = vsub.f32 %v266, %v3854
    %v3856 = vand.u32 %v3855, 4294901760
    %v3857 = vsub.f32 %v3855, %v3856
    %v3858 = vand.u32 %v3857, 4294901760
    %3859 = vmatpush1.msra.mxu0 %v3858
    %v3860 = vand.u32 %v269, 4294901760
    %v3861 = vsub.f32 %v269, %v3860
    %v3862 = vand.u32 %v3861, 4294901760
    %v3863 = vsub.f32 %v3861, %v3862
    %v3864 = vand.u32 %v3863, 4294901760
    %3865 = vmatprep.subr.mxu0 %v3864
    %v3866 = vand.u32 %v268, 4294901760
    %v3867 = vsub.f32 %v268, %v3866
    %v3868 = vand.u32 %v3867, 4294901760
    %v3869 = vsub.f32 %v3867, %v3868
    %v3870 = vand.u32 %v3869, 4294901760
    %3871 = vmatpush1.msra.mxu0 %v3870
    %3872 = vmatprep.subr.mxu0 0.0
    %3873 = vmatpush1.msra.mxu0 0.0
    %3874 = vmatprep.subr.mxu0 0.0
    %3875 = vmatpush1.msra.mxu0 0.0
    %3876 = vmatprep.subr.mxu0 0.0
    %3877 = vmatpush1.msra.mxu0 0.0
    %3878 = vmatprep.subr.mxu0 0.0
    %3879 = vmatpush1.msra.mxu0 0.0
    %3880 = vmatprep.subr.mxu0 0.0
    %3881 = vmatpush1.msra.mxu0 0.0
    %3882 = vmatprep.subr.mxu0 0.0
    %3883 = vmatpush1.msra.mxu0 0.0
    %3884 = vmatprep.subr.mxu0 0.0
    %3885 = vmatpush1.msra.mxu0 0.0
    %3886 = vmatprep.subr.mxu0 0.0
    %3887 = vmatpush1.msra.mxu0 0.0
    %3888 = vmatprep.subr.mxu0 0.0
    %3889 = vmatpush1.msra.mxu0 0.0
    %3890 = vmatprep.subr.mxu0 0.0
    %3891 = vmatpush1.msra.mxu0 0.0
    %3892 = vmatprep.subr.mxu0 0.0
    %3893 = vmatpush1.msra.mxu0 0.0
    %3894 = vmatprep.subr.mxu0 0.0
    %3895 = vmatpush1.msra.mxu0 0.0
    %3896 = vmatprep.subr.mxu0 0.0
    %3897 = vmatpush1.msra.mxu0 0.0
    %3898 = vmatprep.subr.mxu0 0.0
    %3899 = vmatpush1.msra.mxu0 0.0
    %3900 = vmatprep.subr.mxu0 0.0
    %3901 = vmatpush1.msra.mxu0 0.0
    %3902 = vmatprep.subr.mxu0 0.0
    %3903 = vmatpush1.msra.mxu0 0.0
    %3904 = vmatprep.subr.mxu0 0.0
    %3905 = vmatpush1.msra.mxu0 0.0
    %3906 = vmatprep.subr.mxu0 0.0
    %3907 = vmatpush1.msra.mxu0 0.0
    %3908 = vmatprep.subr.mxu0 0.0
    %3909 = vmatpush1.msra.mxu0 0.0
    %3910 = vmatprep.subr.mxu0 0.0
    %3911 = vmatpush1.msra.mxu0 0.0
    %3912 = vmatprep.subr.mxu0 0.0
    %3913 = vmatpush1.msra.mxu0 0.0
    %3914 = vmatprep.subr.mxu0 0.0
    %3915 = vmatpush1.msra.mxu0 0.0
    %3916 = vmatprep.subr.mxu0 0.0
    %3917 = vmatpush1.msra.mxu0 0.0
    %3918 = vmatprep.subr.mxu0 0.0
    %3919 = vmatpush1.msra.mxu0 0.0
    %3920 = vmatprep.mubr.f32.mxu0 0.0
    %v3921 = vand.u32 %v3682, 4294901760
    %3922 = vmatmul.mubr.f32.gmra.mrb[0].mxu0 %v3921
    %v3923 = vpop.f32.mrb[0].mxu0
    %v3924 = vadd.f32 %v3772, %v3923
    %v3925 = vpop.f32.mrb[0].mxu0
    %v3926 = vadd.f32 %v3774, %v3925
    %3927 = vdwg.mxu0
    %v3928 = vand.u32 %v255, 4294901760
    %v3929 = vsub.f32 %v255, %v3928
    %3930 = vmatprep.subr.mxu0 %v3929
    %v3931 = vand.u32 %v254, 4294901760
    %v3932 = vsub.f32 %v254, %v3931
    %3933 = vmatpush1.msra.mxu0 %v3932
    %v3934 = vand.u32 %v257, 4294901760
    %v3935 = vsub.f32 %v257, %v3934
    %3936 = vmatprep.subr.mxu0 %v3935
    %v3937 = vand.u32 %v256, 4294901760
    %v3938 = vsub.f32 %v256, %v3937
    %3939 = vmatpush1.msra.mxu0 %v3938
    %v3940 = vand.u32 %v259, 4294901760
    %v3941 = vsub.f32 %v259, %v3940
    %3942 = vmatprep.subr.mxu0 %v3941
    %v3943 = vand.u32 %v258, 4294901760
    %v3944 = vsub.f32 %v258, %v3943
    %3945 = vmatpush1.msra.mxu0 %v3944
    %v3946 = vand.u32 %v261, 4294901760
    %v3947 = vsub.f32 %v261, %v3946
    %3948 = vmatprep.subr.mxu0 %v3947
    %v3949 = vand.u32 %v260, 4294901760
    %v3950 = vsub.f32 %v260, %v3949
    %3951 = vmatpush1.msra.mxu0 %v3950
    %v3952 = vand.u32 %v263, 4294901760
    %v3953 = vsub.f32 %v263, %v3952
    %3954 = vmatprep.subr.mxu0 %v3953
    %v3955 = vand.u32 %v262, 4294901760
    %v3956 = vsub.f32 %v262, %v3955
    %3957 = vmatpush1.msra.mxu0 %v3956
    %v3958 = vand.u32 %v265, 4294901760
    %v3959 = vsub.f32 %v265, %v3958
    %3960 = vmatprep.subr.mxu0 %v3959
    %v3961 = vand.u32 %v264, 4294901760
    %v3962 = vsub.f32 %v264, %v3961
    %3963 = vmatpush1.msra.mxu0 %v3962
    %v3964 = vand.u32 %v267, 4294901760
    %v3965 = vsub.f32 %v267, %v3964
    %3966 = vmatprep.subr.mxu0 %v3965
    %v3967 = vand.u32 %v266, 4294901760
    %v3968 = vsub.f32 %v266, %v3967
    %3969 = vmatpush1.msra.mxu0 %v3968
    %v3970 = vand.u32 %v269, 4294901760
    %v3971 = vsub.f32 %v269, %v3970
    %3972 = vmatprep.subr.mxu0 %v3971
    %v3973 = vand.u32 %v268, 4294901760
    %v3974 = vsub.f32 %v268, %v3973
    %3975 = vmatpush1.msra.mxu0 %v3974
    %3976 = vmatprep.subr.mxu0 0.0
    %3977 = vmatpush1.msra.mxu0 0.0
    %3978 = vmatprep.subr.mxu0 0.0
    %3979 = vmatpush1.msra.mxu0 0.0
    %3980 = vmatprep.subr.mxu0 0.0
    %3981 = vmatpush1.msra.mxu0 0.0
    %3982 = vmatprep.subr.mxu0 0.0
    %3983 = vmatpush1.msra.mxu0 0.0
    %3984 = vmatprep.subr.mxu0 0.0
    %3985 = vmatpush1.msra.mxu0 0.0
    %3986 = vmatprep.subr.mxu0 0.0
    %3987 = vmatpush1.msra.mxu0 0.0
    %3988 = vmatprep.subr.mxu0 0.0
    %3989 = vmatpush1.msra.mxu0 0.0
    %3990 = vmatprep.subr.mxu0 0.0
    %3991 = vmatpush1.msra.mxu0 0.0
    %3992 = vmatprep.subr.mxu0 0.0
    %3993 = vmatpush1.msra.mxu0 0.0
    %3994 = vmatprep.subr.mxu0 0.0
    %3995 = vmatpush1.msra.mxu0 0.0
    %3996 = vmatprep.subr.mxu0 0.0
    %3997 = vmatpush1.msra.mxu0 0.0
    %3998 = vmatprep.subr.mxu0 0.0
    %3999 = vmatpush1.msra.mxu0 0.0
    %4000 = vmatprep.subr.mxu0 0.0
    %4001 = vmatpush1.msra.mxu0 0.0
    %4002 = vmatprep.subr.mxu0 0.0
    %4003 = vmatpush1.msra.mxu0 0.0
    %4004 = vmatprep.subr.mxu0 0.0
    %4005 = vmatpush1.msra.mxu0 0.0
    %4006 = vmatprep.subr.mxu0 0.0
    %4007 = vmatpush1.msra.mxu0 0.0
    %4008 = vmatprep.subr.mxu0 0.0
    %4009 = vmatpush1.msra.mxu0 0.0
    %4010 = vmatprep.subr.mxu0 0.0
    %4011 = vmatpush1.msra.mxu0 0.0
    %4012 = vmatprep.subr.mxu0 0.0
    %4013 = vmatpush1.msra.mxu0 0.0
    %4014 = vmatprep.subr.mxu0 0.0
    %4015 = vmatpush1.msra.mxu0 0.0
    %4016 = vmatprep.subr.mxu0 0.0
    %4017 = vmatpush1.msra.mxu0 0.0
    %4018 = vmatprep.subr.mxu0 0.0
    %4019 = vmatpush1.msra.mxu0 0.0
    %4020 = vmatprep.subr.mxu0 0.0
    %4021 = vmatpush1.msra.mxu0 0.0
    %4022 = vmatprep.subr.mxu0 0.0
    %4023 = vmatpush1.msra.mxu0 0.0
    %4024 = vmatprep.mubr.f32.mxu0 0.0
    %v4025 = vand.u32 %v3682, 4294901760
    %v4026 = vsub.f32 %v3682, %v4025
    %4027 = vmatmul.mubr.f32.gmra.mrb[0].mxu0 %v4026
    %v4028 = vpop.f32.mrb[0].mxu0
    %v4029 = vadd.f32 %v3924, %v4028
    %v4030 = vpop.f32.mrb[0].mxu0
    %v4031 = vadd.f32 %v3926, %v4030
    %4032 = vdwg.mxu0
    %v4033 = vand.u32 %v255, 4294901760
    %4034 = vmatprep.subr.mxu0 %v4033
    %v4035 = vand.u32 %v254, 4294901760
    %4036 = vmatpush1.msra.mxu0 %v4035
    %v4037 = vand.u32 %v257, 4294901760
    %4038 = vmatprep.subr.mxu0 %v4037
    %v4039 = vand.u32 %v256, 4294901760
    %4040 = vmatpush1.msra.mxu0 %v4039
    %v4041 = vand.u32 %v259, 4294901760
    %4042 = vmatprep.subr.mxu0 %v4041
    %v4043 = vand.u32 %v258, 4294901760
    %4044 = vmatpush1.msra.mxu0 %v4043
    %v4045 = vand.u32 %v261, 4294901760
    %4046 = vmatprep.subr.mxu0 %v4045
    %v4047 = vand.u32 %v260, 4294901760
    %4048 = vmatpush1.msra.mxu0 %v4047
    %v4049 = vand.u32 %v263, 4294901760
    %4050 = vmatprep.subr.mxu0 %v4049
    %v4051 = vand.u32 %v262, 4294901760
    %4052 = vmatpush1.msra.mxu0 %v4051
    %v4053 = vand.u32 %v265, 4294901760
    %4054 = vmatprep.subr.mxu0 %v4053
    %v4055 = vand.u32 %v264, 4294901760
    %4056 = vmatpush1.msra.mxu0 %v4055
    %v4057 = vand.u32 %v267, 4294901760
    %4058 = vmatprep.subr.mxu0 %v4057
    %v4059 = vand.u32 %v266, 4294901760
    %4060 = vmatpush1.msra.mxu0 %v4059
    %v4061 = vand.u32 %v269, 4294901760
    %4062 = vmatprep.subr.mxu0 %v4061
    %v4063 = vand.u32 %v268, 4294901760
    %4064 = vmatpush1.msra.mxu0 %v4063
    %4065 = vmatprep.subr.mxu0 0.0
    %4066 = vmatpush1.msra.mxu0 0.0
    %4067 = vmatprep.subr.mxu0 0.0
    %4068 = vmatpush1.msra.mxu0 0.0
    %4069 = vmatprep.subr.mxu0 0.0
    %4070 = vmatpush1.msra.mxu0 0.0
    %4071 = vmatprep.subr.mxu0 0.0
    %4072 = vmatpush1.msra.mxu0 0.0
    %4073 = vmatprep.subr.mxu0 0.0
    %4074 = vmatpush1.msra.mxu0 0.0
    %4075 = vmatprep.subr.mxu0 0.0
    %4076 = vmatpush1.msra.mxu0 0.0
    %4077 = vmatprep.subr.mxu0 0.0
    %4078 = vmatpush1.msra.mxu0 0.0
    %4079 = vmatprep.subr.mxu0 0.0
    %4080 = vmatpush1.msra.mxu0 0.0
    %4081 = vmatprep.subr.mxu0 0.0
    %4082 = vmatpush1.msra.mxu0 0.0
    %4083 = vmatprep.subr.mxu0 0.0
    %4084 = vmatpush1.msra.mxu0 0.0
    %4085 = vmatprep.subr.mxu0 0.0
    %4086 = vmatpush1.msra.mxu0 0.0
    %4087 = vmatprep.subr.mxu0 0.0
    %4088 = vmatpush1.msra.mxu0 0.0
    %4089 = vmatprep.subr.mxu0 0.0
    %4090 = vmatpush1.msra.mxu0 0.0
    %4091 = vmatprep.subr.mxu0 0.0
    %4092 = vmatpush1.msra.mxu0 0.0
    %4093 = vmatprep.subr.mxu0 0.0
    %4094 = vmatpush1.msra.mxu0 0.0
    %4095 = vmatprep.subr.mxu0 0.0
    %4096 = vmatpush1.msra.mxu0 0.0
    %4097 = vmatprep.subr.mxu0 0.0
    %4098 = vmatpush1.msra.mxu0 0.0
    %4099 = vmatprep.subr.mxu0 0.0
    %4100 = vmatpush1.msra.mxu0 0.0
    %4101 = vmatprep.subr.mxu0 0.0
    %4102 = vmatpush1.msra.mxu0 0.0
    %4103 = vmatprep.subr.mxu0 0.0
    %4104 = vmatpush1.msra.mxu0 0.0
    %4105 = vmatprep.subr.mxu0 0.0
    %4106 = vmatpush1.msra.mxu0 0.0
    %4107 = vmatprep.subr.mxu0 0.0
    %4108 = vmatpush1.msra.mxu0 0.0
    %4109 = vmatprep.subr.mxu0 0.0
    %4110 = vmatpush1.msra.mxu0 0.0
    %4111 = vmatprep.subr.mxu0 0.0
    %4112 = vmatpush1.msra.mxu0 0.0
    %4113 = vmatprep.mubr.f32.mxu0 0.0
    %v4114 = vand.u32 %v3682, 4294901760
    %v4115 = vsub.f32 %v3682, %v4114
    %v4116 = vand.u32 %v4115, 4294901760
    %4117 = vmatmul.mubr.f32.gmra.mrb[0].mxu0 %v4116
    %v4118 = vpop.f32.mrb[0].mxu0
    %v4119 = vadd.f32 %v4029, %v4118
    %v4120 = vpop.f32.mrb[0].mxu0
    %v4121 = vadd.f32 %v4031, %v4120
    %4122 = vdwg.mxu0
    %v4123 = vand.u32 %v255, 4294901760
    %v4124 = vsub.f32 %v255, %v4123
    %v4125 = vand.u32 %v4124, 4294901760
    %4126 = vmatprep.subr.mxu0 %v4125
    %v4127 = vand.u32 %v254, 4294901760
    %v4128 = vsub.f32 %v254, %v4127
    %v4129 = vand.u32 %v4128, 4294901760
    %4130 = vmatpush1.msra.mxu0 %v4129
    %v4131 = vand.u32 %v257, 4294901760
    %v4132 = vsub.f32 %v257, %v4131
    %v4133 = vand.u32 %v4132, 4294901760
    %4134 = vmatprep.subr.mxu0 %v4133
    %v4135 = vand.u32 %v256, 4294901760
    %v4136 = vsub.f32 %v256, %v4135
    %v4137 = vand.u32 %v4136, 4294901760
    %4138 = vmatpush1.msra.mxu0 %v4137
    %v4139 = vand.u32 %v259, 4294901760
    %v4140 = vsub.f32 %v259, %v4139
    %v4141 = vand.u32 %v4140, 4294901760
    %4142 = vmatprep.subr.mxu0 %v4141
    %v4143 = vand.u32 %v258, 4294901760
    %v4144 = vsub.f32 %v258, %v4143
    %v4145 = vand.u32 %v4144, 4294901760
    %4146 = vmatpush1.msra.mxu0 %v4145
    %v4147 = vand.u32 %v261, 4294901760
    %v4148 = vsub.f32 %v261, %v4147
    %v4149 = vand.u32 %v4148, 4294901760
    %4150 = vmatprep.subr.mxu0 %v4149
    %v4151 = vand.u32 %v260, 4294901760
    %v4152 = vsub.f32 %v260, %v4151
    %v4153 = vand.u32 %v4152, 4294901760
    %4154 = vmatpush1.msra.mxu0 %v4153
    %v4155 = vand.u32 %v263, 4294901760
    %v4156 = vsub.f32 %v263, %v4155
    %v4157 = vand.u32 %v4156, 4294901760
    %4158 = vmatprep.subr.mxu0 %v4157
    %v4159 = vand.u32 %v262, 4294901760
    %v4160 = vsub.f32 %v262, %v4159
    %v4161 = vand.u32 %v4160, 4294901760
    %4162 = vmatpush1.msra.mxu0 %v4161
    %v4163 = vand.u32 %v265, 4294901760
    %v4164 = vsub.f32 %v265, %v4163
    %v4165 = vand.u32 %v4164, 4294901760
    %4166 = vmatprep.subr.mxu0 %v4165
    %v4167 = vand.u32 %v264, 4294901760
    %v4168 = vsub.f32 %v264, %v4167
    %v4169 = vand.u32 %v4168, 4294901760
    %4170 = vmatpush1.msra.mxu0 %v4169
    %v4171 = vand.u32 %v267, 4294901760
    %v4172 = vsub.f32 %v267, %v4171
    %v4173 = vand.u32 %v4172, 4294901760
    %4174 = vmatprep.subr.mxu0 %v4173
    %v4175 = vand.u32 %v266, 4294901760
    %v4176 = vsub.f32 %v266, %v4175
    %v4177 = vand.u32 %v4176, 4294901760
    %4178 = vmatpush1.msra.mxu0 %v4177
    %v4179 = vand.u32 %v269, 4294901760
    %v4180 = vsub.f32 %v269, %v4179
    %v4181 = vand.u32 %v4180, 4294901760
    %4182 = vmatprep.subr.mxu0 %v4181
    %v4183 = vand.u32 %v268, 4294901760
    %v4184 = vsub.f32 %v268, %v4183
    %v4185 = vand.u32 %v4184, 4294901760
    %4186 = vmatpush1.msra.mxu0 %v4185
    %4187 = vmatprep.subr.mxu0 0.0
    %4188 = vmatpush1.msra.mxu0 0.0
    %4189 = vmatprep.subr.mxu0 0.0
    %4190 = vmatpush1.msra.mxu0 0.0
    %4191 = vmatprep.subr.mxu0 0.0
    %4192 = vmatpush1.msra.mxu0 0.0
    %4193 = vmatprep.subr.mxu0 0.0
    %4194 = vmatpush1.msra.mxu0 0.0
    %4195 = vmatprep.subr.mxu0 0.0
    %4196 = vmatpush1.msra.mxu0 0.0
    %4197 = vmatprep.subr.mxu0 0.0
    %4198 = vmatpush1.msra.mxu0 0.0
    %4199 = vmatprep.subr.mxu0 0.0
    %4200 = vmatpush1.msra.mxu0 0.0
    %4201 = vmatprep.subr.mxu0 0.0
    %4202 = vmatpush1.msra.mxu0 0.0
    %4203 = vmatprep.subr.mxu0 0.0
    %4204 = vmatpush1.msra.mxu0 0.0
    %4205 = vmatprep.subr.mxu0 0.0
    %4206 = vmatpush1.msra.mxu0 0.0
    %4207 = vmatprep.subr.mxu0 0.0
    %4208 = vmatpush1.msra.mxu0 0.0
    %4209 = vmatprep.subr.mxu0 0.0
    %4210 = vmatpush1.msra.mxu0 0.0
    %4211 = vmatprep.subr.mxu0 0.0
    %4212 = vmatpush1.msra.mxu0 0.0
    %4213 = vmatprep.subr.mxu0 0.0
    %4214 = vmatpush1.msra.mxu0 0.0
    %4215 = vmatprep.subr.mxu0 0.0
    %4216 = vmatpush1.msra.mxu0 0.0
    %4217 = vmatprep.subr.mxu0 0.0
    %4218 = vmatpush1.msra.mxu0 0.0
    %4219 = vmatprep.subr.mxu0 0.0
    %4220 = vmatpush1.msra.mxu0 0.0
    %4221 = vmatprep.subr.mxu0 0.0
    %4222 = vmatpush1.msra.mxu0 0.0
    %4223 = vmatprep.subr.mxu0 0.0
    %4224 = vmatpush1.msra.mxu0 0.0
    %4225 = vmatprep.subr.mxu0 0.0
    %4226 = vmatpush1.msra.mxu0 0.0
    %4227 = vmatprep.subr.mxu0 0.0
    %4228 = vmatpush1.msra.mxu0 0.0
    %4229 = vmatprep.subr.mxu0 0.0
    %4230 = vmatpush1.msra.mxu0 0.0
    %4231 = vmatprep.subr.mxu0 0.0
    %4232 = vmatpush1.msra.mxu0 0.0
    %4233 = vmatprep.subr.mxu0 0.0
    %4234 = vmatpush1.msra.mxu0 0.0
    %4235 = vmatprep.mubr.f32.mxu0 0.0
    %v4236 = vand.u32 %v3682, 4294901760
    %4237 = vmatmul.mubr.f32.gmra.mrb[0].mxu0 %v4236
    %v4238 = vpop.f32.mrb[0].mxu0
    %v4239 = vadd.f32 %v4119, %v4238
    %v4240 = vpop.f32.mrb[0].mxu0
    %v4241 = vadd.f32 %v4121, %v4240
    %4242 = vdwg.mxu0
    %v4243 = vand.u32 %v255, 4294901760
    %4244 = vmatprep.subr.mxu0 %v4243
    %v4245 = vand.u32 %v254, 4294901760
    %4246 = vmatpush1.msra.mxu0 %v4245
    %v4247 = vand.u32 %v257, 4294901760
    %4248 = vmatprep.subr.mxu0 %v4247
    %v4249 = vand.u32 %v256, 4294901760
    %4250 = vmatpush1.msra.mxu0 %v4249
    %v4251 = vand.u32 %v259, 4294901760
    %4252 = vmatprep.subr.mxu0 %v4251
    %v4253 = vand.u32 %v258, 4294901760
    %4254 = vmatpush1.msra.mxu0 %v4253
    %v4255 = vand.u32 %v261, 4294901760
    %4256 = vmatprep.subr.mxu0 %v4255
    %v4257 = vand.u32 %v260, 4294901760
    %4258 = vmatpush1.msra.mxu0 %v4257
    %v4259 = vand.u32 %v263, 4294901760
    %4260 = vmatprep.subr.mxu0 %v4259
    %v4261 = vand.u32 %v262, 4294901760
    %4262 = vmatpush1.msra.mxu0 %v4261
    %v4263 = vand.u32 %v265, 4294901760
    %4264 = vmatprep.subr.mxu0 %v4263
    %v4265 = vand.u32 %v264, 4294901760
    %4266 = vmatpush1.msra.mxu0 %v4265
    %v4267 = vand.u32 %v267, 4294901760
    %4268 = vmatprep.subr.mxu0 %v4267
    %v4269 = vand.u32 %v266, 4294901760
    %4270 = vmatpush1.msra.mxu0 %v4269
    %v4271 = vand.u32 %v269, 4294901760
    %4272 = vmatprep.subr.mxu0 %v4271
    %v4273 = vand.u32 %v268, 4294901760
    %4274 = vmatpush1.msra.mxu0 %v4273
    %4275 = vmatprep.subr.mxu0 0.0
    %4276 = vmatpush1.msra.mxu0 0.0
    %4277 = vmatprep.subr.mxu0 0.0
    %4278 = vmatpush1.msra.mxu0 0.0
    %4279 = vmatprep.subr.mxu0 0.0
    %4280 = vmatpush1.msra.mxu0 0.0
    %4281 = vmatprep.subr.mxu0 0.0
    %4282 = vmatpush1.msra.mxu0 0.0
    %4283 = vmatprep.subr.mxu0 0.0
    %4284 = vmatpush1.msra.mxu0 0.0
    %4285 = vmatprep.subr.mxu0 0.0
    %4286 = vmatpush1.msra.mxu0 0.0
    %4287 = vmatprep.subr.mxu0 0.0
    %4288 = vmatpush1.msra.mxu0 0.0
    %4289 = vmatprep.subr.mxu0 0.0
    %4290 = vmatpush1.msra.mxu0 0.0
    %4291 = vmatprep.subr.mxu0 0.0
    %4292 = vmatpush1.msra.mxu0 0.0
    %4293 = vmatprep.subr.mxu0 0.0
    %4294 = vmatpush1.msra.mxu0 0.0
    %4295 = vmatprep.subr.mxu0 0.0
    %4296 = vmatpush1.msra.mxu0 0.0
    %4297 = vmatprep.subr.mxu0 0.0
    %4298 = vmatpush1.msra.mxu0 0.0
    %4299 = vmatprep.subr.mxu0 0.0
    %4300 = vmatpush1.msra.mxu0 0.0
    %4301 = vmatprep.subr.mxu0 0.0
    %4302 = vmatpush1.msra.mxu0 0.0
    %4303 = vmatprep.subr.mxu0 0.0
    %4304 = vmatpush1.msra.mxu0 0.0
    %4305 = vmatprep.subr.mxu0 0.0
    %4306 = vmatpush1.msra.mxu0 0.0
    %4307 = vmatprep.subr.mxu0 0.0
    %4308 = vmatpush1.msra.mxu0 0.0
    %4309 = vmatprep.subr.mxu0 0.0
    %4310 = vmatpush1.msra.mxu0 0.0
    %4311 = vmatprep.subr.mxu0 0.0
    %4312 = vmatpush1.msra.mxu0 0.0
    %4313 = vmatprep.subr.mxu0 0.0
    %4314 = vmatpush1.msra.mxu0 0.0
    %4315 = vmatprep.subr.mxu0 0.0
    %4316 = vmatpush1.msra.mxu0 0.0
    %4317 = vmatprep.subr.mxu0 0.0
    %4318 = vmatpush1.msra.mxu0 0.0
    %4319 = vmatprep.subr.mxu0 0.0
    %4320 = vmatpush1.msra.mxu0 0.0
    %4321 = vmatprep.subr.mxu0 0.0
    %4322 = vmatpush1.msra.mxu0 0.0
    %4323 = vmatprep.mubr.f32.mxu0 0.0
    %v4324 = vand.u32 %v3682, 4294901760
    %4325 = vmatmul.mubr.f32.gmra.mrb[0].mxu0 %v4324
    %v4326 = vpop.f32.mrb[0].mxu0
    %v4327 = vadd.f32 %v4239, %v4326
    %v4328 = vpop.f32.mrb[0].mxu0
    %v4329 = vadd.f32 %v4241, %v4328
    %4330 = vdwg.mxu0
    %v4331 = vadd.f32 %v3680, %v4327
    %v4332 = vxor.u32 %v4331, 2147483648
    %v4333 = vmul.f32 %v4332, 1.442695
    %v4334 = vpow.pop %v4333
    %v4335 = vadd.f32 %v4334, 1.0
    %v4336 = vrcp.pop %v4335
    %v4337 = vmul.f32 1.0, %v4336
    %v4338 = vadd.f32 %v4329, %v275
    %v4339 = vmul.f32 %v4337, %v4338
    %v4340 = vadd.f32 %v3681, %v4339
    %v4341 = vtanh.pop %v4340
    %v4342 = vsub.f32 1.0, %v4337
    %4344 = vrot.lane.b32.xlu0 %v4341, 64
    %v4345 = vpop.permute.xlu0 %4344
    %v4347 = vmul.f32 %v4342, %v4345
    %v4348 = vmul.f32 %v4337, %v3670
    %v4349 = vadd.f32 %v4347, %v4348
    %4351 = vrot.lane.b32.xlu0 %v4349, 64
    %v4352 = vpop.permute.xlu0 %4351
    %s4354 = scalar_lea.vmem [#allocation3], 40
    %4355 = vst.msk [vmem:[%s4354] sm:$0xff] %vm283, %v4352
    %s4356 = smul.u32 6, 2
    %s4357 = smul.addr %s4356, 8
    %s4358 = scalar_lea.vmem [#allocation2], %s4357
    %v4359 = vld [vmem:[%s4358] sm:$0xff]
    %v4360 = vld [vmem:[%s4358 + $0x8] sm:$0xff]
    %v4361 = vsel %vm283, %v4352, 0
    %v4363 = vand.u32 %v255, 4294901760
    %4364 = vmatprep.subr.mxu0 %v4363
    %v4365 = vand.u32 %v254, 4294901760
    %4366 = vmatpush1.msra.mxu0 %v4365
    %v4367 = vand.u32 %v257, 4294901760
    %4368 = vmatprep.subr.mxu0 %v4367
    %v4369 = vand.u32 %v256, 4294901760
    %4370 = vmatpush1.msra.mxu0 %v4369
    %v4371 = vand.u32 %v259, 4294901760
    %4372 = vmatprep.subr.mxu0 %v4371
    %v4373 = vand.u32 %v258, 4294901760
    %4374 = vmatpush1.msra.mxu0 %v4373
    %v4375 = vand.u32 %v261, 4294901760
    %4376 = vmatprep.subr.mxu0 %v4375
    %v4377 = vand.u32 %v260, 4294901760
    %4378 = vmatpush1.msra.mxu0 %v4377
    %v4379 = vand.u32 %v263, 4294901760
    %4380 = vmatprep.subr.mxu0 %v4379
    %v4381 = vand.u32 %v262, 4294901760
    %4382 = vmatpush1.msra.mxu0 %v4381
    %v4383 = vand.u32 %v265, 4294901760
    %4384 = vmatprep.subr.mxu0 %v4383
    %v4385 = vand.u32 %v264, 4294901760
    %4386 = vmatpush1.msra.mxu0 %v4385
    %v4387 = vand.u32 %v267, 4294901760
    %4388 = vmatprep.subr.mxu0 %v4387
    %v4389 = vand.u32 %v266, 4294901760
    %4390 = vmatpush1.msra.mxu0 %v4389
    %v4391 = vand.u32 %v269, 4294901760
    %4392 = vmatprep.subr.mxu0 %v4391
    %v4393 = vand.u32 %v268, 4294901760
    %4394 = vmatpush1.msra.mxu0 %v4393
    %4395 = vmatprep.subr.mxu0 0.0
    %4396 = vmatpush1.msra.mxu0 0.0
    %4397 = vmatprep.subr.mxu0 0.0
    %4398 = vmatpush1.msra.mxu0 0.0
    %4399 = vmatprep.subr.mxu0 0.0
    %4400 = vmatpush1.msra.mxu0 0.0
    %4401 = vmatprep.subr.mxu0 0.0
    %4402 = vmatpush1.msra.mxu0 0.0
    %4403 = vmatprep.subr.mxu0 0.0
    %4404 = vmatpush1.msra.mxu0 0.0
    %4405 = vmatprep.subr.mxu0 0.0
    %4406 = vmatpush1.msra.mxu0 0.0
    %4407 = vmatprep.subr.mxu0 0.0
    %4408 = vmatpush1.msra.mxu0 0.0
    %4409 = vmatprep.subr.mxu0 0.0
    %4410 = vmatpush1.msra.mxu0 0.0
    %4411 = vmatprep.subr.mxu0 0.0
    %4412 = vmatpush1.msra.mxu0 0.0
    %4413 = vmatprep.subr.mxu0 0.0
    %4414 = vmatpush1.msra.mxu0 0.0
    %4415 = vmatprep.subr.mxu0 0.0
    %4416 = vmatpush1.msra.mxu0 0.0
    %4417 = vmatprep.subr.mxu0 0.0
    %4418 = vmatpush1.msra.mxu0 0.0
    %4419 = vmatprep.subr.mxu0 0.0
    %4420 = vmatpush1.msra.mxu0 0.0
    %4421 = vmatprep.subr.mxu0 0.0
    %4422 = vmatpush1.msra.mxu0 0.0
    %4423 = vmatprep.subr.mxu0 0.0
    %4424 = vmatpush1.msra.mxu0 0.0
    %4425 = vmatprep.subr.mxu0 0.0
    %4426 = vmatpush1.msra.mxu0 0.0
    %4427 = vmatprep.subr.mxu0 0.0
    %4428 = vmatpush1.msra.mxu0 0.0
    %4429 = vmatprep.subr.mxu0 0.0
    %4430 = vmatpush1.msra.mxu0 0.0
    %4431 = vmatprep.subr.mxu0 0.0
    %4432 = vmatpush1.msra.mxu0 0.0
    %4433 = vmatprep.subr.mxu0 0.0
    %4434 = vmatpush1.msra.mxu0 0.0
    %4435 = vmatprep.subr.mxu0 0.0
    %4436 = vmatpush1.msra.mxu0 0.0
    %4437 = vmatprep.subr.mxu0 0.0
    %4438 = vmatpush1.msra.mxu0 0.0
    %4439 = vmatprep.subr.mxu0 0.0
    %4440 = vmatpush1.msra.mxu0 0.0
    %4441 = vmatprep.subr.mxu0 0.0
    %4442 = vmatpush1.msra.mxu0 0.0
    %4443 = vmatprep.mubr.f32.mxu0 0.0
    %v4444 = vand.u32 %v4361, 4294901760
    %v4445 = vsub.f32 %v4361, %v4444
    %v4446 = vand.u32 %v4445, 4294901760
    %v4447 = vsub.f32 %v4445, %v4446
    %v4448 = vand.u32 %v4447, 4294901760
    %4449 = vmatmul.mubr.f32.gmra.mrb[0].mxu0 %v4448
    %v4450 = vpop.f32.mrb[0].mxu0
    %v4451 = vadd.f32 0.0, %v4450
    %v4452 = vpop.f32.mrb[0].mxu0
    %v4453 = vadd.f32 0.0, %v4452
    %4454 = vdwg.mxu0
    %v4455 = vand.u32 %v255, 4294901760
    %v4456 = vsub.f32 %v255, %v4455
    %v4457 = vand.u32 %v4456, 4294901760
    %v4458 = vsub.f32 %v4456, %v4457
    %v4459 = vand.u32 %v4458, 4294901760
    %4460 = vmatprep.subr.mxu0 %v4459
    %v4461 = vand.u32 %v254, 4294901760
    %v4462 = vsub.f32 %v254, %v4461
    %v4463 = vand.u32 %v4462, 4294901760
    %v4464 = vsub.f32 %v4462, %v4463
    %v4465 = vand.u32 %v4464, 4294901760
    %4466 = vmatpush1.msra.mxu0 %v4465
    %v4467 = vand.u32 %v257, 4294901760
    %v4468 = vsub.f32 %v257, %v4467
    %v4469 = vand.u32 %v4468, 4294901760
    %v4470 = vsub.f32 %v4468, %v4469
    %v4471 = vand.u32 %v4470, 4294901760
    %4472 = vmatprep.subr.mxu0 %v4471
    %v4473 = vand.u32 %v256, 4294901760
    %v4474 = vsub.f32 %v256, %v4473
    %v4475 = vand.u32 %v4474, 4294901760
    %v4476 = vsub.f32 %v4474, %v4475
    %v4477 = vand.u32 %v4476, 4294901760
    %4478 = vmatpush1.msra.mxu0 %v4477
    %v4479 = vand.u32 %v259, 4294901760
    %v4480 = vsub.f32 %v259, %v4479
    %v4481 = vand.u32 %v4480, 4294901760
    %v4482 = vsub.f32 %v4480, %v4481
    %v4483 = vand.u32 %v4482, 4294901760
    %4484 = vmatprep.subr.mxu0 %v4483
    %v4485 = vand.u32 %v258, 4294901760
    %v4486 = vsub.f32 %v258, %v4485
    %v4487 = vand.u32 %v4486, 4294901760
    %v4488 = vsub.f32 %v4486, %v4487
    %v4489 = vand.u32 %v4488, 4294901760
    %4490 = vmatpush1.msra.mxu0 %v4489
    %v4491 = vand.u32 %v261, 4294901760
    %v4492 = vsub.f32 %v261, %v4491
    %v4493 = vand.u32 %v4492, 4294901760
    %v4494 = vsub.f32 %v4492, %v4493
    %v4495 = vand.u32 %v4494, 4294901760
    %4496 = vmatprep.subr.mxu0 %v4495
    %v4497 = vand.u32 %v260, 4294901760
    %v4498 = vsub.f32 %v260, %v4497
    %v4499 = vand.u32 %v4498, 4294901760
    %v4500 = vsub.f32 %v4498, %v4499
    %v4501 = vand.u32 %v4500, 4294901760
    %4502 = vmatpush1.msra.mxu0 %v4501
    %v4503 = vand.u32 %v263, 4294901760
    %v4504 = vsub.f32 %v263, %v4503
    %v4505 = vand.u32 %v4504, 4294901760
    %v4506 = vsub.f32 %v4504, %v4505
    %v4507 = vand.u32 %v4506, 4294901760
    %4508 = vmatprep.subr.mxu0 %v4507
    %v4509 = vand.u32 %v262, 4294901760
    %v4510 = vsub.f32 %v262, %v4509
    %v4511 = vand.u32 %v4510, 4294901760
    %v4512 = vsub.f32 %v4510, %v4511
    %v4513 = vand.u32 %v4512, 4294901760
    %4514 = vmatpush1.msra.mxu0 %v4513
    %v4515 = vand.u32 %v265, 4294901760
    %v4516 = vsub.f32 %v265, %v4515
    %v4517 = vand.u32 %v4516, 4294901760
    %v4518 = vsub.f32 %v4516, %v4517
    %v4519 = vand.u32 %v4518, 4294901760
    %4520 = vmatprep.subr.mxu0 %v4519
    %v4521 = vand.u32 %v264, 4294901760
    %v4522 = vsub.f32 %v264, %v4521
    %v4523 = vand.u32 %v4522, 4294901760
    %v4524 = vsub.f32 %v4522, %v4523
    %v4525 = vand.u32 %v4524, 4294901760
    %4526 = vmatpush1.msra.mxu0 %v4525
    %v4527 = vand.u32 %v267, 4294901760
    %v4528 = vsub.f32 %v267, %v4527
    %v4529 = vand.u32 %v4528, 4294901760
    %v4530 = vsub.f32 %v4528, %v4529
    %v4531 = vand.u32 %v4530, 4294901760
    %4532 = vmatprep.subr.mxu0 %v4531
    %v4533 = vand.u32 %v266, 4294901760
    %v4534 = vsub.f32 %v266, %v4533
    %v4535 = vand.u32 %v4534, 4294901760
    %v4536 = vsub.f32 %v4534, %v4535
    %v4537 = vand.u32 %v4536, 4294901760
    %4538 = vmatpush1.msra.mxu0 %v4537
    %v4539 = vand.u32 %v269, 4294901760
    %v4540 = vsub.f32 %v269, %v4539
    %v4541 = vand.u32 %v4540, 4294901760
    %v4542 = vsub.f32 %v4540, %v4541
    %v4543 = vand.u32 %v4542, 4294901760
    %4544 = vmatprep.subr.mxu0 %v4543
    %v4545 = vand.u32 %v268, 4294901760
    %v4546 = vsub.f32 %v268, %v4545
    %v4547 = vand.u32 %v4546, 4294901760
    %v4548 = vsub.f32 %v4546, %v4547
    %v4549 = vand.u32 %v4548, 4294901760
    %4550 = vmatpush1.msra.mxu0 %v4549
    %4551 = vmatprep.subr.mxu0 0.0
    %4552 = vmatpush1.msra.mxu0 0.0
    %4553 = vmatprep.subr.mxu0 0.0
    %4554 = vmatpush1.msra.mxu0 0.0
    %4555 = vmatprep.subr.mxu0 0.0
    %4556 = vmatpush1.msra.mxu0 0.0
    %4557 = vmatprep.subr.mxu0 0.0
    %4558 = vmatpush1.msra.mxu0 0.0
    %4559 = vmatprep.subr.mxu0 0.0
    %4560 = vmatpush1.msra.mxu0 0.0
    %4561 = vmatprep.subr.mxu0 0.0
    %4562 = vmatpush1.msra.mxu0 0.0
    %4563 = vmatprep.subr.mxu0 0.0
    %4564 = vmatpush1.msra.mxu0 0.0
    %4565 = vmatprep.subr.mxu0 0.0
    %4566 = vmatpush1.msra.mxu0 0.0
    %4567 = vmatprep.subr.mxu0 0.0
    %4568 = vmatpush1.msra.mxu0 0.0
    %4569 = vmatprep.subr.mxu0 0.0
    %4570 = vmatpush1.msra.mxu0 0.0
    %4571 = vmatprep.subr.mxu0 0.0
    %4572 = vmatpush1.msra.mxu0 0.0
    %4573 = vmatprep.subr.mxu0 0.0
    %4574 = vmatpush1.msra.mxu0 0.0
    %4575 = vmatprep.subr.mxu0 0.0
    %4576 = vmatpush1.msra.mxu0 0.0
    %4577 = vmatprep.subr.mxu0 0.0
    %4578 = vmatpush1.msra.mxu0 0.0
    %4579 = vmatprep.subr.mxu0 0.0
    %4580 = vmatpush1.msra.mxu0 0.0
    %4581 = vmatprep.subr.mxu0 0.0
    %4582 = vmatpush1.msra.mxu0 0.0
    %4583 = vmatprep.subr.mxu0 0.0
    %4584 = vmatpush1.msra.mxu0 0.0
    %4585 = vmatprep.subr.mxu0 0.0
    %4586 = vmatpush1.msra.mxu0 0.0
    %4587 = vmatprep.subr.mxu0 0.0
    %4588 = vmatpush1.msra.mxu0 0.0
    %4589 = vmatprep.subr.mxu0 0.0
    %4590 = vmatpush1.msra.mxu0 0.0
    %4591 = vmatprep.subr.mxu0 0.0
    %4592 = vmatpush1.msra.mxu0 0.0
    %4593 = vmatprep.subr.mxu0 0.0
    %4594 = vmatpush1.msra.mxu0 0.0
    %4595 = vmatprep.subr.mxu0 0.0
    %4596 = vmatpush1.msra.mxu0 0.0
    %4597 = vmatprep.subr.mxu0 0.0
    %4598 = vmatpush1.msra.mxu0 0.0
    %4599 = vmatprep.mubr.f32.mxu0 0.0
    %v4600 = vand.u32 %v4361, 4294901760
    %4601 = vmatmul.mubr.f32.gmra.mrb[0].mxu0 %v4600
    %v4602 = vpop.f32.mrb[0].mxu0
    %v4603 = vadd.f32 %v4451, %v4602
    %v4604 = vpop.f32.mrb[0].mxu0
    %v4605 = vadd.f32 %v4453, %v4604
    %4606 = vdwg.mxu0
    %v4607 = vand.u32 %v255, 4294901760
    %v4608 = vsub.f32 %v255, %v4607
    %4609 = vmatprep.subr.mxu0 %v4608
    %v4610 = vand.u32 %v254, 4294901760
    %v4611 = vsub.f32 %v254, %v4610
    %4612 = vmatpush1.msra.mxu0 %v4611
    %v4613 = vand.u32 %v257, 4294901760
    %v4614 = vsub.f32 %v257, %v4613
    %4615 = vmatprep.subr.mxu0 %v4614
    %v4616 = vand.u32 %v256, 4294901760
    %v4617 = vsub.f32 %v256, %v4616
    %4618 = vmatpush1.msra.mxu0 %v4617
    %v4619 = vand.u32 %v259, 4294901760
    %v4620 = vsub.f32 %v259, %v4619
    %4621 = vmatprep.subr.mxu0 %v4620
    %v4622 = vand.u32 %v258, 4294901760
    %v4623 = vsub.f32 %v258, %v4622
    %4624 = vmatpush1.msra.mxu0 %v4623
    %v4625 = vand.u32 %v261, 4294901760
    %v4626 = vsub.f32 %v261, %v4625
    %4627 = vmatprep.subr.mxu0 %v4626
    %v4628 = vand.u32 %v260, 4294901760
    %v4629 = vsub.f32 %v260, %v4628
    %4630 = vmatpush1.msra.mxu0 %v4629
    %v4631 = vand.u32 %v263, 4294901760
    %v4632 = vsub.f32 %v263, %v4631
    %4633 = vmatprep.subr.mxu0 %v4632
    %v4634 = vand.u32 %v262, 4294901760
    %v4635 = vsub.f32 %v262, %v4634
    %4636 = vmatpush1.msra.mxu0 %v4635
    %v4637 = vand.u32 %v265, 4294901760
    %v4638 = vsub.f32 %v265, %v4637
    %4639 = vmatprep.subr.mxu0 %v4638
    %v4640 = vand.u32 %v264, 4294901760
    %v4641 = vsub.f32 %v264, %v4640
    %4642 = vmatpush1.msra.mxu0 %v4641
    %v4643 = vand.u32 %v267, 4294901760
    %v4644 = vsub.f32 %v267, %v4643
    %4645 = vmatprep.subr.mxu0 %v4644
    %v4646 = vand.u32 %v266, 4294901760
    %v4647 = vsub.f32 %v266, %v4646
    %4648 = vmatpush1.msra.mxu0 %v4647
    %v4649 = vand.u32 %v269, 4294901760
    %v4650 = vsub.f32 %v269, %v4649
    %4651 = vmatprep.subr.mxu0 %v4650
    %v4652 = vand.u32 %v268, 4294901760
    %v4653 = vsub.f32 %v268, %v4652
    %4654 = vmatpush1.msra.mxu0 %v4653
    %4655 = vmatprep.subr.mxu0 0.0
    %4656 = vmatpush1.msra.mxu0 0.0
    %4657 = vmatprep.subr.mxu0 0.0
    %4658 = vmatpush1.msra.mxu0 0.0
    %4659 = vmatprep.subr.mxu0 0.0
    %4660 = vmatpush1.msra.mxu0 0.0
    %4661 = vmatprep.subr.mxu0 0.0
    %4662 = vmatpush1.msra.mxu0 0.0
    %4663 = vmatprep.subr.mxu0 0.0
    %4664 = vmatpush1.msra.mxu0 0.0
    %4665 = vmatprep.subr.mxu0 0.0
    %4666 = vmatpush1.msra.mxu0 0.0
    %4667 = vmatprep.subr.mxu0 0.0
    %4668 = vmatpush1.msra.mxu0 0.0
    %4669 = vmatprep.subr.mxu0 0.0
    %4670 = vmatpush1.msra.mxu0 0.0
    %4671 = vmatprep.subr.mxu0 0.0
    %4672 = vmatpush1.msra.mxu0 0.0
    %4673 = vmatprep.subr.mxu0 0.0
    %4674 = vmatpush1.msra.mxu0 0.0
    %4675 = vmatprep.subr.mxu0 0.0
    %4676 = vmatpush1.msra.mxu0 0.0
    %4677 = vmatprep.subr.mxu0 0.0
    %4678 = vmatpush1.msra.mxu0 0.0
    %4679 = vmatprep.subr.mxu0 0.0
    %4680 = vmatpush1.msra.mxu0 0.0
    %4681 = vmatprep.subr.mxu0 0.0
    %4682 = vmatpush1.msra.mxu0 0.0
    %4683 = vmatprep.subr.mxu0 0.0
    %4684 = vmatpush1.msra.mxu0 0.0
    %4685 = vmatprep.subr.mxu0 0.0
    %4686 = vmatpush1.msra.mxu0 0.0
    %4687 = vmatprep.subr.mxu0 0.0
    %4688 = vmatpush1.msra.mxu0 0.0
    %4689 = vmatprep.subr.mxu0 0.0
    %4690 = vmatpush1.msra.mxu0 0.0
    %4691 = vmatprep.subr.mxu0 0.0
    %4692 = vmatpush1.msra.mxu0 0.0
    %4693 = vmatprep.subr.mxu0 0.0
    %4694 = vmatpush1.msra.mxu0 0.0
    %4695 = vmatprep.subr.mxu0 0.0
    %4696 = vmatpush1.msra.mxu0 0.0
    %4697 = vmatprep.subr.mxu0 0.0
    %4698 = vmatpush1.msra.mxu0 0.0
    %4699 = vmatprep.subr.mxu0 0.0
    %4700 = vmatpush1.msra.mxu0 0.0
    %4701 = vmatprep.subr.mxu0 0.0
    %4702 = vmatpush1.msra.mxu0 0.0
    %4703 = vmatprep.mubr.f32.mxu0 0.0
    %v4704 = vand.u32 %v4361, 4294901760
    %v4705 = vsub.f32 %v4361, %v4704
    %4706 = vmatmul.mubr.f32.gmra.mrb[0].mxu0 %v4705
    %v4707 = vpop.f32.mrb[0].mxu0
    %v4708 = vadd.f32 %v4603, %v4707
    %v4709 = vpop.f32.mrb[0].mxu0
    %v4710 = vadd.f32 %v4605, %v4709
    %4711 = vdwg.mxu0
    %v4712 = vand.u32 %v255, 4294901760
    %4713 = vmatprep.subr.mxu0 %v4712
    %v4714 = vand.u32 %v254, 4294901760
    %4715 = vmatpush1.msra.mxu0 %v4714
    %v4716 = vand.u32 %v257, 4294901760
    %4717 = vmatprep.subr.mxu0 %v4716
    %v4718 = vand.u32 %v256, 4294901760
    %4719 = vmatpush1.msra.mxu0 %v4718
    %v4720 = vand.u32 %v259, 4294901760
    %4721 = vmatprep.subr.mxu0 %v4720
    %v4722 = vand.u32 %v258, 4294901760
    %4723 = vmatpush1.msra.mxu0 %v4722
    %v4724 = vand.u32 %v261, 4294901760
    %4725 = vmatprep.subr.mxu0 %v4724
    %v4726 = vand.u32 %v260, 4294901760
    %4727 = vmatpush1.msra.mxu0 %v4726
    %v4728 = vand.u32 %v263, 4294901760
    %4729 = vmatprep.subr.mxu0 %v4728
    %v4730 = vand.u32 %v262, 4294901760
    %4731 = vmatpush1.msra.mxu0 %v4730
    %v4732 = vand.u32 %v265, 4294901760
    %4733 = vmatprep.subr.mxu0 %v4732
    %v4734 = vand.u32 %v264, 4294901760
    %4735 = vmatpush1.msra.mxu0 %v4734
    %v4736 = vand.u32 %v267, 4294901760
    %4737 = vmatprep.subr.mxu0 %v4736
    %v4738 = vand.u32 %v266, 4294901760
    %4739 = vmatpush1.msra.mxu0 %v4738
    %v4740 = vand.u32 %v269, 4294901760
    %4741 = vmatprep.subr.mxu0 %v4740
    %v4742 = vand.u32 %v268, 4294901760
    %4743 = vmatpush1.msra.mxu0 %v4742
    %4744 = vmatprep.subr.mxu0 0.0
    %4745 = vmatpush1.msra.mxu0 0.0
    %4746 = vmatprep.subr.mxu0 0.0
    %4747 = vmatpush1.msra.mxu0 0.0
    %4748 = vmatprep.subr.mxu0 0.0
    %4749 = vmatpush1.msra.mxu0 0.0
    %4750 = vmatprep.subr.mxu0 0.0
    %4751 = vmatpush1.msra.mxu0 0.0
    %4752 = vmatprep.subr.mxu0 0.0
    %4753 = vmatpush1.msra.mxu0 0.0
    %4754 = vmatprep.subr.mxu0 0.0
    %4755 = vmatpush1.msra.mxu0 0.0
    %4756 = vmatprep.subr.mxu0 0.0
    %4757 = vmatpush1.msra.mxu0 0.0
    %4758 = vmatprep.subr.mxu0 0.0
    %4759 = vmatpush1.msra.mxu0 0.0
    %4760 = vmatprep.subr.mxu0 0.0
    %4761 = vmatpush1.msra.mxu0 0.0
    %4762 = vmatprep.subr.mxu0 0.0
    %4763 = vmatpush1.msra.mxu0 0.0
    %4764 = vmatprep.subr.mxu0 0.0
    %4765 = vmatpush1.msra.mxu0 0.0
    %4766 = vmatprep.subr.mxu0 0.0
    %4767 = vmatpush1.msra.mxu0 0.0
    %4768 = vmatprep.subr.mxu0 0.0
    %4769 = vmatpush1.msra.mxu0 0.0
    %4770 = vmatprep.subr.mxu0 0.0
    %4771 = vmatpush1.msra.mxu0 0.0
    %4772 = vmatprep.subr.mxu0 0.0
    %4773 = vmatpush1.msra.mxu0 0.0
    %4774 = vmatprep.subr.mxu0 0.0
    %4775 = vmatpush1.msra.mxu0 0.0
    %4776 = vmatprep.subr.mxu0 0.0
    %4777 = vmatpush1.msra.mxu0 0.0
    %4778 = vmatprep.subr.mxu0 0.0
    %4779 = vmatpush1.msra.mxu0 0.0
    %4780 = vmatprep.subr.mxu0 0.0
    %4781 = vmatpush1.msra.mxu0 0.0
    %4782 = vmatprep.subr.mxu0 0.0
    %4783 = vmatpush1.msra.mxu0 0.0
    %4784 = vmatprep.subr.mxu0 0.0
    %4785 = vmatpush1.msra.mxu0 0.0
    %4786 = vmatprep.subr.mxu0 0.0
    %4787 = vmatpush1.msra.mxu0 0.0
    %4788 = vmatprep.subr.mxu0 0.0
    %4789 = vmatpush1.msra.mxu0 0.0
    %4790 = vmatprep.subr.mxu0 0.0
    %4791 = vmatpush1.msra.mxu0 0.0
    %4792 = vmatprep.mubr.f32.mxu0 0.0
    %v4793 = vand.u32 %v4361, 4294901760
    %v4794 = vsub.f32 %v4361, %v4793
    %v4795 = vand.u32 %v4794, 4294901760
    %4796 = vmatmul.mubr.f32.gmra.mrb[0].mxu0 %v4795
    %v4797 = vpop.f32.mrb[0].mxu0
    %v4798 = vadd.f32 %v4708, %v4797
    %v4799 = vpop.f32.mrb[0].mxu0
    %v4800 = vadd.f32 %v4710, %v4799
    %4801 = vdwg.mxu0
    %v4802 = vand.u32 %v255, 4294901760
    %v4803 = vsub.f32 %v255, %v4802
    %v4804 = vand.u32 %v4803, 4294901760
    %4805 = vmatprep.subr.mxu0 %v4804
    %v4806 = vand.u32 %v254, 4294901760
    %v4807 = vsub.f32 %v254, %v4806
    %v4808 = vand.u32 %v4807, 4294901760
    %4809 = vmatpush1.msra.mxu0 %v4808
    %v4810 = vand.u32 %v257, 4294901760
    %v4811 = vsub.f32 %v257, %v4810
    %v4812 = vand.u32 %v4811, 4294901760
    %4813 = vmatprep.subr.mxu0 %v4812
    %v4814 = vand.u32 %v256, 4294901760
    %v4815 = vsub.f32 %v256, %v4814
    %v4816 = vand.u32 %v4815, 4294901760
    %4817 = vmatpush1.msra.mxu0 %v4816
    %v4818 = vand.u32 %v259, 4294901760
    %v4819 = vsub.f32 %v259, %v4818
    %v4820 = vand.u32 %v4819, 4294901760
    %4821 = vmatprep.subr.mxu0 %v4820
    %v4822 = vand.u32 %v258, 4294901760
    %v4823 = vsub.f32 %v258, %v4822
    %v4824 = vand.u32 %v4823, 4294901760
    %4825 = vmatpush1.msra.mxu0 %v4824
    %v4826 = vand.u32 %v261, 4294901760
    %v4827 = vsub.f32 %v261, %v4826
    %v4828 = vand.u32 %v4827, 4294901760
    %4829 = vmatprep.subr.mxu0 %v4828
    %v4830 = vand.u32 %v260, 4294901760
    %v4831 = vsub.f32 %v260, %v4830
    %v4832 = vand.u32 %v4831, 4294901760
    %4833 = vmatpush1.msra.mxu0 %v4832
    %v4834 = vand.u32 %v263, 4294901760
    %v4835 = vsub.f32 %v263, %v4834
    %v4836 = vand.u32 %v4835, 4294901760
    %4837 = vmatprep.subr.mxu0 %v4836
    %v4838 = vand.u32 %v262, 4294901760
    %v4839 = vsub.f32 %v262, %v4838
    %v4840 = vand.u32 %v4839, 4294901760
    %4841 = vmatpush1.msra.mxu0 %v4840
    %v4842 = vand.u32 %v265, 4294901760
    %v4843 = vsub.f32 %v265, %v4842
    %v4844 = vand.u32 %v4843, 4294901760
    %4845 = vmatprep.subr.mxu0 %v4844
    %v4846 = vand.u32 %v264, 4294901760
    %v4847 = vsub.f32 %v264, %v4846
    %v4848 = vand.u32 %v4847, 4294901760
    %4849 = vmatpush1.msra.mxu0 %v4848
    %v4850 = vand.u32 %v267, 4294901760
    %v4851 = vsub.f32 %v267, %v4850
    %v4852 = vand.u32 %v4851, 4294901760
    %4853 = vmatprep.subr.mxu0 %v4852
    %v4854 = vand.u32 %v266, 4294901760
    %v4855 = vsub.f32 %v266, %v4854
    %v4856 = vand.u32 %v4855, 4294901760
    %4857 = vmatpush1.msra.mxu0 %v4856
    %v4858 = vand.u32 %v269, 4294901760
    %v4859 = vsub.f32 %v269, %v4858
    %v4860 = vand.u32 %v4859, 4294901760
    %4861 = vmatprep.subr.mxu0 %v4860
    %v4862 = vand.u32 %v268, 4294901760
    %v4863 = vsub.f32 %v268, %v4862
    %v4864 = vand.u32 %v4863, 4294901760
    %4865 = vmatpush1.msra.mxu0 %v4864
    %4866 = vmatprep.subr.mxu0 0.0
    %4867 = vmatpush1.msra.mxu0 0.0
    %4868 = vmatprep.subr.mxu0 0.0
    %4869 = vmatpush1.msra.mxu0 0.0
    %4870 = vmatprep.subr.mxu0 0.0
    %4871 = vmatpush1.msra.mxu0 0.0
    %4872 = vmatprep.subr.mxu0 0.0
    %4873 = vmatpush1.msra.mxu0 0.0
    %4874 = vmatprep.subr.mxu0 0.0
    %4875 = vmatpush1.msra.mxu0 0.0
    %4876 = vmatprep.subr.mxu0 0.0
    %4877 = vmatpush1.msra.mxu0 0.0
    %4878 = vmatprep.subr.mxu0 0.0
    %4879 = vmatpush1.msra.mxu0 0.0
    %4880 = vmatprep.subr.mxu0 0.0
    %4881 = vmatpush1.msra.mxu0 0.0
    %4882 = vmatprep.subr.mxu0 0.0
    %4883 = vmatpush1.msra.mxu0 0.0
    %4884 = vmatprep.subr.mxu0 0.0
    %4885 = vmatpush1.msra.mxu0 0.0
    %4886 = vmatprep.subr.mxu0 0.0
    %4887 = vmatpush1.msra.mxu0 0.0
    %4888 = vmatprep.subr.mxu0 0.0
    %4889 = vmatpush1.msra.mxu0 0.0
    %4890 = vmatprep.subr.mxu0 0.0
    %4891 = vmatpush1.msra.mxu0 0.0
    %4892 = vmatprep.subr.mxu0 0.0
    %4893 = vmatpush1.msra.mxu0 0.0
    %4894 = vmatprep.subr.mxu0 0.0
    %4895 = vmatpush1.msra.mxu0 0.0
    %4896 = vmatprep.subr.mxu0 0.0
    %4897 = vmatpush1.msra.mxu0 0.0
    %4898 = vmatprep.subr.mxu0 0.0
    %4899 = vmatpush1.msra.mxu0 0.0
    %4900 = vmatprep.subr.mxu0 0.0
    %4901 = vmatpush1.msra.mxu0 0.0
    %4902 = vmatprep.subr.mxu0 0.0
    %4903 = vmatpush1.msra.mxu0 0.0
    %4904 = vmatprep.subr.mxu0 0.0
    %4905 = vmatpush1.msra.mxu0 0.0
    %4906 = vmatprep.subr.mxu0 0.0
    %4907 = vmatpush1.msra.mxu0 0.0
    %4908 = vmatprep.subr.mxu0 0.0
    %4909 = vmatpush1.msra.mxu0 0.0
    %4910 = vmatprep.subr.mxu0 0.0
    %4911 = vmatpush1.msra.mxu0 0.0
    %4912 = vmatprep.subr.mxu0 0.0
    %4913 = vmatpush1.msra.mxu0 0.0
    %4914 = vmatprep.mubr.f32.mxu0 0.0
    %v4915 = vand.u32 %v4361, 4294901760
    %4916 = vmatmul.mubr.f32.gmra.mrb[0].mxu0 %v4915
    %v4917 = vpop.f32.mrb[0].mxu0
    %v4918 = vadd.f32 %v4798, %v4917
    %v4919 = vpop.f32.mrb[0].mxu0
    %v4920 = vadd.f32 %v4800, %v4919
    %4921 = vdwg.mxu0
    %v4922 = vand.u32 %v255, 4294901760
    %4923 = vmatprep.subr.mxu0 %v4922
    %v4924 = vand.u32 %v254, 4294901760
    %4925 = vmatpush1.msra.mxu0 %v4924
    %v4926 = vand.u32 %v257, 4294901760
    %4927 = vmatprep.subr.mxu0 %v4926
    %v4928 = vand.u32 %v256, 4294901760
    %4929 = vmatpush1.msra.mxu0 %v4928
    %v4930 = vand.u32 %v259, 4294901760
    %4931 = vmatprep.subr.mxu0 %v4930
    %v4932 = vand.u32 %v258, 4294901760
    %4933 = vmatpush1.msra.mxu0 %v4932
    %v4934 = vand.u32 %v261, 4294901760
    %4935 = vmatprep.subr.mxu0 %v4934
    %v4936 = vand.u32 %v260, 4294901760
    %4937 = vmatpush1.msra.mxu0 %v4936
    %v4938 = vand.u32 %v263, 4294901760
    %4939 = vmatprep.subr.mxu0 %v4938
    %v4940 = vand.u32 %v262, 4294901760
    %4941 = vmatpush1.msra.mxu0 %v4940
    %v4942 = vand.u32 %v265, 4294901760
    %4943 = vmatprep.subr.mxu0 %v4942
    %v4944 = vand.u32 %v264, 4294901760
    %4945 = vmatpush1.msra.mxu0 %v4944
    %v4946 = vand.u32 %v267, 4294901760
    %4947 = vmatprep.subr.mxu0 %v4946
    %v4948 = vand.u32 %v266, 4294901760
    %4949 = vmatpush1.msra.mxu0 %v4948
    %v4950 = vand.u32 %v269, 4294901760
    %4951 = vmatprep.subr.mxu0 %v4950
    %v4952 = vand.u32 %v268, 4294901760
    %4953 = vmatpush1.msra.mxu0 %v4952
    %4954 = vmatprep.subr.mxu0 0.0
    %4955 = vmatpush1.msra.mxu0 0.0
    %4956 = vmatprep.subr.mxu0 0.0
    %4957 = vmatpush1.msra.mxu0 0.0
    %4958 = vmatprep.subr.mxu0 0.0
    %4959 = vmatpush1.msra.mxu0 0.0
    %4960 = vmatprep.subr.mxu0 0.0
    %4961 = vmatpush1.msra.mxu0 0.0
    %4962 = vmatprep.subr.mxu0 0.0
    %4963 = vmatpush1.msra.mxu0 0.0
    %4964 = vmatprep.subr.mxu0 0.0
    %4965 = vmatpush1.msra.mxu0 0.0
    %4966 = vmatprep.subr.mxu0 0.0
    %4967 = vmatpush1.msra.mxu0 0.0
    %4968 = vmatprep.subr.mxu0 0.0
    %4969 = vmatpush1.msra.mxu0 0.0
    %4970 = vmatprep.subr.mxu0 0.0
    %4971 = vmatpush1.msra.mxu0 0.0
    %4972 = vmatprep.subr.mxu0 0.0
    %4973 = vmatpush1.msra.mxu0 0.0
    %4974 = vmatprep.subr.mxu0 0.0
    %4975 = vmatpush1.msra.mxu0 0.0
    %4976 = vmatprep.subr.mxu0 0.0
    %4977 = vmatpush1.msra.mxu0 0.0
    %4978 = vmatprep.subr.mxu0 0.0
    %4979 = vmatpush1.msra.mxu0 0.0
    %4980 = vmatprep.subr.mxu0 0.0
    %4981 = vmatpush1.msra.mxu0 0.0
    %4982 = vmatprep.subr.mxu0 0.0
    %4983 = vmatpush1.msra.mxu0 0.0
    %4984 = vmatprep.subr.mxu0 0.0
    %4985 = vmatpush1.msra.mxu0 0.0
    %4986 = vmatprep.subr.mxu0 0.0
    %4987 = vmatpush1.msra.mxu0 0.0
    %4988 = vmatprep.subr.mxu0 0.0
    %4989 = vmatpush1.msra.mxu0 0.0
    %4990 = vmatprep.subr.mxu0 0.0
    %4991 = vmatpush1.msra.mxu0 0.0
    %4992 = vmatprep.subr.mxu0 0.0
    %4993 = vmatpush1.msra.mxu0 0.0
    %4994 = vmatprep.subr.mxu0 0.0
    %4995 = vmatpush1.msra.mxu0 0.0
    %4996 = vmatprep.subr.mxu0 0.0
    %4997 = vmatpush1.msra.mxu0 0.0
    %4998 = vmatprep.subr.mxu0 0.0
    %4999 = vmatpush1.msra.mxu0 0.0
    %5000 = vmatprep.subr.mxu0 0.0
    %5001 = vmatpush1.msra.mxu0 0.0
    %5002 = vmatprep.mubr.f32.mxu0 0.0
    %v5003 = vand.u32 %v4361, 4294901760
    %5004 = vmatmul.mubr.f32.gmra.mrb[0].mxu0 %v5003
    %v5005 = vpop.f32.mrb[0].mxu0
    %v5006 = vadd.f32 %v4918, %v5005
    %v5007 = vpop.f32.mrb[0].mxu0
    %v5008 = vadd.f32 %v4920, %v5007
    %5009 = vdwg.mxu0
    %v5010 = vadd.f32 %v4359, %v5006
    %v5011 = vxor.u32 %v5010, 2147483648
    %v5012 = vmul.f32 %v5011, 1.442695
    %v5013 = vpow.pop %v5012
    %v5014 = vadd.f32 %v5013, 1.0
    %v5015 = vrcp.pop %v5014
    %v5016 = vmul.f32 1.0, %v5015
    %v5017 = vadd.f32 %v5008, %v275
    %v5018 = vmul.f32 %v5016, %v5017
    %v5019 = vadd.f32 %v4360, %v5018
    %v5020 = vtanh.pop %v5019
    %v5021 = vsub.f32 1.0, %v5016
    %5023 = vrot.lane.b32.xlu0 %v5020, 64
    %v5024 = vpop.permute.xlu0 %5023
    %v5026 = vmul.f32 %v5021, %v5024
    %v5027 = vmul.f32 %v5016, %v4349
    %v5028 = vadd.f32 %v5026, %v5027
    %5030 = vrot.lane.b32.xlu0 %v5028, 64
    %v5031 = vpop.permute.xlu0 %5030
    %s5033 = scalar_lea.vmem [#allocation3], 48
    %5034 = vst.msk [vmem:[%s5033] sm:$0xff] %vm283, %v5031
    %s5035 = smul.u32 7, 2
    %s5036 = smul.addr %s5035, 8
    %s5037 = scalar_lea.vmem [#allocation2], %s5036
    %v5038 = vld [vmem:[%s5037] sm:$0xff]
    %v5039 = vld [vmem:[%s5037 + $0x8] sm:$0xff]
    %v5040 = vsel %vm283, %v5031, 0
    %v5042 = vand.u32 %v255, 4294901760
    %5043 = vmatprep.subr.mxu0 %v5042
    %v5044 = vand.u32 %v254, 4294901760
    %5045 = vmatpush1.msra.mxu0 %v5044
    %v5046 = vand.u32 %v257, 4294901760
    %5047 = vmatprep.subr.mxu0 %v5046
    %v5048 = vand.u32 %v256, 4294901760
    %5049 = vmatpush1.msra.mxu0 %v5048
    %v5050 = vand.u32 %v259, 4294901760
    %5051 = vmatprep.subr.mxu0 %v5050
    %v5052 = vand.u32 %v258, 4294901760
    %5053 = vmatpush1.msra.mxu0 %v5052
    %v5054 = vand.u32 %v261, 4294901760
    %5055 = vmatprep.subr.mxu0 %v5054
    %v5056 = vand.u32 %v260, 4294901760
    %5057 = vmatpush1.msra.mxu0 %v5056
    %v5058 = vand.u32 %v263, 4294901760
    %5059 = vmatprep.subr.mxu0 %v5058
    %v5060 = vand.u32 %v262, 4294901760
    %5061 = vmatpush1.msra.mxu0 %v5060
    %v5062 = vand.u32 %v265, 4294901760
    %5063 = vmatprep.subr.mxu0 %v5062
    %v5064 = vand.u32 %v264, 4294901760
    %5065 = vmatpush1.msra.mxu0 %v5064
    %v5066 = vand.u32 %v267, 4294901760
    %5067 = vmatprep.subr.mxu0 %v5066
    %v5068 = vand.u32 %v266, 4294901760
    %5069 = vmatpush1.msra.mxu0 %v5068
    %v5070 = vand.u32 %v269, 4294901760
    %5071 = vmatprep.subr.mxu0 %v5070
    %v5072 = vand.u32 %v268, 4294901760
    %5073 = vmatpush1.msra.mxu0 %v5072
    %5074 = vmatprep.subr.mxu0 0.0
    %5075 = vmatpush1.msra.mxu0 0.0
    %5076 = vmatprep.subr.mxu0 0.0
    %5077 = vmatpush1.msra.mxu0 0.0
    %5078 = vmatprep.subr.mxu0 0.0
    %5079 = vmatpush1.msra.mxu0 0.0
    %5080 = vmatprep.subr.mxu0 0.0
    %5081 = vmatpush1.msra.mxu0 0.0
    %5082 = vmatprep.subr.mxu0 0.0
    %5083 = vmatpush1.msra.mxu0 0.0
    %5084 = vmatprep.subr.mxu0 0.0
    %5085 = vmatpush1.msra.mxu0 0.0
    %5086 = vmatprep.subr.mxu0 0.0
    %5087 = vmatpush1.msra.mxu0 0.0
    %5088 = vmatprep.subr.mxu0 0.0
    %5089 = vmatpush1.msra.mxu0 0.0
    %5090 = vmatprep.subr.mxu0 0.0
    %5091 = vmatpush1.msra.mxu0 0.0
    %5092 = vmatprep.subr.mxu0 0.0
    %5093 = vmatpush1.msra.mxu0 0.0
    %5094 = vmatprep.subr.mxu0 0.0
    %5095 = vmatpush1.msra.mxu0 0.0
    %5096 = vmatprep.subr.mxu0 0.0
    %5097 = vmatpush1.msra.mxu0 0.0
    %5098 = vmatprep.subr.mxu0 0.0
    %5099 = vmatpush1.msra.mxu0 0.0
    %5100 = vmatprep.subr.mxu0 0.0
    %5101 = vmatpush1.msra.mxu0 0.0
    %5102 = vmatprep.subr.mxu0 0.0
    %5103 = vmatpush1.msra.mxu0 0.0
    %5104 = vmatprep.subr.mxu0 0.0
    %5105 = vmatpush1.msra.mxu0 0.0
    %5106 = vmatprep.subr.mxu0 0.0
    %5107 = vmatpush1.msra.mxu0 0.0
    %5108 = vmatprep.subr.mxu0 0.0
    %5109 = vmatpush1.msra.mxu0 0.0
    %5110 = vmatprep.subr.mxu0 0.0
    %5111 = vmatpush1.msra.mxu0 0.0
    %5112 = vmatprep.subr.mxu0 0.0
    %5113 = vmatpush1.msra.mxu0 0.0
    %5114 = vmatprep.subr.mxu0 0.0
    %5115 = vmatpush1.msra.mxu0 0.0
    %5116 = vmatprep.subr.mxu0 0.0
    %5117 = vmatpush1.msra.mxu0 0.0
    %5118 = vmatprep.subr.mxu0 0.0
    %5119 = vmatpush1.msra.mxu0 0.0
    %5120 = vmatprep.subr.mxu0 0.0
    %5121 = vmatpush1.msra.mxu0 0.0
    %5122 = vmatprep.mubr.f32.mxu0 0.0
    %v5123 = vand.u32 %v5040, 4294901760
    %v5124 = vsub.f32 %v5040, %v5123
    %v5125 = vand.u32 %v5124, 4294901760
    %v5126 = vsub.f32 %v5124, %v5125
    %v5127 = vand.u32 %v5126, 4294901760
    %5128 = vmatmul.mubr.f32.gmra.mrb[0].mxu0 %v5127
    %v5129 = vpop.f32.mrb[0].mxu0
    %v5130 = vadd.f32 0.0, %v5129
    %v5131 = vpop.f32.mrb[0].mxu0
    %v5132 = vadd.f32 0.0, %v5131
    %5133 = vdwg.mxu0
    %v5134 = vand.u32 %v255, 4294901760
    %v5135 = vsub.f32 %v255, %v5134
    %v5136 = vand.u32 %v5135, 4294901760
    %v5137 = vsub.f32 %v5135, %v5136
    %v5138 = vand.u32 %v5137, 4294901760
    %5139 = vmatprep.subr.mxu0 %v5138
    %v5140 = vand.u32 %v254, 4294901760
    %v5141 = vsub.f32 %v254, %v5140
    %v5142 = vand.u32 %v5141, 4294901760
    %v5143 = vsub.f32 %v5141, %v5142
    %v5144 = vand.u32 %v5143, 4294901760
    %5145 = vmatpush1.msra.mxu0 %v5144
    %v5146 = vand.u32 %v257, 4294901760
    %v5147 = vsub.f32 %v257, %v5146
    %v5148 = vand.u32 %v5147, 4294901760
    %v5149 = vsub.f32 %v5147, %v5148
    %v5150 = vand.u32 %v5149, 4294901760
    %5151 = vmatprep.subr.mxu0 %v5150
    %v5152 = vand.u32 %v256, 4294901760
    %v5153 = vsub.f32 %v256, %v5152
    %v5154 = vand.u32 %v5153, 4294901760
    %v5155 = vsub.f32 %v5153, %v5154
    %v5156 = vand.u32 %v5155, 4294901760
    %5157 = vmatpush1.msra.mxu0 %v5156
    %v5158 = vand.u32 %v259, 4294901760
    %v5159 = vsub.f32 %v259, %v5158
    %v5160 = vand.u32 %v5159, 4294901760
    %v5161 = vsub.f32 %v5159, %v5160
    %v5162 = vand.u32 %v5161, 4294901760
    %5163 = vmatprep.subr.mxu0 %v5162
    %v5164 = vand.u32 %v258, 4294901760
    %v5165 = vsub.f32 %v258, %v5164
    %v5166 = vand.u32 %v5165, 4294901760
    %v5167 = vsub.f32 %v5165, %v5166
    %v5168 = vand.u32 %v5167, 4294901760
    %5169 = vmatpush1.msra.mxu0 %v5168
    %v5170 = vand.u32 %v261, 4294901760
    %v5171 = vsub.f32 %v261, %v5170
    %v5172 = vand.u32 %v5171, 4294901760
    %v5173 = vsub.f32 %v5171, %v5172
    %v5174 = vand.u32 %v5173, 4294901760
    %5175 = vmatprep.subr.mxu0 %v5174
    %v5176 = vand.u32 %v260, 4294901760
    %v5177 = vsub.f32 %v260, %v5176
    %v5178 = vand.u32 %v5177, 4294901760
    %v5179 = vsub.f32 %v5177, %v5178
    %v5180 = vand.u32 %v5179, 4294901760
    %5181 = vmatpush1.msra.mxu0 %v5180
    %v5182 = vand.u32 %v263, 4294901760
    %v5183 = vsub.f32 %v263, %v5182
    %v5184 = vand.u32 %v5183, 4294901760
    %v5185 = vsub.f32 %v5183, %v5184
    %v5186 = vand.u32 %v5185, 4294901760
    %5187 = vmatprep.subr.mxu0 %v5186
    %v5188 = vand.u32 %v262, 4294901760
    %v5189 = vsub.f32 %v262, %v5188
    %v5190 = vand.u32 %v5189, 4294901760
    %v5191 = vsub.f32 %v5189, %v5190
    %v5192 = vand.u32 %v5191, 4294901760
    %5193 = vmatpush1.msra.mxu0 %v5192
    %v5194 = vand.u32 %v265, 4294901760
    %v5195 = vsub.f32 %v265, %v5194
    %v5196 = vand.u32 %v5195, 4294901760
    %v5197 = vsub.f32 %v5195, %v5196
    %v5198 = vand.u32 %v5197, 4294901760
    %5199 = vmatprep.subr.mxu0 %v5198
    %v5200 = vand.u32 %v264, 4294901760
    %v5201 = vsub.f32 %v264, %v5200
    %v5202 = vand.u32 %v5201, 4294901760
    %v5203 = vsub.f32 %v5201, %v5202
    %v5204 = vand.u32 %v5203, 4294901760
    %5205 = vmatpush1.msra.mxu0 %v5204
    %v5206 = vand.u32 %v267, 4294901760
    %v5207 = vsub.f32 %v267, %v5206
    %v5208 = vand.u32 %v5207, 4294901760
    %v5209 = vsub.f32 %v5207, %v5208
    %v5210 = vand.u32 %v5209, 4294901760
    %5211 = vmatprep.subr.mxu0 %v5210
    %v5212 = vand.u32 %v266, 4294901760
    %v5213 = vsub.f32 %v266, %v5212
    %v5214 = vand.u32 %v5213, 4294901760
    %v5215 = vsub.f32 %v5213, %v5214
    %v5216 = vand.u32 %v5215, 4294901760
    %5217 = vmatpush1.msra.mxu0 %v5216
    %v5218 = vand.u32 %v269, 4294901760
    %v5219 = vsub.f32 %v269, %v5218
    %v5220 = vand.u32 %v5219, 4294901760
    %v5221 = vsub.f32 %v5219, %v5220
    %v5222 = vand.u32 %v5221, 4294901760
    %5223 = vmatprep.subr.mxu0 %v5222
    %v5224 = vand.u32 %v268, 4294901760
    %v5225 = vsub.f32 %v268, %v5224
    %v5226 = vand.u32 %v5225, 4294901760
    %v5227 = vsub.f32 %v5225, %v5226
    %v5228 = vand.u32 %v5227, 4294901760
    %5229 = vmatpush1.msra.mxu0 %v5228
    %5230 = vmatprep.subr.mxu0 0.0
    %5231 = vmatpush1.msra.mxu0 0.0
    %5232 = vmatprep.subr.mxu0 0.0
    %5233 = vmatpush1.msra.mxu0 0.0
    %5234 = vmatprep.subr.mxu0 0.0
    %5235 = vmatpush1.msra.mxu0 0.0
    %5236 = vmatprep.subr.mxu0 0.0
    %5237 = vmatpush1.msra.mxu0 0.0
    %5238 = vmatprep.subr.mxu0 0.0
    %5239 = vmatpush1.msra.mxu0 0.0
    %5240 = vmatprep.subr.mxu0 0.0
    %5241 = vmatpush1.msra.mxu0 0.0
    %5242 = vmatprep.subr.mxu0 0.0
    %5243 = vmatpush1.msra.mxu0 0.0
    %5244 = vmatprep.subr.mxu0 0.0
    %5245 = vmatpush1.msra.mxu0 0.0
    %5246 = vmatprep.subr.mxu0 0.0
    %5247 = vmatpush1.msra.mxu0 0.0
    %5248 = vmatprep.subr.mxu0 0.0
    %5249 = vmatpush1.msra.mxu0 0.0
    %5250 = vmatprep.subr.mxu0 0.0
    %5251 = vmatpush1.msra.mxu0 0.0
    %5252 = vmatprep.subr.mxu0 0.0
    %5253 = vmatpush1.msra.mxu0 0.0
    %5254 = vmatprep.subr.mxu0 0.0
    %5255 = vmatpush1.msra.mxu0 0.0
    %5256 = vmatprep.subr.mxu0 0.0
    %5257 = vmatpush1.msra.mxu0 0.0
    %5258 = vmatprep.subr.mxu0 0.0
    %5259 = vmatpush1.msra.mxu0 0.0
    %5260 = vmatprep.subr.mxu0 0.0
    %5261 = vmatpush1.msra.mxu0 0.0
    %5262 = vmatprep.subr.mxu0 0.0
    %5263 = vmatpush1.msra.mxu0 0.0
    %5264 = vmatprep.subr.mxu0 0.0
    %5265 = vmatpush1.msra.mxu0 0.0
    %5266 = vmatprep.subr.mxu0 0.0
    %5267 = vmatpush1.msra.mxu0 0.0
    %5268 = vmatprep.subr.mxu0 0.0
    %5269 = vmatpush1.msra.mxu0 0.0
    %5270 = vmatprep.subr.mxu0 0.0
    %5271 = vmatpush1.msra.mxu0 0.0
    %5272 = vmatprep.subr.mxu0 0.0
    %5273 = vmatpush1.msra.mxu0 0.0
    %5274 = vmatprep.subr.mxu0 0.0
    %5275 = vmatpush1.msra.mxu0 0.0
    %5276 = vmatprep.subr.mxu0 0.0
    %5277 = vmatpush1.msra.mxu0 0.0
    %5278 = vmatprep.mubr.f32.mxu0 0.0
    %v5279 = vand.u32 %v5040, 4294901760
    %5280 = vmatmul.mubr.f32.gmra.mrb[0].mxu0 %v5279
    %v5281 = vpop.f32.mrb[0].mxu0
    %v5282 = vadd.f32 %v5130, %v5281
    %v5283 = vpop.f32.mrb[0].mxu0
    %v5284 = vadd.f32 %v5132, %v5283
    %5285 = vdwg.mxu0
    %v5286 = vand.u32 %v255, 4294901760
    %v5287 = vsub.f32 %v255, %v5286
    %5288 = vmatprep.subr.mxu0 %v5287
    %v5289 = vand.u32 %v254, 4294901760
    %v5290 = vsub.f32 %v254, %v5289
    %5291 = vmatpush1.msra.mxu0 %v5290
    %v5292 = vand.u32 %v257, 4294901760
    %v5293 = vsub.f32 %v257, %v5292
    %5294 = vmatprep.subr.mxu0 %v5293
    %v5295 = vand.u32 %v256, 4294901760
    %v5296 = vsub.f32 %v256, %v5295
    %5297 = vmatpush1.msra.mxu0 %v5296
    %v5298 = vand.u32 %v259, 4294901760
    %v5299 = vsub.f32 %v259, %v5298
    %5300 = vmatprep.subr.mxu0 %v5299
    %v5301 = vand.u32 %v258, 4294901760
    %v5302 = vsub.f32 %v258, %v5301
    %5303 = vmatpush1.msra.mxu0 %v5302
    %v5304 = vand.u32 %v261, 4294901760
    %v5305 = vsub.f32 %v261, %v5304
    %5306 = vmatprep.subr.mxu0 %v5305
    %v5307 = vand.u32 %v260, 4294901760
    %v5308 = vsub.f32 %v260, %v5307
    %5309 = vmatpush1.msra.mxu0 %v5308
    %v5310 = vand.u32 %v263, 4294901760
    %v5311 = vsub.f32 %v263, %v5310
    %5312 = vmatprep.subr.mxu0 %v5311
    %v5313 = vand.u32 %v262, 4294901760
    %v5314 = vsub.f32 %v262, %v5313
    %5315 = vmatpush1.msra.mxu0 %v5314
    %v5316 = vand.u32 %v265, 4294901760
    %v5317 = vsub.f32 %v265, %v5316
    %5318 = vmatprep.subr.mxu0 %v5317
    %v5319 = vand.u32 %v264, 4294901760
    %v5320 = vsub.f32 %v264, %v5319
    %5321 = vmatpush1.msra.mxu0 %v5320
    %v5322 = vand.u32 %v267, 4294901760
    %v5323 = vsub.f32 %v267, %v5322
    %5324 = vmatprep.subr.mxu0 %v5323
    %v5325 = vand.u32 %v266, 4294901760
    %v5326 = vsub.f32 %v266, %v5325
    %5327 = vmatpush1.msra.mxu0 %v5326
    %v5328 = vand.u32 %v269, 4294901760
    %v5329 = vsub.f32 %v269, %v5328
    %5330 = vmatprep.subr.mxu0 %v5329
    %v5331 = vand.u32 %v268, 4294901760
    %v5332 = vsub.f32 %v268, %v5331
    %5333 = vmatpush1.msra.mxu0 %v5332
    %5334 = vmatprep.subr.mxu0 0.0
    %5335 = vmatpush1.msra.mxu0 0.0
    %5336 = vmatprep.subr.mxu0 0.0
    %5337 = vmatpush1.msra.mxu0 0.0
    %5338 = vmatprep.subr.mxu0 0.0
    %5339 = vmatpush1.msra.mxu0 0.0
    %5340 = vmatprep.subr.mxu0 0.0
    %5341 = vmatpush1.msra.mxu0 0.0
    %5342 = vmatprep.subr.mxu0 0.0
    %5343 = vmatpush1.msra.mxu0 0.0
    %5344 = vmatprep.subr.mxu0 0.0
    %5345 = vmatpush1.msra.mxu0 0.0
    %5346 = vmatprep.subr.mxu0 0.0
    %5347 = vmatpush1.msra.mxu0 0.0
    %5348 = vmatprep.subr.mxu0 0.0
    %5349 = vmatpush1.msra.mxu0 0.0
    %5350 = vmatprep.subr.mxu0 0.0
    %5351 = vmatpush1.msra.mxu0 0.0
    %5352 = vmatprep.subr.mxu0 0.0
    %5353 = vmatpush1.msra.mxu0 0.0
    %5354 = vmatprep.subr.mxu0 0.0
    %5355 = vmatpush1.msra.mxu0 0.0
    %5356 = vmatprep.subr.mxu0 0.0
    %5357 = vmatpush1.msra.mxu0 0.0
    %5358 = vmatprep.subr.mxu0 0.0
    %5359 = vmatpush1.msra.mxu0 0.0
    %5360 = vmatprep.subr.mxu0 0.0
    %5361 = vmatpush1.msra.mxu0 0.0
    %5362 = vmatprep.subr.mxu0 0.0
    %5363 = vmatpush1.msra.mxu0 0.0
    %5364 = vmatprep.subr.mxu0 0.0
    %5365 = vmatpush1.msra.mxu0 0.0
    %5366 = vmatprep.subr.mxu0 0.0
    %5367 = vmatpush1.msra.mxu0 0.0
    %5368 = vmatprep.subr.mxu0 0.0
    %5369 = vmatpush1.msra.mxu0 0.0
    %5370 = vmatprep.subr.mxu0 0.0
    %5371 = vmatpush1.msra.mxu0 0.0
    %5372 = vmatprep.subr.mxu0 0.0
    %5373 = vmatpush1.msra.mxu0 0.0
    %5374 = vmatprep.subr.mxu0 0.0
    %5375 = vmatpush1.msra.mxu0 0.0
    %5376 = vmatprep.subr.mxu0 0.0
    %5377 = vmatpush1.msra.mxu0 0.0
    %5378 = vmatprep.subr.mxu0 0.0
    %5379 = vmatpush1.msra.mxu0 0.0
    %5380 = vmatprep.subr.mxu0 0.0
    %5381 = vmatpush1.msra.mxu0 0.0
    %5382 = vmatprep.mubr.f32.mxu0 0.0
    %v5383 = vand.u32 %v5040, 4294901760
    %v5384 = vsub.f32 %v5040, %v5383
    %5385 = vmatmul.mubr.f32.gmra.mrb[0].mxu0 %v5384
    %v5386 = vpop.f32.mrb[0].mxu0
    %v5387 = vadd.f32 %v5282, %v5386
    %v5388 = vpop.f32.mrb[0].mxu0
    %v5389 = vadd.f32 %v5284, %v5388
    %5390 = vdwg.mxu0
    %v5391 = vand.u32 %v255, 4294901760
    %5392 = vmatprep.subr.mxu0 %v5391
    %v5393 = vand.u32 %v254, 4294901760
    %5394 = vmatpush1.msra.mxu0 %v5393
    %v5395 = vand.u32 %v257, 4294901760
    %5396 = vmatprep.subr.mxu0 %v5395
    %v5397 = vand.u32 %v256, 4294901760
    %5398 = vmatpush1.msra.mxu0 %v5397
    %v5399 = vand.u32 %v259, 4294901760
    %5400 = vmatprep.subr.mxu0 %v5399
    %v5401 = vand.u32 %v258, 4294901760
    %5402 = vmatpush1.msra.mxu0 %v5401
    %v5403 = vand.u32 %v261, 4294901760
    %5404 = vmatprep.subr.mxu0 %v5403
    %v5405 = vand.u32 %v260, 4294901760
    %5406 = vmatpush1.msra.mxu0 %v5405
    %v5407 = vand.u32 %v263, 4294901760
    %5408 = vmatprep.subr.mxu0 %v5407
    %v5409 = vand.u32 %v262, 4294901760
    %5410 = vmatpush1.msra.mxu0 %v5409
    %v5411 = vand.u32 %v265, 4294901760
    %5412 = vmatprep.subr.mxu0 %v5411
    %v5413 = vand.u32 %v264, 4294901760
    %5414 = vmatpush1.msra.mxu0 %v5413
    %v5415 = vand.u32 %v267, 4294901760
    %5416 = vmatprep.subr.mxu0 %v5415
    %v5417 = vand.u32 %v266, 4294901760
    %5418 = vmatpush1.msra.mxu0 %v5417
    %v5419 = vand.u32 %v269, 4294901760
    %5420 = vmatprep.subr.mxu0 %v5419
    %v5421 = vand.u32 %v268, 4294901760
    %5422 = vmatpush1.msra.mxu0 %v5421
    %5423 = vmatprep.subr.mxu0 0.0
    %5424 = vmatpush1.msra.mxu0 0.0
    %5425 = vmatprep.subr.mxu0 0.0
    %5426 = vmatpush1.msra.mxu0 0.0
    %5427 = vmatprep.subr.mxu0 0.0
    %5428 = vmatpush1.msra.mxu0 0.0
    %5429 = vmatprep.subr.mxu0 0.0
    %5430 = vmatpush1.msra.mxu0 0.0
    %5431 = vmatprep.subr.mxu0 0.0
    %5432 = vmatpush1.msra.mxu0 0.0
    %5433 = vmatprep.subr.mxu0 0.0
    %5434 = vmatpush1.msra.mxu0 0.0
    %5435 = vmatprep.subr.mxu0 0.0
    %5436 = vmatpush1.msra.mxu0 0.0
    %5437 = vmatprep.subr.mxu0 0.0
    %5438 = vmatpush1.msra.mxu0 0.0
    %5439 = vmatprep.subr.mxu0 0.0
    %5440 = vmatpush1.msra.mxu0 0.0
    %5441 = vmatprep.subr.mxu0 0.0
    %5442 = vmatpush1.msra.mxu0 0.0
    %5443 = vmatprep.subr.mxu0 0.0
    %5444 = vmatpush1.msra.mxu0 0.0
    %5445 = vmatprep.subr.mxu0 0.0
    %5446 = vmatpush1.msra.mxu0 0.0
    %5447 = vmatprep.subr.mxu0 0.0
    %5448 = vmatpush1.msra.mxu0 0.0
    %5449 = vmatprep.subr.mxu0 0.0
    %5450 = vmatpush1.msra.mxu0 0.0
    %5451 = vmatprep.subr.mxu0 0.0
    %5452 = vmatpush1.msra.mxu0 0.0
    %5453 = vmatprep.subr.mxu0 0.0
    %5454 = vmatpush1.msra.mxu0 0.0
    %5455 = vmatprep.subr.mxu0 0.0
    %5456 = vmatpush1.msra.mxu0 0.0
    %5457 = vmatprep.subr.mxu0 0.0
    %5458 = vmatpush1.msra.mxu0 0.0
    %5459 = vmatprep.subr.mxu0 0.0
    %5460 = vmatpush1.msra.mxu0 0.0
    %5461 = vmatprep.subr.mxu0 0.0
    %5462 = vmatpush1.msra.mxu0 0.0
    %5463 = vmatprep.subr.mxu0 0.0
    %5464 = vmatpush1.msra.mxu0 0.0
    %5465 = vmatprep.subr.mxu0 0.0
    %5466 = vmatpush1.msra.mxu0 0.0
    %5467 = vmatprep.subr.mxu0 0.0
    %5468 = vmatpush1.msra.mxu0 0.0
    %5469 = vmatprep.subr.mxu0 0.0
    %5470 = vmatpush1.msra.mxu0 0.0
    %5471 = vmatprep.mubr.f32.mxu0 0.0
    %v5472 = vand.u32 %v5040, 4294901760
    %v5473 = vsub.f32 %v5040, %v5472
    %v5474 = vand.u32 %v5473, 4294901760
    %5475 = vmatmul.mubr.f32.gmra.mrb[0].mxu0 %v5474
    %v5476 = vpop.f32.mrb[0].mxu0
    %v5477 = vadd.f32 %v5387, %v5476
    %v5478 = vpop.f32.mrb[0].mxu0
    %v5479 = vadd.f32 %v5389, %v5478
    %5480 = vdwg.mxu0
    %v5481 = vand.u32 %v255, 4294901760
    %v5482 = vsub.f32 %v255, %v5481
    %v5483 = vand.u32 %v5482, 4294901760
    %5484 = vmatprep.subr.mxu0 %v5483
    %v5485 = vand.u32 %v254, 4294901760
    %v5486 = vsub.f32 %v254, %v5485
    %v5487 = vand.u32 %v5486, 4294901760
    %5488 = vmatpush1.msra.mxu0 %v5487
    %v5489 = vand.u32 %v257, 4294901760
    %v5490 = vsub.f32 %v257, %v5489
    %v5491 = vand.u32 %v5490, 4294901760
    %5492 = vmatprep.subr.mxu0 %v5491
    %v5493 = vand.u32 %v256, 4294901760
    %v5494 = vsub.f32 %v256, %v5493
    %v5495 = vand.u32 %v5494, 4294901760
    %5496 = vmatpush1.msra.mxu0 %v5495
    %v5497 = vand.u32 %v259, 4294901760
    %v5498 = vsub.f32 %v259, %v5497
    %v5499 = vand.u32 %v5498, 4294901760
    %5500 = vmatprep.subr.mxu0 %v5499
    %v5501 = vand.u32 %v258, 4294901760
    %v5502 = vsub.f32 %v258, %v5501
    %v5503 = vand.u32 %v5502, 4294901760
    %5504 = vmatpush1.msra.mxu0 %v5503
    %v5505 = vand.u32 %v261, 4294901760
    %v5506 = vsub.f32 %v261, %v5505
    %v5507 = vand.u32 %v5506, 4294901760
    %5508 = vmatprep.subr.mxu0 %v5507
    %v5509 = vand.u32 %v260, 4294901760
    %v5510 = vsub.f32 %v260, %v5509
    %v5511 = vand.u32 %v5510, 4294901760
    %5512 = vmatpush1.msra.mxu0 %v5511
    %v5513 = vand.u32 %v263, 4294901760
    %v5514 = vsub.f32 %v263, %v5513
    %v5515 = vand.u32 %v5514, 4294901760
    %5516 = vmatprep.subr.mxu0 %v5515
    %v5517 = vand.u32 %v262, 4294901760
    %v5518 = vsub.f32 %v262, %v5517
    %v5519 = vand.u32 %v5518, 4294901760
    %5520 = vmatpush1.msra.mxu0 %v5519
    %v5521 = vand.u32 %v265, 4294901760
    %v5522 = vsub.f32 %v265, %v5521
    %v5523 = vand.u32 %v5522, 4294901760
    %5524 = vmatprep.subr.mxu0 %v5523
    %v5525 = vand.u32 %v264, 4294901760
    %v5526 = vsub.f32 %v264, %v5525
    %v5527 = vand.u32 %v5526, 4294901760
    %5528 = vmatpush1.msra.mxu0 %v5527
    %v5529 = vand.u32 %v267, 4294901760
    %v5530 = vsub.f32 %v267, %v5529
    %v5531 = vand.u32 %v5530, 4294901760
    %5532 = vmatprep.subr.mxu0 %v5531
    %v5533 = vand.u32 %v266, 4294901760
    %v5534 = vsub.f32 %v266, %v5533
    %v5535 = vand.u32 %v5534, 4294901760
    %5536 = vmatpush1.msra.mxu0 %v5535
    %v5537 = vand.u32 %v269, 4294901760
    %v5538 = vsub.f32 %v269, %v5537
    %v5539 = vand.u32 %v5538, 4294901760
    %5540 = vmatprep.subr.mxu0 %v5539
    %v5541 = vand.u32 %v268, 4294901760
    %v5542 = vsub.f32 %v268, %v5541
    %v5543 = vand.u32 %v5542, 4294901760
    %5544 = vmatpush1.msra.mxu0 %v5543
    %5545 = vmatprep.subr.mxu0 0.0
    %5546 = vmatpush1.msra.mxu0 0.0
    %5547 = vmatprep.subr.mxu0 0.0
    %5548 = vmatpush1.msra.mxu0 0.0
    %5549 = vmatprep.subr.mxu0 0.0
    %5550 = vmatpush1.msra.mxu0 0.0
    %5551 = vmatprep.subr.mxu0 0.0
    %5552 = vmatpush1.msra.mxu0 0.0
    %5553 = vmatprep.subr.mxu0 0.0
    %5554 = vmatpush1.msra.mxu0 0.0
    %5555 = vmatprep.subr.mxu0 0.0
    %5556 = vmatpush1.msra.mxu0 0.0
    %5557 = vmatprep.subr.mxu0 0.0
    %5558 = vmatpush1.msra.mxu0 0.0
    %5559 = vmatprep.subr.mxu0 0.0
    %5560 = vmatpush1.msra.mxu0 0.0
    %5561 = vmatprep.subr.mxu0 0.0
    %5562 = vmatpush1.msra.mxu0 0.0
    %5563 = vmatprep.subr.mxu0 0.0
    %5564 = vmatpush1.msra.mxu0 0.0
    %5565 = vmatprep.subr.mxu0 0.0
    %5566 = vmatpush1.msra.mxu0 0.0
    %5567 = vmatprep.subr.mxu0 0.0
    %5568 = vmatpush1.msra.mxu0 0.0
    %5569 = vmatprep.subr.mxu0 0.0
    %5570 = vmatpush1.msra.mxu0 0.0
    %5571 = vmatprep.subr.mxu0 0.0
    %5572 = vmatpush1.msra.mxu0 0.0
    %5573 = vmatprep.subr.mxu0 0.0
    %5574 = vmatpush1.msra.mxu0 0.0
    %5575 = vmatprep.subr.mxu0 0.0
    %5576 = vmatpush1.msra.mxu0 0.0
    %5577 = vmatprep.subr.mxu0 0.0
    %5578 = vmatpush1.msra.mxu0 0.0
    %5579 = vmatprep.subr.mxu0 0.0
    %5580 = vmatpush1.msra.mxu0 0.0
    %5581 = vmatprep.subr.mxu0 0.0
    %5582 = vmatpush1.msra.mxu0 0.0
    %5583 = vmatprep.subr.mxu0 0.0
    %5584 = vmatpush1.msra.mxu0 0.0
    %5585 = vmatprep.subr.mxu0 0.0
    %5586 = vmatpush1.msra.mxu0 0.0
    %5587 = vmatprep.subr.mxu0 0.0
    %5588 = vmatpush1.msra.mxu0 0.0
    %5589 = vmatprep.subr.mxu0 0.0
    %5590 = vmatpush1.msra.mxu0 0.0
    %5591 = vmatprep.subr.mxu0 0.0
    %5592 = vmatpush1.msra.mxu0 0.0
    %5593 = vmatprep.mubr.f32.mxu0 0.0
    %v5594 = vand.u32 %v5040, 4294901760
    %5595 = vmatmul.mubr.f32.gmra.mrb[0].mxu0 %v5594
    %v5596 = vpop.f32.mrb[0].mxu0
    %v5597 = vadd.f32 %v5477, %v5596
    %v5598 = vpop.f32.mrb[0].mxu0
    %v5599 = vadd.f32 %v5479, %v5598
    %5600 = vdwg.mxu0
    %v5601 = vand.u32 %v255, 4294901760
    %5602 = vmatprep.subr.mxu0 %v5601
    %v5603 = vand.u32 %v254, 4294901760
    %5604 = vmatpush1.msra.mxu0 %v5603
    %v5605 = vand.u32 %v257, 4294901760
    %5606 = vmatprep.subr.mxu0 %v5605
    %v5607 = vand.u32 %v256, 4294901760
    %5608 = vmatpush1.msra.mxu0 %v5607
    %v5609 = vand.u32 %v259, 4294901760
    %5610 = vmatprep.subr.mxu0 %v5609
    %v5611 = vand.u32 %v258, 4294901760
    %5612 = vmatpush1.msra.mxu0 %v5611
    %v5613 = vand.u32 %v261, 4294901760
    %5614 = vmatprep.subr.mxu0 %v5613
    %v5615 = vand.u32 %v260, 4294901760
    %5616 = vmatpush1.msra.mxu0 %v5615
    %v5617 = vand.u32 %v263, 4294901760
    %5618 = vmatprep.subr.mxu0 %v5617
    %v5619 = vand.u32 %v262, 4294901760
    %5620 = vmatpush1.msra.mxu0 %v5619
    %v5621 = vand.u32 %v265, 4294901760
    %5622 = vmatprep.subr.mxu0 %v5621
    %v5623 = vand.u32 %v264, 4294901760
    %5624 = vmatpush1.msra.mxu0 %v5623
    %v5625 = vand.u32 %v267, 4294901760
    %5626 = vmatprep.subr.mxu0 %v5625
    %v5627 = vand.u32 %v266, 4294901760
    %5628 = vmatpush1.msra.mxu0 %v5627
    %v5629 = vand.u32 %v269, 4294901760
    %5630 = vmatprep.subr.mxu0 %v5629
    %v5631 = vand.u32 %v268, 4294901760
    %5632 = vmatpush1.msra.mxu0 %v5631
    %5633 = vmatprep.subr.mxu0 0.0
    %5634 = vmatpush1.msra.mxu0 0.0
    %5635 = vmatprep.subr.mxu0 0.0
    %5636 = vmatpush1.msra.mxu0 0.0
    %5637 = vmatprep.subr.mxu0 0.0
    %5638 = vmatpush1.msra.mxu0 0.0
    %5639 = vmatprep.subr.mxu0 0.0
    %5640 = vmatpush1.msra.mxu0 0.0
    %5641 = vmatprep.subr.mxu0 0.0
    %5642 = vmatpush1.msra.mxu0 0.0
    %5643 = vmatprep.subr.mxu0 0.0
    %5644 = vmatpush1.msra.mxu0 0.0
    %5645 = vmatprep.subr.mxu0 0.0
    %5646 = vmatpush1.msra.mxu0 0.0
    %5647 = vmatprep.subr.mxu0 0.0
    %5648 = vmatpush1.msra.mxu0 0.0
    %5649 = vmatprep.subr.mxu0 0.0
    %5650 = vmatpush1.msra.mxu0 0.0
    %5651 = vmatprep.subr.mxu0 0.0
    %5652 = vmatpush1.msra.mxu0 0.0
    %5653 = vmatprep.subr.mxu0 0.0
    %5654 = vmatpush1.msra.mxu0 0.0
    %5655 = vmatprep.subr.mxu0 0.0
    %5656 = vmatpush1.msra.mxu0 0.0
    %5657 = vmatprep.subr.mxu0 0.0
    %5658 = vmatpush1.msra.mxu0 0.0
    %5659 = vmatprep.subr.mxu0 0.0
    %5660 = vmatpush1.msra.mxu0 0.0
    %5661 = vmatprep.subr.mxu0 0.0
    %5662 = vmatpush1.msra.mxu0 0.0
    %5663 = vmatprep.subr.mxu0 0.0
    %5664 = vmatpush1.msra.mxu0 0.0
    %5665 = vmatprep.subr.mxu0 0.0
    %5666 = vmatpush1.msra.mxu0 0.0
    %5667 = vmatprep.subr.mxu0 0.0
    %5668 = vmatpush1.msra.mxu0 0.0
    %5669 = vmatprep.subr.mxu0 0.0
    %5670 = vmatpush1.msra.mxu0 0.0
    %5671 = vmatprep.subr.mxu0 0.0
    %5672 = vmatpush1.msra.mxu0 0.0
    %5673 = vmatprep.subr.mxu0 0.0
    %5674 = vmatpush1.msra.mxu0 0.0
    %5675 = vmatprep.subr.mxu0 0.0
    %5676 = vmatpush1.msra.mxu0 0.0
    %5677 = vmatprep.subr.mxu0 0.0
    %5678 = vmatpush1.msra.mxu0 0.0
    %5679 = vmatprep.subr.mxu0 0.0
    %5680 = vmatpush1.msra.mxu0 0.0
    %5681 = vmatprep.mubr.f32.mxu0 0.0
    %v5682 = vand.u32 %v5040, 4294901760
    %5683 = vmatmul.mubr.f32.gmra.mrb[0].mxu0 %v5682
    %v5684 = vpop.f32.mrb[0].mxu0
    %v5685 = vadd.f32 %v5597, %v5684
    %v5686 = vpop.f32.mrb[0].mxu0
    %v5687 = vadd.f32 %v5599, %v5686
    %5688 = vdwg.mxu0
    %v5689 = vadd.f32 %v5038, %v5685
    %v5690 = vxor.u32 %v5689, 2147483648
    %v5691 = vmul.f32 %v5690, 1.442695
    %v5692 = vpow.pop %v5691
    %v5693 = vadd.f32 %v5692, 1.0
    %v5694 = vrcp.pop %v5693
    %v5695 = vmul.f32 1.0, %v5694
    %v5696 = vadd.f32 %v5687, %v275
    %v5697 = vmul.f32 %v5695, %v5696
    %v5698 = vadd.f32 %v5039, %v5697
    %v5699 = vtanh.pop %v5698
    %v5700 = vsub.f32 1.0, %v5695
    %5702 = vrot.lane.b32.xlu0 %v5699, 64
    %v5703 = vpop.permute.xlu0 %5702
    %v5705 = vmul.f32 %v5700, %v5703
    %v5706 = vmul.f32 %v5695, %v5028
    %v5707 = vadd.f32 %v5705, %v5706
    %5709 = vrot.lane.b32.xlu0 %v5707, 64
    %v5710 = vpop.permute.xlu0 %5709
    %s5712 = scalar_lea.vmem [#allocation3], 56
    %5713 = vst.msk [vmem:[%s5712] sm:$0xff] %vm283, %v5710
    %5714 = vst.msk [vmem:[%s8] sm:$0xff] %vm283, %v5710
    %v5715 = vld [vmem:[#allocation3] sm:$0xff]
    %v5716 = vld [vmem:[#allocation3 + $0x8] sm:$0xff]
    %v5717 = vld [vmem:[#allocation3 + $0x10] sm:$0xff]
    %v5718 = vld [vmem:[#allocation3 + $0x18] sm:$0xff]
    %v5719 = vld [vmem:[#allocation3 + $0x20] sm:$0xff]
    %v5720 = vld [vmem:[#allocation3 + $0x28] sm:$0xff]
    %v5721 = vld [vmem:[#allocation3 + $0x30] sm:$0xff]
    %v5722 = vld [vmem:[#allocation3 + $0x38] sm:$0xff]
    %v5723 = vld [vmem:[#allocation6] sm:$0xff]
    %v5724 = vld [vmem:[#allocation6 + $0x8] sm:$0xff]
    %v5725 = vld [vmem:[#allocation6 + $0x10] sm:$0xff]
    %v5726 = vld [vmem:[#allocation6 + $0x18] sm:$0xff]
    %v5727 = vld [vmem:[#allocation6 + $0x20] sm:$0xff]
    %v5728 = vld [vmem:[#allocation6 + $0x28] sm:$0xff]
    %v5729 = vld [vmem:[#allocation6 + $0x30] sm:$0xff]
    %v5730 = vld [vmem:[#allocation6 + $0x38] sm:$0xff]
    %v5732 = vsel %vm283, %v5715, 0
    %v5735 = vsel %vm283, %v5716, 0
    %v5738 = vsel %vm283, %v5717, 0
    %v5741 = vsel %vm283, %v5718, 0
    %v5744 = vsel %vm283, %v5719, 0
    %v5747 = vsel %vm283, %v5720, 0
    %v5750 = vsel %vm283, %v5721, 0
    %v5753 = vsel %vm283, %v5722, 0
    %5755 = vmatprep.subr.mxu0 0.0
    %5756 = vmatpush1.msra.mxu0 %v5723
    %5757 = vmatprep.subr.mxu0 0.0
    %5758 = vmatpush1.msra.mxu0 %v5724
    %5759 = vmatprep.subr.mxu0 0.0
    %5760 = vmatpush1.msra.mxu0 %v5725
    %5761 = vmatprep.subr.mxu0 0.0
    %5762 = vmatpush1.msra.mxu0 %v5726
    %5763 = vmatprep.subr.mxu0 0.0
    %5764 = vmatpush1.msra.mxu0 %v5727
    %5765 = vmatprep.subr.mxu0 0.0
    %5766 = vmatpush1.msra.mxu0 %v5728
    %5767 = vmatprep.subr.mxu0 0.0
    %5768 = vmatpush1.msra.mxu0 %v5729
    %5769 = vmatprep.subr.mxu0 0.0
    %5770 = vmatpush1.msra.mxu0 %v5730
    %5771 = vmatprep.subr.mxu0 0.0
    %5772 = vmatpush1.msra.mxu0 0.0
    %5773 = vmatprep.subr.mxu0 0.0
    %5774 = vmatpush1.msra.mxu0 0.0
    %5775 = vmatprep.subr.mxu0 0.0
    %5776 = vmatpush1.msra.mxu0 0.0
    %5777 = vmatprep.subr.mxu0 0.0
    %5778 = vmatpush1.msra.mxu0 0.0
    %5779 = vmatprep.subr.mxu0 0.0
    %5780 = vmatpush1.msra.mxu0 0.0
    %5781 = vmatprep.subr.mxu0 0.0
    %5782 = vmatpush1.msra.mxu0 0.0
    %5783 = vmatprep.subr.mxu0 0.0
    %5784 = vmatpush1.msra.mxu0 0.0
    %5785 = vmatprep.subr.mxu0 0.0
    %5786 = vmatpush1.msra.mxu0 0.0
    %5787 = vmatprep.subr.mxu0 0.0
    %5788 = vmatpush1.msra.mxu0 0.0
    %5789 = vmatprep.subr.mxu0 0.0
    %5790 = vmatpush1.msra.mxu0 0.0
    %5791 = vmatprep.subr.mxu0 0.0
    %5792 = vmatpush1.msra.mxu0 0.0
    %5793 = vmatprep.subr.mxu0 0.0
    %5794 = vmatpush1.msra.mxu0 0.0
    %5795 = vmatprep.subr.mxu0 0.0
    %5796 = vmatpush1.msra.mxu0 0.0
    %5797 = vmatprep.subr.mxu0 0.0
    %5798 = vmatpush1.msra.mxu0 0.0
    %5799 = vmatprep.subr.mxu0 0.0
    %5800 = vmatpush1.msra.mxu0 0.0
    %5801 = vmatprep.subr.mxu0 0.0
    %5802 = vmatpush1.msra.mxu0 0.0
    %5803 = vmatprep.subr.mxu0 0.0
    %5804 = vmatpush1.msra.mxu0 0.0
    %5805 = vmatprep.subr.mxu0 0.0
    %5806 = vmatpush1.msra.mxu0 0.0
    %5807 = vmatprep.subr.mxu0 0.0
    %5808 = vmatpush1.msra.mxu0 0.0
    %5809 = vmatprep.subr.mxu0 0.0
    %5810 = vmatpush1.msra.mxu0 0.0
    %5811 = vmatprep.subr.mxu0 0.0
    %5812 = vmatpush1.msra.mxu0 0.0
    %5813 = vmatprep.subr.mxu0 0.0
    %5814 = vmatpush1.msra.mxu0 0.0
    %5815 = vmatprep.subr.mxu0 0.0
    %5816 = vmatpush1.msra.mxu0 0.0
    %5817 = vmatprep.subr.mxu0 0.0
    %5818 = vmatpush1.msra.mxu0 0.0
    %5819 = vmatprep.mubr.f32.mxu0 0.0
    %5820 = vmatmul.mubr.f32.gmra.mrb[0].mxu0 %v5732
    %v5821 = vpop.f32.mrb[0].mxu0
    %v5822 = vadd.f32 0.0, %v5821
    %v5823 = vpop.f32.mrb[0].mxu0
    %5824 = vmatprep.mubr.f32.mxu0 0.0
    %5825 = vmatmul.mubr.f32.gmra.mrb[0].mxu0 %v5735
    %v5826 = vpop.f32.mrb[0].mxu0
    %v5827 = vadd.f32 0.0, %v5826
    %v5828 = vpop.f32.mrb[0].mxu0
    %5829 = vmatprep.mubr.f32.mxu0 0.0
    %5830 = vmatmul.mubr.f32.gmra.mrb[0].mxu0 %v5738
    %v5831 = vpop.f32.mrb[0].mxu0
    %v5832 = vadd.f32 0.0, %v5831
    %v5833 = vpop.f32.mrb[0].mxu0
    %5834 = vmatprep.mubr.f32.mxu0 0.0
    %5835 = vmatmul.mubr.f32.gmra.mrb[0].mxu0 %v5741
    %v5836 = vpop.f32.mrb[0].mxu0
    %v5837 = vadd.f32 0.0, %v5836
    %v5838 = vpop.f32.mrb[0].mxu0
    %5839 = vmatprep.mubr.f32.mxu0 0.0
    %5840 = vmatmul.mubr.f32.gmra.mrb[0].mxu0 %v5744
    %v5841 = vpop.f32.mrb[0].mxu0
    %v5842 = vadd.f32 0.0, %v5841
    %v5843 = vpop.f32.mrb[0].mxu0
    %5844 = vmatprep.mubr.f32.mxu0 0.0
    %5845 = vmatmul.mubr.f32.gmra.mrb[0].mxu0 %v5747
    %v5846 = vpop.f32.mrb[0].mxu0
    %v5847 = vadd.f32 0.0, %v5846
    %v5848 = vpop.f32.mrb[0].mxu0
    %5849 = vmatprep.mubr.f32.mxu0 0.0
    %5850 = vmatmul.mubr.f32.gmra.mrb[0].mxu0 %v5750
    %v5851 = vpop.f32.mrb[0].mxu0
    %v5852 = vadd.f32 0.0, %v5851
    %v5853 = vpop.f32.mrb[0].mxu0
    %5854 = vmatprep.mubr.f32.mxu0 0.0
    %5855 = vmatmul.mubr.f32.gmra.mrb[0].mxu0 %v5753
    %v5856 = vpop.f32.mrb[0].mxu0
    %v5857 = vadd.f32 0.0, %v5856
    %v5858 = vpop.f32.mrb[0].mxu0
    %5859 = vdwg.mxu0
    %v5860 = vlaneseq
    %v5861 = vand.u32 %v5860, 127
    %vm5862 = vcmp.eq.s32.totalorder %v5861, 32
    %v5863 = vmax.f32 %v5822, 0.0
    %v5864 = vmax.f32 %v5827, 0.0
    %v5865 = vmax.f32 %v5832, 0.0
    %v5866 = vmax.f32 %v5837, 0.0
    %v5867 = vmax.f32 %v5842, 0.0
    %v5868 = vmax.f32 %v5847, 0.0
    %v5869 = vmax.f32 %v5852, 0.0
    %v5870 = vmax.f32 %v5857, 0.0
    %v5871 = vadd.f32 %v5863, 1.0
    %v5872 = vadd.f32 %v5864, 1.0
    %v5873 = vadd.f32 %v5865, 1.0
    %v5874 = vadd.f32 %v5866, 1.0
    %v5875 = vadd.f32 %v5867, 1.0
    %v5876 = vadd.f32 %v5868, 1.0
    %v5877 = vadd.f32 %v5869, 1.0
    %v5878 = vadd.f32 %v5870, 1.0
    %v5879 = vsel %vm5862, %v5871, %v5822
    %v5880 = vsel %vm5862, %v5872, %v5827
    %v5881 = vsel %vm5862, %v5873, %v5832
    %v5882 = vsel %vm5862, %v5874, %v5837
    %v5883 = vsel %vm5862, %v5875, %v5842
    %v5884 = vsel %vm5862, %v5876, %v5847
    %v5885 = vsel %vm5862, %v5877, %v5852
    %v5886 = vsel %vm5862, %v5878, %v5857
    %vm5887 = vcmp.ge.s32.totalorder %v5861, 34
    %vm5888 = vcmp.lt.s32.totalorder %v5861, 66
    %vm5889 = vmand %vm5887, %vm5888
    %v5890 = vtanh.pop %v5822
    %v5891 = vtanh.pop %v5827
    %v5892 = vtanh.pop %v5832
    %v5893 = vtanh.pop %v5837
    %v5894 = vtanh.pop %v5842
    %v5895 = vtanh.pop %v5847
    %v5896 = vtanh.pop %v5852
    %v5897 = vtanh.pop %v5857
    %v5898 = vsel %vm5889, %v5890, %v5879
    %v5899 = vsel %vm5889, %v5891, %v5880
    %v5900 = vsel %vm5889, %v5892, %v5881
    %v5901 = vsel %vm5889, %v5893, %v5882
    %v5902 = vsel %vm5889, %v5894, %v5883
    %v5903 = vsel %vm5889, %v5895, %v5884
    %v5904 = vsel %vm5889, %v5896, %v5885
    %v5905 = vsel %vm5889, %v5897, %v5886
    %5906 = vst [vmem:[%s7] sm:$0xff] %v5898
    %5907 = vst [vmem:[%s7 + $0x8] sm:$0xff] %v5899
    %5908 = vst [vmem:[%s7 + $0x10] sm:$0xff] %v5900
    %5909 = vst [vmem:[%s7 + $0x18] sm:$0xff] %v5901
    %5910 = vst [vmem:[%s7 + $0x20] sm:$0xff] %v5902
    %5911 = vst [vmem:[%s7 + $0x28] sm:$0xff] %v5903
    %5912 = vst [vmem:[%s7 + $0x30] sm:$0xff] %v5904
    %5913 = vst [vmem:[%s7 + $0x38] sm:$0xff] %v5905
    // Predicated region
    $region42: #{base_controller_forward_seq.1} parent=1 // pred_check
      _
    $region43: #{base_controller_forward_seq.1} parent=1 // pred_check_branch
      %5915 = sbr.rel (0) target = $region45
    $region44: #{base_controller_forward_seq.1} parent=1 // pred_region
      _
    $region45: #{base_controller_forward_seq.1} parent=1 // pred_fallthru
      _
    // Predicated region
    $region46: #{base_controller_forward_seq.1} parent=1 // pred_check
      _
    $region47: #{base_controller_forward_seq.1} parent=1 // pred_check_branch
      %5917 = sbr.rel (0) target = $region49
    $region48: #{base_controller_forward_seq.1} parent=1 // pred_region
      _
    $region49: #{base_controller_forward_seq.1} parent=1 // pred_fallthru
      _
    // Predicated region
    $region50: #{base_controller_forward_seq.1} parent=1 // pred_check
      _
    $region51: #{base_controller_forward_seq.1} parent=1 // pred_check_branch
      %5919 = sbr.rel (0) target = $region53
    $region52: #{base_controller_forward_seq.1} parent=1 // pred_region
      _
    $region53: #{base_controller_forward_seq.1} parent=1 // pred_fallthru
      _
    // Predicated region
    $region54: #{base_controller_forward_seq.1} parent=1 // pred_check
      _
    $region55: #{base_controller_forward_seq.1} parent=1 // pred_check_branch
      %5921 = sbr.rel (0) target = $region57
    $region56: #{base_controller_forward_seq.1} parent=1 // pred_region
      _
    $region57: #{base_controller_forward_seq.1} parent=1 // pred_fallthru
      _
    %5922 = vsyncpa [#allocation5], 1
    %5923 = vsyncpa [#allocation7], 1

</llo_original>
